<compile_context>
chip_gen: v6e
topology: v6e:2x2x1
jax: 0.10.0
libtpu: 0.0.40
codegen_flags: <defaults>
</compile_context>

<pallas_src>
import functools

import jax
import jax.numpy as jnp
from jax import lax
from jax.experimental import pallas as pl
from jax.experimental.pallas import tpu as pltpu

# ---------------- small synthetic config (stands in for the real PoseNet cfg) ----
JOINT_NUM = 3
OUTPUT_HM_SHAPE = (8, 16, 16)      # (D, H, W)   -- real cfg is (64, 64, 64)
OUTPUT_ROOT_HM_SHAPE = 8           # real cfg is 64
C_IN = 256                         # stands for the 2048 backbone channels
C_MID = 32                         # stands for the 256 deconv channels
HIDDEN = 32                        # stands for the 512 fc hidden dim
FEAT_H = OUTPUT_HM_SHAPE[1] // 8   # 3 deconvs, each x2 upsample
FEAT_W = OUTPUT_HM_SHAPE[2] // 8
BN_EPS = 1e-5

# Input-channel chunk for the K-tiled (accumulating) deconv path.  Must be a
# multiple of 128 (lane-aligned channel BlockSpec).  At the real 2048-channel
# scale use 512 on v7x (64 MiB VMEM) and 1024 on v5e/v6e (128 MiB VMEM) so the
# double-buffered weight block stays within budget while keeping K steps few.
KC_CHUNK = 128


def _cin_chunk(cin):
    if cin > KC_CHUNK and cin % KC_CHUNK == 0:
        return KC_CHUNK
    return cin


# ------------------------------ deconv Pallas kernels -----------------------------
#
# Per grid step the kernel sees one (branch, batch) image block of shape (H, W, C)
# (or a C-chunk of it).  It builds the 2x2 im2col over the 1-padded image entirely
# in VMEM (feature order (dy, dx, ci) to match the weight rows), runs one MXU
# matmul against the phase-column weight (columns ordered (ry, rx, co), BN scale
# folded), applies the BN shift + ReLU, and emits bf16.

def _build_patches(x_ref, xp_ref, patch_ref):
    h, w = x_ref.shape[2], x_ref.shape[3]
    xp_ref[...] = jnp.zeros_like(xp_ref)            # zero border (VMEM-only)
    xp_ref[1:h + 1, 1:w + 1, :] = x_ref[0, 0]
    wo = w + 1
    for i in range(h + 1):                          # h is static (block shape)
        row = jnp.concatenate(
            [xp_ref[i, 0:wo, :], xp_ref[i, 1:wo + 1, :],
             xp_ref[i + 1, 0:wo, :], xp_ref[i + 1, 1:wo + 1, :]],
            axis=-1)                                # (wo, 4*C) feature order (dy,dx,c)
        patch_ref[i * wo:(i + 1) * wo, :] = row


def deconv_kernel_single(x_ref, w_ref, shift_ref, y_ref, xp_ref, patch_ref):
    """Single K block: no accumulator scratch, dot + epilogue straight to output."""
    _build_patches(x_ref, xp_ref, patch_ref)
    y = jnp.dot(patch_ref[...], w_ref[0], preferred_element_type=jnp.float32)
    y_ref[0, 0] = jnp.maximum(y + shift_ref[0], 0.0).astype(y_ref.dtype)


def deconv_kernel_acc(x_ref, w_ref, shift_ref, y_ref, xp_ref, patch_ref, acc_ref):
    """K-tiled over input-channel chunks with an f32 VMEM accumulator."""
    kc = pl.program_id(2)

    @pl.when(kc == 0)
    def _():
        acc_ref[...] = jnp.zeros_like(acc_ref)

    _build_patches(x_ref, xp_ref, patch_ref)
    acc_ref[...] += jnp.dot(patch_ref[...], w_ref[0],
                            preferred_element_type=jnp.float32)

    @pl.when(kc == pl.num_programs(2) - 1)
    def _():
        y_ref[0, 0] = jnp.maximum(acc_ref[...] + shift_ref[0], 0.0).astype(y_ref.dtype)


def deconv_stage(x, w, shift):
    """One ConvTranspose2d(4,2,1)+BN(eval)+ReLU stage for a branch group.

    x:     (G, B, H, W, C)  bf16
    w:     (G, 4*C, N)      bf16  phase weight, BN scale folded, rows chunk-major
    shift: (G, 1, N)        f32
    returns (G, B, (H+1)*(W+1), N) bf16 (window-major, phase-column-major).
    """
    G, B, H, W, C = x.shape
    ncols = w.shape[-1]
    M = (H + 1) * (W + 1)
    kc = _cin_chunk(C)
    n_kc = C // kc

    out_shape = jax.ShapeDtypeStruct((G, B, M, ncols), jnp.bfloat16)
    scratch = [pltpu.VMEM((H + 2, W + 2, kc), jnp.bfloat16),
               pltpu.VMEM((M, 4 * kc), jnp.bfloat16)]

    if n_kc == 1:
        return pl.pallas_call(
            deconv_kernel_single,
            out_shape=out_shape,
            grid=(G, B),
            in_specs=[
                pl.BlockSpec((1, 1, H, W, C), lambda g, b: (g, b, 0, 0, 0)),
                pl.BlockSpec((1, 4 * C, ncols), lambda g, b: (g, 0, 0)),
                pl.BlockSpec((1, 1, ncols), lambda g, b: (g, 0, 0)),
            ],
            out_specs=pl.BlockSpec((1, 1, M, ncols), lambda g, b: (g, b, 0, 0)),
            scratch_shapes=scratch,
            compiler_params=pltpu.CompilerParams(
                dimension_semantics=("parallel", "parallel")),
        )(x, w, shift)

    return pl.pallas_call(
        deconv_kernel_acc,
        out_shape=out_shape,
        grid=(G, B, n_kc),
        in_specs=[
            pl.BlockSpec((1, 1, H, W, kc), lambda g, b, k: (g, b, 0, 0, k)),
            pl.BlockSpec((1, 4 * kc, ncols), lambda g, b, k: (g, k, 0)),
            pl.BlockSpec((1, 1, ncols), lambda g, b, k: (g, 0, 0)),
        ],
        out_specs=pl.BlockSpec((1, 1, M, ncols), lambda g, b, k: (g, b, 0, 0)),
        scratch_shapes=scratch + [pltpu.VMEM((M, ncols), jnp.float32)],
        compiler_params=pltpu.CompilerParams(
            dimension_semantics=("parallel", "parallel", "arbitrary")),
    )(x, w, shift)


def _assemble_phases(y6):
    """(G, B, H+1, W+1, 2, 2, C) window/phase tensor -> NHWC (G, B, 2H, 2W, C).

    bf16 XLA shuffle (see TODO at top: candidate for in-kernel fusion).
    """
    G, B, hp1, wp1 = y6.shape[:4]
    C = y6.shape[-1]
    H, W = hp1 - 1, wp1 - 1
    p00 = y6[:, :, 0:H, 0:W, 0, 0, :]
    p01 = y6[:, :, 0:H, 1:W + 1, 0, 1, :]
    p10 = y6[:, :, 1:H + 1, 0:W, 1, 0, :]
    p11 = y6[:, :, 1:H + 1, 1:W + 1, 1, 1, :]
    rows = jnp.stack([jnp.stack([p00, p01], axis=4),
                      jnp.stack([p10, p11], axis=4)], axis=3)   # (G,B,H,2,W,2,C)
    return rows.reshape(G, B, 2 * H, 2 * W, C)


# ------------------------------ 1x1 conv head kernel ------------------------------
# Writes the heatmap channel-major straight from the kernel: output array is
# (B, 2, J*D, Hm*Wm); the (B, 2J, D, Hm, Wm) view is a free reshape.

def conv1x1_kernel(x_ref, w_ref, b_ref, o_ref):
    th, wm, c = x_ref.shape[2], x_ref.shape[3], x_ref.shape[4]
    xf = x_ref[0, 0].reshape(th * wm, c)                         # (th*Wm, C) bf16
    y = jnp.dot(xf, w_ref[0], preferred_element_type=jnp.float32) + b_ref[0]
    o_ref[0, 0] = y.T.astype(o_ref.dtype)                        # channel-major store


def _row_tile(hm, wm):
    for th in (8, 16, 32):
        if th <= hm and hm % th == 0 and (th * wm) % 128 == 0:
            return th
    return hm


def conv1x1(x, wt, bias):
    """x: (2, B, Hm, Wm, C) bf16; wt: (2, C, J*D) bf16; bias: (2, 1, J*D) f32."""
    G, B, Hm, Wm, C = x.shape
    jd = wt.shape[-1]
    th = _row_tile(Hm, Wm)
    return pl.pallas_call(
        conv1x1_kernel,
        out_shape=jax.ShapeDtypeStruct((B, G, jd, Hm * Wm), jnp.float32),
        grid=(G, B, Hm // th),
        in_specs=[
            pl.BlockSpec((1, 1, th, Wm, C), lambda g, b, t: (g, b, t, 0, 0)),
            pl.BlockSpec((1, C, jd), lambda g, b, t: (g, 0, 0)),
            pl.BlockSpec((1, 1, jd), lambda g, b, t: (g, 0, 0)),
        ],
        out_specs=pl.BlockSpec((1, 1, jd, th * Wm), lambda g, b, t: (b, g, 0, t)),
        compiler_params=pltpu.CompilerParams(
            dimension_semantics=("parallel", "parallel", "parallel")),
    )(x, wt, bias)


# ------------------------------ GAP + FC heads kernel -----------------------------

def heads_kernel(x_ref, w1_ref, b1_ref, w2_ref, b2_ref, root_ref, hand_ref,
                 *, root_bins):
    # global average pool over HW (in-kernel reduction; no B x (B*HW) pool matmul)
    gap = jnp.mean(x_ref[...].astype(jnp.float32), axis=1)              # (B, C)
    # merged first layer: columns [root_hidden | hand_hidden]
    h = jnp.dot(gap, w1_ref[...], preferred_element_type=jnp.float32) + b1_ref[...]
    h = jnp.maximum(h, 0.0)
    # merged (block-diagonal) second layer: columns [root_bins | 2]
    logits = jnp.dot(h, w2_ref[...], preferred_element_type=jnp.float32) + b2_ref[...]

    root_logits = logits[:, :root_bins]
    m = jnp.max(root_logits, axis=1, keepdims=True)
    e = jnp.exp(root_logits - m)
    p = e / jnp.sum(e, axis=1, keepdims=True)
    idx = lax.broadcasted_iota(jnp.int32, p.shape, 1).astype(jnp.float32)
    root_ref[...] = jnp.sum(p * idx, axis=1, keepdims=True)             # soft-argmax 1d
    hand_ref[...] = jax.nn.sigmoid(logits[:, root_bins:root_bins + 2])


def run_heads(x_flat, params):
    B = x_flat.shape[0]
    return pl.pallas_call(
        functools.partial(heads_kernel, root_bins=OUTPUT_ROOT_HM_SHAPE),
        out_shape=(jax.ShapeDtypeStruct((B, 1), jnp.float32),
                   jax.ShapeDtypeStruct((B, 2), jnp.float32)),
    )(x_flat, params["fc_w1"], params["fc_b1"], params["fc_w2"], params["fc_b2"])


# --------------------------------- forward pass ------------------------------------

def posenet_forward(img_feat_nchw, params):
    B = img_feat_nchw.shape[0]
    D, Hm, Wm = OUTPUT_HM_SHAPE

    # NCHW -> NHWC, bf16 once; every later intermediate stays bf16.
    x = jnp.transpose(img_feat_nchw, (0, 2, 3, 1)).astype(jnp.bfloat16)
    _, H, W, C = x.shape

    # stage 0: both joint branches share one in-kernel patch build + one wide matmul.
    y0 = deconv_stage(x[None], params["dec0_w"], params["dec0_shift"])
    y0 = y0[0].reshape(B, H + 1, W + 1, 2, 2, 2, C_MID)   # (b, i, j, branch, ry, rx, c)
    f = _assemble_phases(jnp.moveaxis(y0, 3, 0))           # (2, B, 2H, 2W, C_MID)

    # stages 1..2: branch axis rides the grid ('parallel'), one pallas_call per stage.
    for w, s in zip(params["dec_w"], params["dec_shift"]):
        Hc, Wc = f.shape[2], f.shape[3]
        y = deconv_stage(f, w, s).reshape(2, B, Hc + 1, Wc + 1, 2, 2, C_MID)
        f = _assemble_phases(y)                             # (2, B, 2Hc, 2Wc, C_MID)

    # 1x1 conv heads, written channel-major straight from the kernel.
    hm = conv1x1(f, params["conv_w"], params["conv_b"])     # (B, 2, J*D, Hm*Wm)
    joint_heatmap3d = hm.reshape(B, 2 * JOINT_NUM, D, Hm, Wm)

    # global average pool + fc heads (root soft-argmax depth, hand sigmoid).
    root_depth, hand_type = run_heads(x.reshape(B, H * W, C), params)
    return joint_heatmap3d, root_depth, hand_type


# ----------------------------- parameter construction ------------------------------
# Everything below runs ONCE: phase-layout, BN(eval) fold, chunk-major row reorder,
# bf16 cast, stage-0 branch concat / branch stacking, merged FC-head weights.

# Sub-pixel decomposition of ConvTranspose2d(k=4, s=2, p=1): output phase r along a
# spatial axis is a 2-tap conv over the 1-padded input; tap d of phase r uses
# transposed-conv kernel index _KMAP[r][d].
_KMAP = ((3, 1), (2, 0))


def _deconv_layer_params(key, cin, cout):
    key, kw_, kg, kb, km, kv = jax.random.split(key, 6)
    # PyTorch ConvTranspose2d weight layout: (C_in, C_out, kH, kW), bias=False.
    w_t = jax.random.normal(kw_, (cin, cout, 4, 4), jnp.float32) / ((cin * 16) ** 0.5)
    # BatchNorm (eval mode) folded into per-channel scale/shift.
    gamma = 1.0 + 0.1 * jax.random.normal(kg, (cout,), jnp.float32)
    beta = 0.1 * jax.random.normal(kb, (cout,), jnp.float32)
    rmean = 0.1 * jax.random.normal(km, (cout,), jnp.float32)
    rvar = 1.0 + 0.1 * jax.random.uniform(kv, (cout,), jnp.float32)
    scale = gamma / jnp.sqrt(rvar + BN_EPS)
    shift = beta - rmean * scale
    # Phase weight matrix: rows (dy, dx, ci), cols (ry, rx, co); BN scale folded in.
    sel = jnp.array(_KMAP)
    w_sel = w_t[:, :, sel][:, :, :, :, sel]                 # (ci, co, ry, dy, rx, dx)
    w_mat = jnp.transpose(w_sel, (3, 5, 0, 2, 4, 1)).reshape(4 * cin, 4 * cout)
    w_mat = w_mat * jnp.tile(scale, 4)[None, :]
    return key, w_mat, jnp.tile(shift, 4)


def _chunk_major(w_mat, cin):
    """Reorder rows (dy,dx,ci) -> chunk-major so a K grid step is a contiguous block."""
    kc = _cin_chunk(cin)
    n = cin // kc
    if n == 1:
        return w_mat
    ncols = w_mat.shape[1]
    return (w_mat.reshape(4, n, kc, ncols)
            .transpose(1, 0, 2, 3).reshape(4 * cin, ncols))


def init_params(key):
    dims = [C_IN, C_MID, C_MID, C_MID]
    stacks = [[], []]                                   # two independent joint branches
    for br in range(2):
        for i in range(len(dims) - 1):
            key, w_mat, shift = _deconv_layer_params(key, dims[i], dims[i + 1])
            stacks[br].append((w_mat, shift))

    # stage 0: both branches concatenated along columns (shared patch matmul).
    w0 = jnp.concatenate([stacks[0][0][0], stacks[1][0][0]], axis=1)
    s0 = jnp.concatenate([stacks[0][0][1], stacks[1][0][1]], axis=0)
    dec0_w = _chunk_major(w0, C_IN).astype(jnp.bfloat16)[None]        # (1, 4C_IN, 8C_MID)
    dec0_shift = s0.reshape(1, 1, -1)                                  # (1, 1, 8C_MID)

    # stages 1..2: branches stacked on a leading axis (one call serves both).
    dec_w, dec_shift = [], []
    for i in (1, 2):
        w = jnp.stack([_chunk_major(stacks[0][i][0], C_MID),
                       _chunk_major(stacks[1][i][0], C_MID)], axis=0)
        s = jnp.stack([stacks[0][i][1], stacks[1][i][1]], axis=0)[:, None, :]
        dec_w.append(w.astype(jnp.bfloat16))
        dec_shift.append(s)

    D = OUTPUT_HM_SHAPE[0]
    jd = JOINT_NUM * D
    ks = jax.random.split(key, 11)
    # 1x1 conv heads (bias, no BN/ReLU): weight stored (C_in, J*D) per branch.
    conv_w = jnp.stack([jax.random.normal(ks[0], (C_MID, jd), jnp.float32),
                        jax.random.normal(ks[1], (C_MID, jd), jnp.float32)]) / C_MID ** 0.5
    conv_w = conv_w.astype(jnp.bfloat16)
    conv_b = 0.01 * jax.random.normal(ks[2], (2, 1, jd), jnp.float32)

    # fc heads, merged once: first layer columns [root | hand], second block-diagonal.
    root_w1 = jax.random.normal(ks[3], (C_IN, HIDDEN), jnp.float32) / C_IN ** 0.5
    root_b1 = 0.01 * jax.random.normal(ks[4], (1, HIDDEN), jnp.float32)
    root_w2 = jax.random.normal(ks[5], (HIDDEN, OUTPUT_ROOT_HM_SHAPE), jnp.float32) / HIDDEN ** 0.5
    root_b2 = 0.01 * jax.random.normal(ks[6], (1, OUTPUT_ROOT_HM_SHAPE), jnp.float32)
    hand_w1 = jax.random.normal(ks[7], (C_IN, HIDDEN), jnp.float32) / C_IN ** 0.5
    hand_b1 = 0.01 * jax.random.normal(ks[8], (1, HIDDEN), jnp.float32)
    hand_w2 = jax.random.normal(ks[9], (HIDDEN, 2), jnp.float32) / HIDDEN ** 0.5
    hand_b2 = 0.01 * jax.random.normal(ks[10], (1, 2), jnp.float32)
    fc_w1 = jnp.concatenate([root_w1, hand_w1], axis=1)
    fc_b1 = jnp.concatenate([root_b1, hand_b1], axis=1)
    fc_w2 = jnp.block([[root_w2, jnp.zeros((HIDDEN, 2), jnp.float32)],
                       [jnp.zeros((HIDDEN, OUTPUT_ROOT_HM_SHAPE), jnp.float32), hand_w2]])
    fc_b2 = jnp.concatenate([root_b2, hand_b2], axis=1)

    return dict(dec0_w=dec0_w, dec0_shift=dec0_shift,
                dec_w=dec_w, dec_shift=dec_shift,
                conv_w=conv_w, conv_b=conv_b,
                fc_w1=fc_w1, fc_b1=fc_b1, fc_w2=fc_w2, fc_b2=fc_b2)


# ------------------------------------- main ----------------------------------------

if __name__ == "__main__":
    key = jax.random.PRNGKey(0)
    key, kin = jax.random.split(key)
    # img_feat in PyTorch layout NCHW: (B, C_in, H, W)
    img_feat = jax.random.normal(kin, (2, C_IN, FEAT_H, FEAT_W), jnp.float32)
    params = init_params(key)

    fwd = jax.jit(posenet_forward)
    joint_heatmap3d, root_depth, hand_type = fwd(img_feat, params)
    jax.block_until_ready((joint_heatmap3d, root_depth, hand_type))

    assert joint_heatmap3d.shape == (2, 2 * JOINT_NUM) + OUTPUT_HM_SHAPE
    assert root_depth.shape == (2, 1)
    assert hand_type.shape == (2, 2)
    assert bool(jnp.all(jnp.isfinite(joint_heatmap3d)))
    assert bool(jnp.all((root_depth >= 0) & (root_depth <= OUTPUT_ROOT_HM_SHAPE - 1)))
    assert bool(jnp.all((hand_type >= 0) & (hand_type <= 1)))
    print("KERNEL_OK")
</pallas_src>

<mosaic_0001>
module attributes {stable_mosaic.version = 11 : i64} {
  func.func @deconv_kernel_acc(%arg0: i32, %arg1: i32, %arg2: i32, %arg3: memref<1x1x2x2x128xbf16, #tpu.memory_space<vmem>>, %arg4: memref<1x512x256xbf16, #tpu.memory_space<vmem>>, %arg5: memref<1x1x256xf32, #tpu.memory_space<vmem>>, %arg6: memref<1x1x9x256xbf16, #tpu.memory_space<vmem>>, %arg7: memref<4x4x128xbf16, #tpu.memory_space<vmem>>, %arg8: memref<9x512xbf16, #tpu.memory_space<vmem>>, %arg9: memref<9x256xf32, #tpu.memory_space<vmem>>) attributes {dimension_semantics = [#tpu.dimension_semantics<parallel>, #tpu.dimension_semantics<parallel>, #tpu.dimension_semantics<arbitrary>], iteration_bounds = array<i64: 1, 2, 2>, scalar_prefetch = 0 : i64, scratch_operands = 3 : i64, tpu.core_type = #tpu.core_type<tc>, window_params = [{transform_indices = @transform_0, window_bounds = array<i64: 1, 1, 2, 2, 128>}, {transform_indices = @transform_1, window_bounds = array<i64: 1, 512, 256>}, {transform_indices = @transform_2, window_bounds = array<i64: 1, 1, 256>}, {transform_indices = @transform_3, window_bounds = array<i64: 1, 1, 9, 256>}]} {
    %c0_i32 = arith.constant 0 : i32
    %0 = arith.cmpi eq, %arg2, %c0_i32 : i32
    %1 = arith.extui %0 : i1 to i32
    %c0_i32_0 = arith.constant 0 : i32
    %2 = arith.cmpi ne, %1, %c0_i32_0 : i32
    scf.if %2 {
      %cst_60 = arith.constant 0.000000e+00 : f32
      %48 = vector.broadcast %cst_60 : f32 to vector<9x256xf32>
      %c0_61 = arith.constant 0 : index
      %c0_62 = arith.constant 0 : index
      %49 = vector.load %arg9[%c0_61, %c0_62] : memref<9x256xf32, #tpu.memory_space<vmem>>, vector<9x256xf32>
      tpu.vector_store %arg9[%c0_61, %c0_62], %48 {strides = array<i32>} : memref<9x256xf32, #tpu.memory_space<vmem>>, vector<9x256xf32>,
    } else {
    }
    %cst = arith.constant 0.000000e+00 : bf16
    %3 = vector.broadcast %cst : bf16 to vector<4x4x128xbf16>
    %c0 = arith.constant 0 : index
    %c0_1 = arith.constant 0 : index
    %c0_2 = arith.constant 0 : index
    %4 = vector.load %arg7[%c0, %c0_1, %c0_2] : memref<4x4x128xbf16, #tpu.memory_space<vmem>>, vector<4x4x128xbf16>
    tpu.vector_store %arg7[%c0, %c0_1, %c0_2], %3 {strides = array<i32>} : memref<4x4x128xbf16, #tpu.memory_space<vmem>>, vector<4x4x128xbf16>,
    %c0_3 = arith.constant 0 : index
    %c0_4 = arith.constant 0 : index
    %c0_5 = arith.constant 0 : index
    %c0_6 = arith.constant 0 : index
    %c0_7 = arith.constant 0 : index
    %5 = vector.load %arg3[%c0_3, %c0_4, %c0_5, %c0_6, %c0_7] : memref<1x1x2x2x128xbf16, #tpu.memory_space<vmem>>, vector<1x1x2x2x128xbf16>
    %6 = vector.shape_cast %5 : vector<1x1x2x2x128xbf16> to vector<2x2x128xbf16>
    %c1 = arith.constant 1 : index
    %c1_8 = arith.constant 1 : index
    %c0_9 = arith.constant 0 : index
    %7 = vector.load %arg7[%c1, %c1_8, %c0_9] : memref<4x4x128xbf16, #tpu.memory_space<vmem>>, vector<2x2x128xbf16>
    tpu.vector_store %arg7[%c1, %c1_8, %c0_9], %6 {strides = array<i32>} : memref<4x4x128xbf16, #tpu.memory_space<vmem>>, vector<2x2x128xbf16>,
    %c0_10 = arith.constant 0 : index
    %c0_11 = arith.constant 0 : index
    %c0_12 = arith.constant 0 : index
    %8 = vector.load %arg7[%c0_10, %c0_11, %c0_12] : memref<4x4x128xbf16, #tpu.memory_space<vmem>>, vector<1x3x128xbf16>
    %9 = vector.shape_cast %8 : vector<1x3x128xbf16> to vector<3x128xbf16>
    %c0_13 = arith.constant 0 : index
    %c1_14 = arith.constant 1 : index
    %c0_15 = arith.constant 0 : index
    %10 = vector.load %arg7[%c0_13, %c1_14, %c0_15] : memref<4x4x128xbf16, #tpu.memory_space<vmem>>, vector<1x3x128xbf16>
    %11 = vector.shape_cast %10 : vector<1x3x128xbf16> to vector<3x128xbf16>
    %c1_16 = arith.constant 1 : index
    %c0_17 = arith.constant 0 : index
    %c0_18 = arith.constant 0 : index
    %12 = vector.load %arg7[%c1_16, %c0_17, %c0_18] : memref<4x4x128xbf16, #tpu.memory_space<vmem>>, vector<1x3x128xbf16>
    %13 = vector.shape_cast %12 : vector<1x3x128xbf16> to vector<3x128xbf16>
    %c1_19 = arith.constant 1 : index
    %c1_20 = arith.constant 1 : index
    %c0_21 = arith.constant 0 : index
    %14 = vector.load %arg7[%c1_19, %c1_20, %c0_21] : memref<4x4x128xbf16, #tpu.memory_space<vmem>>, vector<1x3x128xbf16>
    %15 = vector.shape_cast %14 : vector<1x3x128xbf16> to vector<3x128xbf16>
    %16 = tpu.concatenate %9, %11, %13, %15 in 1 : vector<3x128xbf16>, vector<3x128xbf16>, vector<3x128xbf16>, vector<3x128xbf16> -> vector<3x512xbf16>
    %c0_22 = arith.constant 0 : index
    %c0_23 = arith.constant 0 : index
    %17 = vector.load %arg8[%c0_22, %c0_23] : memref<9x512xbf16, #tpu.memory_space<vmem>>, vector<3x512xbf16>
    tpu.vector_store %arg8[%c0_22, %c0_23], %16 {strides = array<i32>} : memref<9x512xbf16, #tpu.memory_space<vmem>>, vector<3x512xbf16>,
    %c1_24 = arith.constant 1 : index
    %c0_25 = arith.constant 0 : index
    %c0_26 = arith.constant 0 : index
    %18 = vector.load %arg7[%c1_24, %c0_25, %c0_26] : memref<4x4x128xbf16, #tpu.memory_space<vmem>>, vector<1x3x128xbf16>
    %19 = vector.shape_cast %18 : vector<1x3x128xbf16> to vector<3x128xbf16>
    %c1_27 = arith.constant 1 : index
    %c1_28 = arith.constant 1 : index
    %c0_29 = arith.constant 0 : index
    %20 = vector.load %arg7[%c1_27, %c1_28, %c0_29] : memref<4x4x128xbf16, #tpu.memory_space<vmem>>, vector<1x3x128xbf16>
    %21 = vector.shape_cast %20 : vector<1x3x128xbf16> to vector<3x128xbf16>
    %c2 = arith.constant 2 : index
    %c0_30 = arith.constant 0 : index
    %c0_31 = arith.constant 0 : index
    %22 = vector.load %arg7[%c2, %c0_30, %c0_31] : memref<4x4x128xbf16, #tpu.memory_space<vmem>>, vector<1x3x128xbf16>
    %23 = vector.shape_cast %22 : vector<1x3x128xbf16> to vector<3x128xbf16>
    %c2_32 = arith.constant 2 : index
    %c1_33 = arith.constant 1 : index
    %c0_34 = arith.constant 0 : index
    %24 = vector.load %arg7[%c2_32, %c1_33, %c0_34] : memref<4x4x128xbf16, #tpu.memory_space<vmem>>, vector<1x3x128xbf16>
    %25 = vector.shape_cast %24 : vector<1x3x128xbf16> to vector<3x128xbf16>
    %26 = tpu.concatenate %19, %21, %23, %25 in 1 : vector<3x128xbf16>, vector<3x128xbf16>, vector<3x128xbf16>, vector<3x128xbf16> -> vector<3x512xbf16>
    %c3 = arith.constant 3 : index
    %c0_35 = arith.constant 0 : index
    %27 = vector.load %arg8[%c3, %c0_35] : memref<9x512xbf16, #tpu.memory_space<vmem>>, vector<3x512xbf16>
    tpu.vector_store %arg8[%c3, %c0_35], %26 {strides = array<i32>} : memref<9x512xbf16, #tpu.memory_space<vmem>>, vector<3x512xbf16>,
    %c2_36 = arith.constant 2 : index
    %c0_37 = arith.constant 0 : index
    %c0_38 = arith.constant 0 : index
    %28 = vector.load %arg7[%c2_36, %c0_37, %c0_38] : memref<4x4x128xbf16, #tpu.memory_space<vmem>>, vector<1x3x128xbf16>
    %29 = vector.shape_cast %28 : vector<1x3x128xbf16> to vector<3x128xbf16>
    %c2_39 = arith.constant 2 : index
    %c1_40 = arith.constant 1 : index
    %c0_41 = arith.constant 0 : index
    %30 = vector.load %arg7[%c2_39, %c1_40, %c0_41] : memref<4x4x128xbf16, #tpu.memory_space<vmem>>, vector<1x3x128xbf16>
    %31 = vector.shape_cast %30 : vector<1x3x128xbf16> to vector<3x128xbf16>
    %c3_42 = arith.constant 3 : index
    %c0_43 = arith.constant 0 : index
    %c0_44 = arith.constant 0 : index
    %32 = vector.load %arg7[%c3_42, %c0_43, %c0_44] : memref<4x4x128xbf16, #tpu.memory_space<vmem>>, vector<1x3x128xbf16>
    %33 = vector.shape_cast %32 : vector<1x3x128xbf16> to vector<3x128xbf16>
    %c3_45 = arith.constant 3 : index
    %c1_46 = arith.constant 1 : index
    %c0_47 = arith.constant 0 : index
    %34 = vector.load %arg7[%c3_45, %c1_46, %c0_47] : memref<4x4x128xbf16, #tpu.memory_space<vmem>>, vector<1x3x128xbf16>
    %35 = vector.shape_cast %34 : vector<1x3x128xbf16> to vector<3x128xbf16>
    %36 = tpu.concatenate %29, %31, %33, %35 in 1 : vector<3x128xbf16>, vector<3x128xbf16>, vector<3x128xbf16>, vector<3x128xbf16> -> vector<3x512xbf16>
    %c6 = arith.constant 6 : index
    %c0_48 = arith.constant 0 : index
    %37 = vector.load %arg8[%c6, %c0_48] : memref<9x512xbf16, #tpu.memory_space<vmem>>, vector<3x512xbf16>
    tpu.vector_store %arg8[%c6, %c0_48], %36 {strides = array<i32>} : memref<9x512xbf16, #tpu.memory_space<vmem>>, vector<3x512xbf16>,
    %c0_49 = arith.constant 0 : index
    %c0_50 = arith.constant 0 : index
    %38 = vector.load %arg9[%c0_49, %c0_50] : memref<9x256xf32, #tpu.memory_space<vmem>>, vector<9x256xf32>
    %c0_51 = arith.constant 0 : index
    %c0_52 = arith.constant 0 : index
    %39 = vector.load %arg8[%c0_51, %c0_52] : memref<9x512xbf16, #tpu.memory_space<vmem>>, vector<9x512xbf16>
    %c0_53 = arith.constant 0 : index
    %c0_54 = arith.constant 0 : index
    %c0_55 = arith.constant 0 : index
    %40 = vector.load %arg4[%c0_53, %c0_54, %c0_55] : memref<1x512x256xbf16, #tpu.memory_space<vmem>>, vector<1x512x256xbf16>
    %41 = vector.shape_cast %40 : vector<1x512x256xbf16> to vector<512x256xbf16>
    %cst_56 = arith.constant dense<0.000000e+00> : vector<9x256xf32>
    %42 = tpu.matmul %39, %41, %cst_56 {dimension_numbers = #tpu.dot_dimension_numbers<[1], [0], [0], [1], [0, 0, 1, 1], [], []>} : vector<9x512xbf16>, vector<512x256xbf16>, vector<9x256xf32> -> vector<9x256xf32>
    %43 = arith.addf %38, %42 : vector<9x256xf32>
    %c0_57 = arith.constant 0 : index
    %c0_58 = arith.constant 0 : index
    %44 = vector.load %arg9[%c0_57, %c0_58] : memref<9x256xf32, #tpu.memory_space<vmem>>, vector<9x256xf32>
    tpu.vector_store %arg9[%c0_57, %c0_58], %43 {strides = array<i32>} : memref<9x256xf32, #tpu.memory_space<vmem>>, vector<9x256xf32>,
    %c1_i32 = arith.constant 1 : i32
    %45 = arith.cmpi eq, %arg2, %c1_i32 : i32
    %46 = arith.extui %45 : i1 to i32
    %c0_i32_59 = arith.constant 0 : i32
    %47 = arith.cmpi ne, %46, %c0_i32_59 : i32
    scf.if %47 {
      %c0_60 = arith.constant 0 : index
      %c0_61 = arith.constant 0 : index
      %48 = vector.load %arg9[%c0_60, %c0_61] : memref<9x256xf32, #tpu.memory_space<vmem>>, vector<9x256xf32>
      %c0_62 = arith.constant 0 : index
      %c0_63 = arith.constant 0 : index
      %c0_64 = arith.constant 0 : index
      %49 = vector.load %arg5[%c0_62, %c0_63, %c0_64] : memref<1x1x256xf32, #tpu.memory_space<vmem>>, vector<1x1x256xf32>
      %50 = vector.shape_cast %49 : vector<1x1x256xf32> to vector<1x256xf32>
      %51 = vector.broadcast %50 : vector<1x256xf32> to vector<9x256xf32>
      %52 = arith.addf %48, %51 : vector<9x256xf32>
      %cst_65 = arith.constant 0.000000e+00 : f32
      %53 = vector.broadcast %cst_65 : f32 to vector<9x256xf32>
      %54 = arith.maximumf %52, %53 : vector<9x256xf32>
      %55 = arith.truncf %54 : vector<9x256xf32> to vector<9x256xbf16>
      %c0_66 = arith.constant 0 : index
      %c0_67 = arith.constant 0 : index
      %c0_68 = arith.constant 0 : index
      %c0_69 = arith.constant 0 : index
      %56 = vector.load %arg6[%c0_66, %c0_67, %c0_68, %c0_69] : memref<1x1x9x256xbf16, #tpu.memory_space<vmem>>, vector<1x1x9x256xbf16>
      %57 = vector.shape_cast %56 : vector<1x1x9x256xbf16> to vector<9x256xbf16>
      %58 = vector.shape_cast %55 : vector<9x256xbf16> to vector<1x1x9x256xbf16>
      tpu.vector_store %arg6[%c0_66, %c0_67, %c0_68, %c0_69], %58 {strides = array<i32>} : memref<1x1x9x256xbf16, #tpu.memory_space<vmem>>, vector<1x1x9x256xbf16>,
    } else {
    }
    return
  }
  func.func @transform_0(%arg0: i32, %arg1: i32, %arg2: i32) -> (i32, i32, i32, i32, i32) {
    %c0_i32 = arith.constant 0 : i32
    %c0_i32_0 = arith.constant 0 : i32
    %c0_i32_1 = arith.constant 0 : i32
    return %arg0, %arg1, %c0_i32, %c0_i32_0, %arg2 : i32, i32, i32, i32, i32
  }
  func.func @transform_1(%arg0: i32, %arg1: i32, %arg2: i32) -> (i32, i32, i32) {
    %c0_i32 = arith.constant 0 : i32
    %c0_i32_0 = arith.constant 0 : i32
    return %arg0, %arg2, %c0_i32 : i32, i32, i32
  }
  func.func @transform_2(%arg0: i32, %arg1: i32, %arg2: i32) -> (i32, i32, i32) {
    %c0_i32 = arith.constant 0 : i32
    %c0_i32_0 = arith.constant 0 : i32
    %c0_i32_1 = arith.constant 0 : i32
    return %arg0, %c0_i32, %c0_i32_0 : i32, i32, i32
  }
  func.func @transform_3(%arg0: i32, %arg1: i32, %arg2: i32) -> (i32, i32, i32, i32) {
    %c0_i32 = arith.constant 0 : i32
    %c0_i32_0 = arith.constant 0 : i32
    %c0_i32_1 = arith.constant 0 : i32
    return %arg0, %arg1, %c0_i32, %c0_i32_0 : i32, i32, i32, i32
  }
}

module attributes {stable_mosaic.version = 11 : i64} {
  func.func @deconv_kernel_single(%arg0: i32, %arg1: i32, %arg2: memref<1x1x4x4x32xbf16, #tpu.memory_space<vmem>>, %arg3: memref<1x128x128xbf16, #tpu.memory_space<vmem>>, %arg4: memref<1x1x128xf32, #tpu.memory_space<vmem>>, %arg5: memref<1x1x25x128xbf16, #tpu.memory_space<vmem>>, %arg6: memref<6x6x32xbf16, #tpu.memory_space<vmem>>, %arg7: memref<25x128xbf16, #tpu.memory_space<vmem>>) attributes {dimension_semantics = [#tpu.dimension_semantics<parallel>, #tpu.dimension_semantics<parallel>], iteration_bounds = array<i64: 2, 2>, scalar_prefetch = 0 : i64, scratch_operands = 2 : i64, tpu.core_type = #tpu.core_type<tc>, window_params = [{transform_indices = @transform_0, window_bounds = array<i64: 1, 1, 4, 4, 32>}, {transform_indices = @transform_1, window_bounds = array<i64: 1, 128, 128>}, {transform_indices = @transform_2, window_bounds = array<i64: 1, 1, 128>}, {transform_indices = @transform_3, window_bounds = array<i64: 1, 1, 25, 128>}]} {
    %cst = arith.constant 0.000000e+00 : bf16
    %0 = vector.broadcast %cst : bf16 to vector<6x6x32xbf16>
    %c0 = arith.constant 0 : index
    %c0_0 = arith.constant 0 : index
    %c0_1 = arith.constant 0 : index
    %1 = vector.load %arg6[%c0, %c0_0, %c0_1] : memref<6x6x32xbf16, #tpu.memory_space<vmem>>, vector<6x6x32xbf16>
    tpu.vector_store %arg6[%c0, %c0_0, %c0_1], %0 {strides = array<i32>} : memref<6x6x32xbf16, #tpu.memory_space<vmem>>, vector<6x6x32xbf16>,
    %c0_2 = arith.constant 0 : index
    %c0_3 = arith.constant 0 : index
    %c0_4 = arith.constant 0 : index
    %c0_5 = arith.constant 0 : index
    %c0_6 = arith.constant 0 : index
    %2 = vector.load %arg2[%c0_2, %c0_3, %c0_4, %c0_5, %c0_6] : memref<1x1x4x4x32xbf16, #tpu.memory_space<vmem>>, vector<1x1x4x4x32xbf16>
    %3 = vector.shape_cast %2 : vector<1x1x4x4x32xbf16> to vector<4x4x32xbf16>
    %c1 = arith.constant 1 : index
    %c1_7 = arith.constant 1 : index
    %c0_8 = arith.constant 0 : index
    %4 = vector.load %arg6[%c1, %c1_7, %c0_8] : memref<6x6x32xbf16, #tpu.memory_space<vmem>>, vector<4x4x32xbf16>
    tpu.vector_store %arg6[%c1, %c1_7, %c0_8], %3 {strides = array<i32>} : memref<6x6x32xbf16, #tpu.memory_space<vmem>>, vector<4x4x32xbf16>,
    %c0_9 = arith.constant 0 : index
    %c0_10 = arith.constant 0 : index
    %c0_11 = arith.constant 0 : index
    %5 = vector.load %arg6[%c0_9, %c0_10, %c0_11] : memref<6x6x32xbf16, #tpu.memory_space<vmem>>, vector<1x5x32xbf16>
    %6 = vector.shape_cast %5 : vector<1x5x32xbf16> to vector<5x32xbf16>
    %c0_12 = arith.constant 0 : index
    %c1_13 = arith.constant 1 : index
    %c0_14 = arith.constant 0 : index
    %7 = vector.load %arg6[%c0_12, %c1_13, %c0_14] : memref<6x6x32xbf16, #tpu.memory_space<vmem>>, vector<1x5x32xbf16>
    %8 = vector.shape_cast %7 : vector<1x5x32xbf16> to vector<5x32xbf16>
    %c1_15 = arith.constant 1 : index
    %c0_16 = arith.constant 0 : index
    %c0_17 = arith.constant 0 : index
    %9 = vector.load %arg6[%c1_15, %c0_16, %c0_17] : memref<6x6x32xbf16, #tpu.memory_space<vmem>>, vector<1x5x32xbf16>
    %10 = vector.shape_cast %9 : vector<1x5x32xbf16> to vector<5x32xbf16>
    %c1_18 = arith.constant 1 : index
    %c1_19 = arith.constant 1 : index
    %c0_20 = arith.constant 0 : index
    %11 = vector.load %arg6[%c1_18, %c1_19, %c0_20] : memref<6x6x32xbf16, #tpu.memory_space<vmem>>, vector<1x5x32xbf16>
    %12 = vector.shape_cast %11 : vector<1x5x32xbf16> to vector<5x32xbf16>
    %13 = tpu.concatenate %6, %8, %10, %12 in 1 : vector<5x32xbf16>, vector<5x32xbf16>, vector<5x32xbf16>, vector<5x32xbf16> -> vector<5x128xbf16>
    %c0_21 = arith.constant 0 : index
    %c0_22 = arith.constant 0 : index
    %14 = vector.load %arg7[%c0_21, %c0_22] : memref<25x128xbf16, #tpu.memory_space<vmem>>, vector<5x128xbf16>
    tpu.vector_store %arg7[%c0_21, %c0_22], %13 {strides = array<i32>} : memref<25x128xbf16, #tpu.memory_space<vmem>>, vector<5x128xbf16>,
    %c1_23 = arith.constant 1 : index
    %c0_24 = arith.constant 0 : index
    %c0_25 = arith.constant 0 : index
    %15 = vector.load %arg6[%c1_23, %c0_24, %c0_25] : memref<6x6x32xbf16, #tpu.memory_space<vmem>>, vector<1x5x32xbf16>
    %16 = vector.shape_cast %15 : vector<1x5x32xbf16> to vector<5x32xbf16>
    %c1_26 = arith.constant 1 : index
    %c1_27 = arith.constant 1 : index
    %c0_28 = arith.constant 0 : index
    %17 = vector.load %arg6[%c1_26, %c1_27, %c0_28] : memref<6x6x32xbf16, #tpu.memory_space<vmem>>, vector<1x5x32xbf16>
    %18 = vector.shape_cast %17 : vector<1x5x32xbf16> to vector<5x32xbf16>
    %c2 = arith.constant 2 : index
    %c0_29 = arith.constant 0 : index
    %c0_30 = arith.constant 0 : index
    %19 = vector.load %arg6[%c2, %c0_29, %c0_30] : memref<6x6x32xbf16, #tpu.memory_space<vmem>>, vector<1x5x32xbf16>
    %20 = vector.shape_cast %19 : vector<1x5x32xbf16> to vector<5x32xbf16>
    %c2_31 = arith.constant 2 : index
    %c1_32 = arith.constant 1 : index
    %c0_33 = arith.constant 0 : index
    %21 = vector.load %arg6[%c2_31, %c1_32, %c0_33] : memref<6x6x32xbf16, #tpu.memory_space<vmem>>, vector<1x5x32xbf16>
    %22 = vector.shape_cast %21 : vector<1x5x32xbf16> to vector<5x32xbf16>
    %23 = tpu.concatenate %16, %18, %20, %22 in 1 : vector<5x32xbf16>, vector<5x32xbf16>, vector<5x32xbf16>, vector<5x32xbf16> -> vector<5x128xbf16>
    %c5 = arith.constant 5 : index
    %c0_34 = arith.constant 0 : index
    %24 = vector.load %arg7[%c5, %c0_34] : memref<25x128xbf16, #tpu.memory_space<vmem>>, vector<5x128xbf16>
    tpu.vector_store %arg7[%c5, %c0_34], %23 {strides = array<i32>} : memref<25x128xbf16, #tpu.memory_space<vmem>>, vector<5x128xbf16>,
    %c2_35 = arith.constant 2 : index
    %c0_36 = arith.constant 0 : index
    %c0_37 = arith.constant 0 : index
    %25 = vector.load %arg6[%c2_35, %c0_36, %c0_37] : memref<6x6x32xbf16, #tpu.memory_space<vmem>>, vector<1x5x32xbf16>
    %26 = vector.shape_cast %25 : vector<1x5x32xbf16> to vector<5x32xbf16>
    %c2_38 = arith.constant 2 : index
    %c1_39 = arith.constant 1 : index
    %c0_40 = arith.constant 0 : index
    %27 = vector.load %arg6[%c2_38, %c1_39, %c0_40] : memref<6x6x32xbf16, #tpu.memory_space<vmem>>, vector<1x5x32xbf16>
    %28 = vector.shape_cast %27 : vector<1x5x32xbf16> to vector<5x32xbf16>
    %c3 = arith.constant 3 : index
    %c0_41 = arith.constant 0 : index
    %c0_42 = arith.constant 0 : index
    %29 = vector.load %arg6[%c3, %c0_41, %c0_42] : memref<6x6x32xbf16, #tpu.memory_space<vmem>>, vector<1x5x32xbf16>
    %30 = vector.shape_cast %29 : vector<1x5x32xbf16> to vector<5x32xbf16>
    %c3_43 = arith.constant 3 : index
    %c1_44 = arith.constant 1 : index
    %c0_45 = arith.constant 0 : index
    %31 = vector.load %arg6[%c3_43, %c1_44, %c0_45] : memref<6x6x32xbf16, #tpu.memory_space<vmem>>, vector<1x5x32xbf16>
    %32 = vector.shape_cast %31 : vector<1x5x32xbf16> to vector<5x32xbf16>
    %33 = tpu.concatenate %26, %28, %30, %32 in 1 : vector<5x32xbf16>, vector<5x32xbf16>, vector<5x32xbf16>, vector<5x32xbf16> -> vector<5x128xbf16>
    %c10 = arith.constant 10 : index
    %c0_46 = arith.constant 0 : index
    %34 = vector.load %arg7[%c10, %c0_46] : memref<25x128xbf16, #tpu.memory_space<vmem>>, vector<5x128xbf16>
    tpu.vector_store %arg7[%c10, %c0_46], %33 {strides = array<i32>} : memref<25x128xbf16, #tpu.memory_space<vmem>>, vector<5x128xbf16>,
    %c3_47 = arith.constant 3 : index
    %c0_48 = arith.constant 0 : index
    %c0_49 = arith.constant 0 : index
    %35 = vector.load %arg6[%c3_47, %c0_48, %c0_49] : memref<6x6x32xbf16, #tpu.memory_space<vmem>>, vector<1x5x32xbf16>
    %36 = vector.shape_cast %35 : vector<1x5x32xbf16> to vector<5x32xbf16>
    %c3_50 = arith.constant 3 : index
    %c1_51 = arith.constant 1 : index
    %c0_52 = arith.constant 0 : index
    %37 = vector.load %arg6[%c3_50, %c1_51, %c0_52] : memref<6x6x32xbf16, #tpu.memory_space<vmem>>, vector<1x5x32xbf16>
    %38 = vector.shape_cast %37 : vector<1x5x32xbf16> to vector<5x32xbf16>
    %c4 = arith.constant 4 : index
    %c0_53 = arith.constant 0 : index
    %c0_54 = arith.constant 0 : index
    %39 = vector.load %arg6[%c4, %c0_53, %c0_54] : memref<6x6x32xbf16, #tpu.memory_space<vmem>>, vector<1x5x32xbf16>
    %40 = vector.shape_cast %39 : vector<1x5x32xbf16> to vector<5x32xbf16>
    %c4_55 = arith.constant 4 : index
    %c1_56 = arith.constant 1 : index
    %c0_57 = arith.constant 0 : index
    %41 = vector.load %arg6[%c4_55, %c1_56, %c0_57] : memref<6x6x32xbf16, #tpu.memory_space<vmem>>, vector<1x5x32xbf16>
    %42 = vector.shape_cast %41 : vector<1x5x32xbf16> to vector<5x32xbf16>
    %43 = tpu.concatenate %36, %38, %40, %42 in 1 : vector<5x32xbf16>, vector<5x32xbf16>, vector<5x32xbf16>, vector<5x32xbf16> -> vector<5x128xbf16>
    %c15 = arith.constant 15 : index
    %c0_58 = arith.constant 0 : index
    %44 = vector.load %arg7[%c15, %c0_58] : memref<25x128xbf16, #tpu.memory_space<vmem>>, vector<5x128xbf16>
    tpu.vector_store %arg7[%c15, %c0_58], %43 {strides = array<i32>} : memref<25x128xbf16, #tpu.memory_space<vmem>>, vector<5x128xbf16>,
    %c4_59 = arith.constant 4 : index
    %c0_60 = arith.constant 0 : index
    %c0_61 = arith.constant 0 : index
    %45 = vector.load %arg6[%c4_59, %c0_60, %c0_61] : memref<6x6x32xbf16, #tpu.memory_space<vmem>>, vector<1x5x32xbf16>
    %46 = vector.shape_cast %45 : vector<1x5x32xbf16> to vector<5x32xbf16>
    %c4_62 = arith.constant 4 : index
    %c1_63 = arith.constant 1 : index
    %c0_64 = arith.constant 0 : index
    %47 = vector.load %arg6[%c4_62, %c1_63, %c0_64] : memref<6x6x32xbf16, #tpu.memory_space<vmem>>, vector<1x5x32xbf16>
    %48 = vector.shape_cast %47 : vector<1x5x32xbf16> to vector<5x32xbf16>
    %c5_65 = arith.constant 5 : index
    %c0_66 = arith.constant 0 : index
    %c0_67 = arith.constant 0 : index
    %49 = vector.load %arg6[%c5_65, %c0_66, %c0_67] : memref<6x6x32xbf16, #tpu.memory_space<vmem>>, vector<1x5x32xbf16>
    %50 = vector.shape_cast %49 : vector<1x5x32xbf16> to vector<5x32xbf16>
    %c5_68 = arith.constant 5 : index
    %c1_69 = arith.constant 1 : index
    %c0_70 = arith.constant 0 : index
    %51 = vector.load %arg6[%c5_68, %c1_69, %c0_70] : memref<6x6x32xbf16, #tpu.memory_space<vmem>>, vector<1x5x32xbf16>
    %52 = vector.shape_cast %51 : vector<1x5x32xbf16> to vector<5x32xbf16>
    %53 = tpu.concatenate %46, %48, %50, %52 in 1 : vector<5x32xbf16>, vector<5x32xbf16>, vector<5x32xbf16>, vector<5x32xbf16> -> vector<5x128xbf16>
    %c20 = arith.constant 20 : index
    %c0_71 = arith.constant 0 : index
    %54 = vector.load %arg7[%c20, %c0_71] : memref<25x128xbf16, #tpu.memory_space<vmem>>, vector<5x128xbf16>
    tpu.vector_store %arg7[%c20, %c0_71], %53 {strides = array<i32>} : memref<25x128xbf16, #tpu.memory_space<vmem>>, vector<5x128xbf16>,
    %c0_72 = arith.constant 0 : index
    %c0_73 = arith.constant 0 : index
    %55 = vector.load %arg7[%c0_72, %c0_73] : memref<25x128xbf16, #tpu.memory_space<vmem>>, vector<25x128xbf16>
    %c0_74 = arith.constant 0 : index
    %c0_75 = arith.constant 0 : index
    %c0_76 = arith.constant 0 : index
    %56 = vector.load %arg3[%c0_74, %c0_75, %c0_76] : memref<1x128x128xbf16, #tpu.memory_space<vmem>>, vector<1x128x128xbf16>
    %57 = vector.shape_cast %56 : vector<1x128x128xbf16> to vector<128x128xbf16>
    %cst_77 = arith.constant dense<0.000000e+00> : vector<25x128xf32>
    %58 = tpu.matmul %55, %57, %cst_77 {dimension_numbers = #tpu.dot_dimension_numbers<[1], [0], [0], [1], [0, 0, 1, 1], [], []>} : vector<25x128xbf16>, vector<128x128xbf16>, vector<25x128xf32> -> vector<25x128xf32>
    %c0_78 = arith.constant 0 : index
    %c0_79 = arith.constant 0 : index
    %c0_80 = arith.constant 0 : index
    %59 = vector.load %arg4[%c0_78, %c0_79, %c0_80] : memref<1x1x128xf32, #tpu.memory_space<vmem>>, vector<1x1x128xf32>
    %60 = vector.shape_cast %59 : vector<1x1x128xf32> to vector<1x128xf32>
    %61 = vector.broadcast %60 : vector<1x128xf32> to vector<25x128xf32>
    %62 = arith.addf %58, %61 : vector<25x128xf32>
    %cst_81 = arith.constant 0.000000e+00 : f32
    %63 = vector.broadcast %cst_81 : f32 to vector<25x128xf32>
    %64 = arith.maximumf %62, %63 : vector<25x128xf32>
    %65 = arith.truncf %64 : vector<25x128xf32> to vector<25x128xbf16>
    %c0_82 = arith.constant 0 : index
    %c0_83 = arith.constant 0 : index
    %c0_84 = arith.constant 0 : index
    %c0_85 = arith.constant 0 : index
    %66 = vector.load %arg5[%c0_82, %c0_83, %c0_84, %c0_85] : memref<1x1x25x128xbf16, #tpu.memory_space<vmem>>, vector<1x1x25x128xbf16>
    %67 = vector.shape_cast %66 : vector<1x1x25x128xbf16> to vector<25x128xbf16>
    %68 = vector.shape_cast %65 : vector<25x128xbf16> to vector<1x1x25x128xbf16>
    tpu.vector_store %arg5[%c0_82, %c0_83, %c0_84, %c0_85], %68 {strides = array<i32>} : memref<1x1x25x128xbf16, #tpu.memory_space<vmem>>, vector<1x1x25x128xbf16>,
    return
  }
  func.func @transform_0(%arg0: i32, %arg1: i32) -> (i32, i32, i32, i32, i32) {
    %c0_i32 = arith.constant 0 : i32
    %c0_i32_0 = arith.constant 0 : i32
    %c0_i32_1 = arith.constant 0 : i32
    %c0_i32_2 = arith.constant 0 : i32
    return %arg0, %arg1, %c0_i32, %c0_i32_0, %c0_i32_1 : i32, i32, i32, i32, i32
  }
  func.func @transform_1(%arg0: i32, %arg1: i32) -> (i32, i32, i32) {
    %c0_i32 = arith.constant 0 : i32
    %c0_i32_0 = arith.constant 0 : i32
    %c0_i32_1 = arith.constant 0 : i32
    return %arg0, %c0_i32, %c0_i32_0 : i32, i32, i32
  }
  func.func @transform_2(%arg0: i32, %arg1: i32) -> (i32, i32, i32) {
    %c0_i32 = arith.constant 0 : i32
    %c0_i32_0 = arith.constant 0 : i32
    %c0_i32_1 = arith.constant 0 : i32
    return %arg0, %c0_i32, %c0_i32_0 : i32, i32, i32
  }
  func.func @transform_3(%arg0: i32, %arg1: i32) -> (i32, i32, i32, i32) {
    %c0_i32 = arith.constant 0 : i32
    %c0_i32_0 = arith.constant 0 : i32
    %c0_i32_1 = arith.constant 0 : i32
    return %arg0, %arg1, %c0_i32, %c0_i32_0 : i32, i32, i32, i32
  }
}

module attributes {stable_mosaic.version = 11 : i64} {
  func.func @deconv_kernel_single(%arg0: i32, %arg1: i32, %arg2: memref<1x1x8x8x32xbf16, #tpu.memory_space<vmem>>, %arg3: memref<1x128x128xbf16, #tpu.memory_space<vmem>>, %arg4: memref<1x1x128xf32, #tpu.memory_space<vmem>>, %arg5: memref<1x1x81x128xbf16, #tpu.memory_space<vmem>>, %arg6: memref<10x10x32xbf16, #tpu.memory_space<vmem>>, %arg7: memref<81x128xbf16, #tpu.memory_space<vmem>>) attributes {dimension_semantics = [#tpu.dimension_semantics<parallel>, #tpu.dimension_semantics<parallel>], iteration_bounds = array<i64: 2, 2>, scalar_prefetch = 0 : i64, scratch_operands = 2 : i64, tpu.core_type = #tpu.core_type<tc>, window_params = [{transform_indices = @transform_0, window_bounds = array<i64: 1, 1, 8, 8, 32>}, {transform_indices = @transform_1, window_bounds = array<i64: 1, 128, 128>}, {transform_indices = @transform_2, window_bounds = array<i64: 1, 1, 128>}, {transform_indices = @transform_3, window_bounds = array<i64: 1, 1, 81, 128>}]} {
    %cst = arith.constant 0.000000e+00 : bf16
    %0 = vector.broadcast %cst : bf16 to vector<10x10x32xbf16>
    %c0 = arith.constant 0 : index
    %c0_0 = arith.constant 0 : index
    %c0_1 = arith.constant 0 : index
    %1 = vector.load %arg6[%c0, %c0_0, %c0_1] : memref<10x10x32xbf16, #tpu.memory_space<vmem>>, vector<10x10x32xbf16>
    tpu.vector_store %arg6[%c0, %c0_0, %c0_1], %0 {strides = array<i32>} : memref<10x10x32xbf16, #tpu.memory_space<vmem>>, vector<10x10x32xbf16>,
    %c0_2 = arith.constant 0 : index
    %c0_3 = arith.constant 0 : index
    %c0_4 = arith.constant 0 : index
    %c0_5 = arith.constant 0 : index
    %c0_6 = arith.constant 0 : index
    %2 = vector.load %arg2[%c0_2, %c0_3, %c0_4, %c0_5, %c0_6] : memref<1x1x8x8x32xbf16, #tpu.memory_space<vmem>>, vector<1x1x8x8x32xbf16>
    %3 = vector.shape_cast %2 : vector<1x1x8x8x32xbf16> to vector<8x8x32xbf16>
    %c1 = arith.constant 1 : index
    %c1_7 = arith.constant 1 : index
    %c0_8 = arith.constant 0 : index
    %4 = vector.load %arg6[%c1, %c1_7, %c0_8] : memref<10x10x32xbf16, #tpu.memory_space<vmem>>, vector<8x8x32xbf16>
    tpu.vector_store %arg6[%c1, %c1_7, %c0_8], %3 {strides = array<i32>} : memref<10x10x32xbf16, #tpu.memory_space<vmem>>, vector<8x8x32xbf16>,
    %c0_9 = arith.constant 0 : index
    %c0_10 = arith.constant 0 : index
    %c0_11 = arith.constant 0 : index
    %5 = vector.load %arg6[%c0_9, %c0_10, %c0_11] : memref<10x10x32xbf16, #tpu.memory_space<vmem>>, vector<1x9x32xbf16>
    %6 = vector.shape_cast %5 : vector<1x9x32xbf16> to vector<9x32xbf16>
    %c0_12 = arith.constant 0 : index
    %c1_13 = arith.constant 1 : index
    %c0_14 = arith.constant 0 : index
    %7 = vector.load %arg6[%c0_12, %c1_13, %c0_14] : memref<10x10x32xbf16, #tpu.memory_space<vmem>>, vector<1x9x32xbf16>
    %8 = vector.shape_cast %7 : vector<1x9x32xbf16> to vector<9x32xbf16>
    %c1_15 = arith.constant 1 : index
    %c0_16 = arith.constant 0 : index
    %c0_17 = arith.constant 0 : index
    %9 = vector.load %arg6[%c1_15, %c0_16, %c0_17] : memref<10x10x32xbf16, #tpu.memory_space<vmem>>, vector<1x9x32xbf16>
    %10 = vector.shape_cast %9 : vector<1x9x32xbf16> to vector<9x32xbf16>
    %c1_18 = arith.constant 1 : index
    %c1_19 = arith.constant 1 : index
    %c0_20 = arith.constant 0 : index
    %11 = vector.load %arg6[%c1_18, %c1_19, %c0_20] : memref<10x10x32xbf16, #tpu.memory_space<vmem>>, vector<1x9x32xbf16>
    %12 = vector.shape_cast %11 : vector<1x9x32xbf16> to vector<9x32xbf16>
    %13 = tpu.concatenate %6, %8, %10, %12 in 1 : vector<9x32xbf16>, vector<9x32xbf16>, vector<9x32xbf16>, vector<9x32xbf16> -> vector<9x128xbf16>
    %c0_21 = arith.constant 0 : index
    %c0_22 = arith.constant 0 : index
    %14 = vector.load %arg7[%c0_21, %c0_22] : memref<81x128xbf16, #tpu.memory_space<vmem>>, vector<9x128xbf16>
    tpu.vector_store %arg7[%c0_21, %c0_22], %13 {strides = array<i32>} : memref<81x128xbf16, #tpu.memory_space<vmem>>, vector<9x128xbf16>,
    %c1_23 = arith.constant 1 : index
    %c0_24 = arith.constant 0 : index
    %c0_25 = arith.constant 0 : index
    %15 = vector.load %arg6[%c1_23, %c0_24, %c0_25] : memref<10x10x32xbf16, #tpu.memory_space<vmem>>, vector<1x9x32xbf16>
    %16 = vector.shape_cast %15 : vector<1x9x32xbf16> to vector<9x32xbf16>
    %c1_26 = arith.constant 1 : index
    %c1_27 = arith.constant 1 : index
    %c0_28 = arith.constant 0 : index
    %17 = vector.load %arg6[%c1_26, %c1_27, %c0_28] : memref<10x10x32xbf16, #tpu.memory_space<vmem>>, vector<1x9x32xbf16>
    %18 = vector.shape_cast %17 : vector<1x9x32xbf16> to vector<9x32xbf16>
    %c2 = arith.constant 2 : index
    %c0_29 = arith.constant 0 : index
    %c0_30 = arith.constant 0 : index
    %19 = vector.load %arg6[%c2, %c0_29, %c0_30] : memref<10x10x32xbf16, #tpu.memory_space<vmem>>, vector<1x9x32xbf16>
    %20 = vector.shape_cast %19 : vector<1x9x32xbf16> to vector<9x32xbf16>
    %c2_31 = arith.constant 2 : index
    %c1_32 = arith.constant 1 : index
    %c0_33 = arith.constant 0 : index
    %21 = vector.load %arg6[%c2_31, %c1_32, %c0_33] : memref<10x10x32xbf16, #tpu.memory_space<vmem>>, vector<1x9x32xbf16>
    %22 = vector.shape_cast %21 : vector<1x9x32xbf16> to vector<9x32xbf16>
    %23 = tpu.concatenate %16, %18, %20, %22 in 1 : vector<9x32xbf16>, vector<9x32xbf16>, vector<9x32xbf16>, vector<9x32xbf16> -> vector<9x128xbf16>
    %c9 = arith.constant 9 : index
    %c0_34 = arith.constant 0 : index
    %24 = vector.load %arg7[%c9, %c0_34] : memref<81x128xbf16, #tpu.memory_space<vmem>>, vector<9x128xbf16>
    tpu.vector_store %arg7[%c9, %c0_34], %23 {strides = array<i32>} : memref<81x128xbf16, #tpu.memory_space<vmem>>, vector<9x128xbf16>,
    %c2_35 = arith.constant 2 : index
    %c0_36 = arith.constant 0 : index
    %c0_37 = arith.constant 0 : index
    %25 = vector.load %arg6[%c2_35, %c0_36, %c0_37] : memref<10x10x32xbf16, #tpu.memory_space<vmem>>, vector<1x9x32xbf16>
    %26 = vector.shape_cast %25 : vector<1x9x32xbf16> to vector<9x32xbf16>
    %c2_38 = arith.constant 2 : index
    %c1_39 = arith.constant 1 : index
    %c0_40 = arith.constant 0 : index
    %27 = vector.load %arg6[%c2_38, %c1_39, %c0_40] : memref<10x10x32xbf16, #tpu.memory_space<vmem>>, vector<1x9x32xbf16>
    %28 = vector.shape_cast %27 : vector<1x9x32xbf16> to vector<9x32xbf16>
    %c3 = arith.constant 3 : index
    %c0_41 = arith.constant 0 : index
    %c0_42 = arith.constant 0 : index
    %29 = vector.load %arg6[%c3, %c0_41, %c0_42] : memref<10x10x32xbf16, #tpu.memory_space<vmem>>, vector<1x9x32xbf16>
    %30 = vector.shape_cast %29 : vector<1x9x32xbf16> to vector<9x32xbf16>
    %c3_43 = arith.constant 3 : index
    %c1_44 = arith.constant 1 : index
    %c0_45 = arith.constant 0 : index
    %31 = vector.load %arg6[%c3_43, %c1_44, %c0_45] : memref<10x10x32xbf16, #tpu.memory_space<vmem>>, vector<1x9x32xbf16>
    %32 = vector.shape_cast %31 : vector<1x9x32xbf16> to vector<9x32xbf16>
    %33 = tpu.concatenate %26, %28, %30, %32 in 1 : vector<9x32xbf16>, vector<9x32xbf16>, vector<9x32xbf16>, vector<9x32xbf16> -> vector<9x128xbf16>
    %c18 = arith.constant 18 : index
    %c0_46 = arith.constant 0 : index
    %34 = vector.load %arg7[%c18, %c0_46] : memref<81x128xbf16, #tpu.memory_space<vmem>>, vector<9x128xbf16>
    tpu.vector_store %arg7[%c18, %c0_46], %33 {strides = array<i32>} : memref<81x128xbf16, #tpu.memory_space<vmem>>, vector<9x128xbf16>,
    %c3_47 = arith.constant 3 : index
    %c0_48 = arith.constant 0 : index
    %c0_49 = arith.constant 0 : index
    %35 = vector.load %arg6[%c3_47, %c0_48, %c0_49] : memref<10x10x32xbf16, #tpu.memory_space<vmem>>, vector<1x9x32xbf16>
    %36 = vector.shape_cast %35 : vector<1x9x32xbf16> to vector<9x32xbf16>
    %c3_50 = arith.constant 3 : index
    %c1_51 = arith.constant 1 : index
    %c0_52 = arith.constant 0 : index
    %37 = vector.load %arg6[%c3_50, %c1_51, %c0_52] : memref<10x10x32xbf16, #tpu.memory_space<vmem>>, vector<1x9x32xbf16>
    %38 = vector.shape_cast %37 : vector<1x9x32xbf16> to vector<9x32xbf16>
    %c4 = arith.constant 4 : index
    %c0_53 = arith.constant 0 : index
    %c0_54 = arith.constant 0 : index
    %39 = vector.load %arg6[%c4, %c0_53, %c0_54] : memref<10x10x32xbf16, #tpu.memory_space<vmem>>, vector<1x9x32xbf16>
    %40 = vector.shape_cast %39 : vector<1x9x32xbf16> to vector<9x32xbf16>
    %c4_55 = arith.constant 4 : index
    %c1_56 = arith.constant 1 : index
    %c0_57 = arith.constant 0 : index
    %41 = vector.load %arg6[%c4_55, %c1_56, %c0_57] : memref<10x10x32xbf16, #tpu.memory_space<vmem>>, vector<1x9x32xbf16>
    %42 = vector.shape_cast %41 : vector<1x9x32xbf16> to vector<9x32xbf16>
    %43 = tpu.concatenate %36, %38, %40, %42 in 1 : vector<9x32xbf16>, vector<9x32xbf16>, vector<9x32xbf16>, vector<9x32xbf16> -> vector<9x128xbf16>
    %c27 = arith.constant 27 : index
    %c0_58 = arith.constant 0 : index
    %44 = vector.load %arg7[%c27, %c0_58] : memref<81x128xbf16, #tpu.memory_space<vmem>>, vector<9x128xbf16>
    tpu.vector_store %arg7[%c27, %c0_58], %43 {strides = array<i32>} : memref<81x128xbf16, #tpu.memory_space<vmem>>, vector<9x128xbf16>,
    %c4_59 = arith.constant 4 : index
    %c0_60 = arith.constant 0 : index
    %c0_61 = arith.constant 0 : index
    %45 = vector.load %arg6[%c4_59, %c0_60, %c0_61] : memref<10x10x32xbf16, #tpu.memory_space<vmem>>, vector<1x9x32xbf16>
    %46 = vector.shape_cast %45 : vector<1x9x32xbf16> to vector<9x32xbf16>
    %c4_62 = arith.constant 4 : index
    %c1_63 = arith.constant 1 : index
    %c0_64 = arith.constant 0 : index
    %47 = vector.load %arg6[%c4_62, %c1_63, %c0_64] : memref<10x10x32xbf16, #tpu.memory_space<vmem>>, vector<1x9x32xbf16>
    %48 = vector.shape_cast %47 : vector<1x9x32xbf16> to vector<9x32xbf16>
    %c5 = arith.constant 5 : index
    %c0_65 = arith.constant 0 : index
    %c0_66 = arith.constant 0 : index
    %49 = vector.load %arg6[%c5, %c0_65, %c0_66] : memref<10x10x32xbf16, #tpu.memory_space<vmem>>, vector<1x9x32xbf16>
    %50 = vector.shape_cast %49 : vector<1x9x32xbf16> to vector<9x32xbf16>
    %c5_67 = arith.constant 5 : index
    %c1_68 = arith.constant 1 : index
    %c0_69 = arith.constant 0 : index
    %51 = vector.load %arg6[%c5_67, %c1_68, %c0_69] : memref<10x10x32xbf16, #tpu.memory_space<vmem>>, vector<1x9x32xbf16>
    %52 = vector.shape_cast %51 : vector<1x9x32xbf16> to vector<9x32xbf16>
    %53 = tpu.concatenate %46, %48, %50, %52 in 1 : vector<9x32xbf16>, vector<9x32xbf16>, vector<9x32xbf16>, vector<9x32xbf16> -> vector<9x128xbf16>
    %c36 = arith.constant 36 : index
    %c0_70 = arith.constant 0 : index
    %54 = vector.load %arg7[%c36, %c0_70] : memref<81x128xbf16, #tpu.memory_space<vmem>>, vector<9x128xbf16>
    tpu.vector_store %arg7[%c36, %c0_70], %53 {strides = array<i32>} : memref<81x128xbf16, #tpu.memory_space<vmem>>, vector<9x128xbf16>,
    %c5_71 = arith.constant 5 : index
    %c0_72 = arith.constant 0 : index
    %c0_73 = arith.constant 0 : index
    %55 = vector.load %arg6[%c5_71, %c0_72, %c0_73] : memref<10x10x32xbf16, #tpu.memory_space<vmem>>, vector<1x9x32xbf16>
    %56 = vector.shape_cast %55 : vector<1x9x32xbf16> to vector<9x32xbf16>
    %c5_74 = arith.constant 5 : index
    %c1_75 = arith.constant 1 : index
    %c0_76 = arith.constant 0 : index
    %57 = vector.load %arg6[%c5_74, %c1_75, %c0_76] : memref<10x10x32xbf16, #tpu.memory_space<vmem>>, vector<1x9x32xbf16>
    %58 = vector.shape_cast %57 : vector<1x9x32xbf16> to vector<9x32xbf16>
    %c6 = arith.constant 6 : index
    %c0_77 = arith.constant 0 : index
    %c0_78 = arith.constant 0 : index
    %59 = vector.load %arg6[%c6, %c0_77, %c0_78] : memref<10x10x32xbf16, #tpu.memory_space<vmem>>, vector<1x9x32xbf16>
    %60 = vector.shape_cast %59 : vector<1x9x32xbf16> to vector<9x32xbf16>
    %c6_79 = arith.constant 6 : index
    %c1_80 = arith.constant 1 : index
    %c0_81 = arith.constant 0 : index
    %61 = vector.load %arg6[%c6_79, %c1_80, %c0_81] : memref<10x10x32xbf16, #tpu.memory_space<vmem>>, vector<1x9x32xbf16>
    %62 = vector.shape_cast %61 : vector<1x9x32xbf16> to vector<9x32xbf16>
    %63 = tpu.concatenate %56, %58, %60, %62 in 1 : vector<9x32xbf16>, vector<9x32xbf16>, vector<9x32xbf16>, vector<9x32xbf16> -> vector<9x128xbf16>
    %c45 = arith.constant 45 : index
    %c0_82 = arith.constant 0 : index
    %64 = vector.load %arg7[%c45, %c0_82] : memref<81x128xbf16, #tpu.memory_space<vmem>>, vector<9x128xbf16>
    tpu.vector_store %arg7[%c45, %c0_82], %63 {strides = array<i32>} : memref<81x128xbf16, #tpu.memory_space<vmem>>, vector<9x128xbf16>,
    %c6_83 = arith.constant 6 : index
    %c0_84 = arith.constant 0 : index
    %c0_85 = arith.constant 0 : index
    %65 = vector.load %arg6[%c6_83, %c0_84, %c0_85] : memref<10x10x32xbf16, #tpu.memory_space<vmem>>, vector<1x9x32xbf16>
    %66 = vector.shape_cast %65 : vector<1x9x32xbf16> to vector<9x32xbf16>
    %c6_86 = arith.constant 6 : index
    %c1_87 = arith.constant 1 : index
    %c0_88 = arith.constant 0 : index
    %67 = vector.load %arg6[%c6_86, %c1_87, %c0_88] : memref<10x10x32xbf16, #tpu.memory_space<vmem>>, vector<1x9x32xbf16>
    %68 = vector.shape_cast %67 : vector<1x9x32xbf16> to vector<9x32xbf16>
    %c7 = arith.constant 7 : index
    %c0_89 = arith.constant 0 : index
    %c0_90 = arith.constant 0 : index
    %69 = vector.load %arg6[%c7, %c0_89, %c0_90] : memref<10x10x32xbf16, #tpu.memory_space<vmem>>, vector<1x9x32xbf16>
    %70 = vector.shape_cast %69 : vector<1x9x32xbf16> to vector<9x32xbf16>
    %c7_91 = arith.constant 7 : index
    %c1_92 = arith.constant 1 : index
    %c0_93 = arith.constant 0 : index
    %71 = vector.load %arg6[%c7_91, %c1_92, %c0_93] : memref<10x10x32xbf16, #tpu.memory_space<vmem>>, vector<1x9x32xbf16>
    %72 = vector.shape_cast %71 : vector<1x9x32xbf16> to vector<9x32xbf16>
    %73 = tpu.concatenate %66, %68, %70, %72 in 1 : vector<9x32xbf16>, vector<9x32xbf16>, vector<9x32xbf16>, vector<9x32xbf16> -> vector<9x128xbf16>
    %c54 = arith.constant 54 : index
    %c0_94 = arith.constant 0 : index
    %74 = vector.load %arg7[%c54, %c0_94] : memref<81x128xbf16, #tpu.memory_space<vmem>>, vector<9x128xbf16>
    tpu.vector_store %arg7[%c54, %c0_94], %73 {strides = array<i32>} : memref<81x128xbf16, #tpu.memory_space<vmem>>, vector<9x128xbf16>,
    %c7_95 = arith.constant 7 : index
    %c0_96 = arith.constant 0 : index
    %c0_97 = arith.constant 0 : index
    %75 = vector.load %arg6[%c7_95, %c0_96, %c0_97] : memref<10x10x32xbf16, #tpu.memory_space<vmem>>, vector<1x9x32xbf16>
    %76 = vector.shape_cast %75 : vector<1x9x32xbf16> to vector<9x32xbf16>
    %c7_98 = arith.constant 7 : index
    %c1_99 = arith.constant 1 : index
    %c0_100 = arith.constant 0 : index
    %77 = vector.load %arg6[%c7_98, %c1_99, %c0_100] : memref<10x10x32xbf16, #tpu.memory_space<vmem>>, vector<1x9x32xbf16>
    %78 = vector.shape_cast %77 : vector<1x9x32xbf16> to vector<9x32xbf16>
    %c8 = arith.constant 8 : index
    %c0_101 = arith.constant 0 : index
    %c0_102 = arith.constant 0 : index
    %79 = vector.load %arg6[%c8, %c0_101, %c0_102] : memref<10x10x32xbf16, #tpu.memory_space<vmem>>, vector<1x9x32xbf16>
    %80 = vector.shape_cast %79 : vector<1x9x32xbf16> to vector<9x32xbf16>
    %c8_103 = arith.constant 8 : index
    %c1_104 = arith.constant 1 : index
    %c0_105 = arith.constant 0 : index
    %81 = vector.load %arg6[%c8_103, %c1_104, %c0_105] : memref<10x10x32xbf16, #tpu.memory_space<vmem>>, vector<1x9x32xbf16>
    %82 = vector.shape_cast %81 : vector<1x9x32xbf16> to vector<9x32xbf16>
    %83 = tpu.concatenate %76, %78, %80, %82 in 1 : vector<9x32xbf16>, vector<9x32xbf16>, vector<9x32xbf16>, vector<9x32xbf16> -> vector<9x128xbf16>
    %c63 = arith.constant 63 : index
    %c0_106 = arith.constant 0 : index
    %84 = vector.load %arg7[%c63, %c0_106] : memref<81x128xbf16, #tpu.memory_space<vmem>>, vector<9x128xbf16>
    tpu.vector_store %arg7[%c63, %c0_106], %83 {strides = array<i32>} : memref<81x128xbf16, #tpu.memory_space<vmem>>, vector<9x128xbf16>,
    %c8_107 = arith.constant 8 : index
    %c0_108 = arith.constant 0 : index
    %c0_109 = arith.constant 0 : index
    %85 = vector.load %arg6[%c8_107, %c0_108, %c0_109] : memref<10x10x32xbf16, #tpu.memory_space<vmem>>, vector<1x9x32xbf16>
    %86 = vector.shape_cast %85 : vector<1x9x32xbf16> to vector<9x32xbf16>
    %c8_110 = arith.constant 8 : index
    %c1_111 = arith.constant 1 : index
    %c0_112 = arith.constant 0 : index
    %87 = vector.load %arg6[%c8_110, %c1_111, %c0_112] : memref<10x10x32xbf16, #tpu.memory_space<vmem>>, vector<1x9x32xbf16>
    %88 = vector.shape_cast %87 : vector<1x9x32xbf16> to vector<9x32xbf16>
    %c9_113 = arith.constant 9 : index
    %c0_114 = arith.constant 0 : index
    %c0_115 = arith.constant 0 : index
    %89 = vector.load %arg6[%c9_113, %c0_114, %c0_115] : memref<10x10x32xbf16, #tpu.memory_space<vmem>>, vector<1x9x32xbf16>
    %90 = vector.shape_cast %89 : vector<1x9x32xbf16> to vector<9x32xbf16>
    %c9_116 = arith.constant 9 : index
    %c1_117 = arith.constant 1 : index
    %c0_118 = arith.constant 0 : index
    %91 = vector.load %arg6[%c9_116, %c1_117, %c0_118] : memref<10x10x32xbf16, #tpu.memory_space<vmem>>, vector<1x9x32xbf16>
    %92 = vector.shape_cast %91 : vector<1x9x32xbf16> to vector<9x32xbf16>
    %93 = tpu.concatenate %86, %88, %90, %92 in 1 : vector<9x32xbf16>, vector<9x32xbf16>, vector<9x32xbf16>, vector<9x32xbf16> -> vector<9x128xbf16>
    %c72 = arith.constant 72 : index
    %c0_119 = arith.constant 0 : index
    %94 = vector.load %arg7[%c72, %c0_119] : memref<81x128xbf16, #tpu.memory_space<vmem>>, vector<9x128xbf16>
    tpu.vector_store %arg7[%c72, %c0_119], %93 {strides = array<i32>} : memref<81x128xbf16, #tpu.memory_space<vmem>>, vector<9x128xbf16>,
    %c0_120 = arith.constant 0 : index
    %c0_121 = arith.constant 0 : index
    %95 = vector.load %arg7[%c0_120, %c0_121] : memref<81x128xbf16, #tpu.memory_space<vmem>>, vector<81x128xbf16>
    %c0_122 = arith.constant 0 : index
    %c0_123 = arith.constant 0 : index
    %c0_124 = arith.constant 0 : index
    %96 = vector.load %arg3[%c0_122, %c0_123, %c0_124] : memref<1x128x128xbf16, #tpu.memory_space<vmem>>, vector<1x128x128xbf16>
    %97 = vector.shape_cast %96 : vector<1x128x128xbf16> to vector<128x128xbf16>
    %cst_125 = arith.constant dense<0.000000e+00> : vector<81x128xf32>
    %98 = tpu.matmul %95, %97, %cst_125 {dimension_numbers = #tpu.dot_dimension_numbers<[1], [0], [0], [1], [0, 0, 1, 1], [], []>} : vector<81x128xbf16>, vector<128x128xbf16>, vector<81x128xf32> -> vector<81x128xf32>
    %c0_126 = arith.constant 0 : index
    %c0_127 = arith.constant 0 : index
    %c0_128 = arith.constant 0 : index
    %99 = vector.load %arg4[%c0_126, %c0_127, %c0_128] : memref<1x1x128xf32, #tpu.memory_space<vmem>>, vector<1x1x128xf32>
    %100 = vector.shape_cast %99 : vector<1x1x128xf32> to vector<1x128xf32>
    %101 = vector.broadcast %100 : vector<1x128xf32> to vector<81x128xf32>
    %102 = arith.addf %98, %101 : vector<81x128xf32>
    %cst_129 = arith.constant 0.000000e+00 : f32
    %103 = vector.broadcast %cst_129 : f32 to vector<81x128xf32>
    %104 = arith.maximumf %102, %103 : vector<81x128xf32>
    %105 = arith.truncf %104 : vector<81x128xf32> to vector<81x128xbf16>
    %c0_130 = arith.constant 0 : index
    %c0_131 = arith.constant 0 : index
    %c0_132 = arith.constant 0 : index
    %c0_133 = arith.constant 0 : index
    %106 = vector.load %arg5[%c0_130, %c0_131, %c0_132, %c0_133] : memref<1x1x81x128xbf16, #tpu.memory_space<vmem>>, vector<1x1x81x128xbf16>
    %107 = vector.shape_cast %106 : vector<1x1x81x128xbf16> to vector<81x128xbf16>
    %108 = vector.shape_cast %105 : vector<81x128xbf16> to vector<1x1x81x128xbf16>
    tpu.vector_store %arg5[%c0_130, %c0_131, %c0_132, %c0_133], %108 {strides = array<i32>} : memref<1x1x81x128xbf16, #tpu.memory_space<vmem>>, vector<1x1x81x128xbf16>,
    return
  }
  func.func @transform_0(%arg0: i32, %arg1: i32) -> (i32, i32, i32, i32, i32) {
    %c0_i32 = arith.constant 0 : i32
    %c0_i32_0 = arith.constant 0 : i32
    %c0_i32_1 = arith.constant 0 : i32
    %c0_i32_2 = arith.constant 0 : i32
    return %arg0, %arg1, %c0_i32, %c0_i32_0, %c0_i32_1 : i32, i32, i32, i32, i32
  }
  func.func @transform_1(%arg0: i32, %arg1: i32) -> (i32, i32, i32) {
    %c0_i32 = arith.constant 0 : i32
    %c0_i32_0 = arith.constant 0 : i32
    %c0_i32_1 = arith.constant 0 : i32
    return %arg0, %c0_i32, %c0_i32_0 : i32, i32, i32
  }
  func.func @transform_2(%arg0: i32, %arg1: i32) -> (i32, i32, i32) {
    %c0_i32 = arith.constant 0 : i32
    %c0_i32_0 = arith.constant 0 : i32
    %c0_i32_1 = arith.constant 0 : i32
    return %arg0, %c0_i32, %c0_i32_0 : i32, i32, i32
  }
  func.func @transform_3(%arg0: i32, %arg1: i32) -> (i32, i32, i32, i32) {
    %c0_i32 = arith.constant 0 : i32
    %c0_i32_0 = arith.constant 0 : i32
    %c0_i32_1 = arith.constant 0 : i32
    return %arg0, %arg1, %c0_i32, %c0_i32_0 : i32, i32, i32, i32
  }
}

module attributes {stable_mosaic.version = 11 : i64} {
  func.func @heads_kernel(%arg0: memref<2x4x256xbf16, #tpu.memory_space<vmem>>, %arg1: memref<256x64xf32, #tpu.memory_space<vmem>>, %arg2: memref<1x64xf32, #tpu.memory_space<vmem>>, %arg3: memref<64x10xf32, #tpu.memory_space<vmem>>, %arg4: memref<1x10xf32, #tpu.memory_space<vmem>>, %arg5: memref<2x1xf32, #tpu.memory_space<vmem>>, %arg6: memref<2x2xf32, #tpu.memory_space<vmem>>) attributes {dimension_semantics = [], scalar_prefetch = 0 : i64, scratch_operands = 0 : i64, tpu.core_type = #tpu.core_type<tc>} {
    %c0 = arith.constant 0 : index
    %c0_0 = arith.constant 0 : index
    %c0_1 = arith.constant 0 : index
    %0 = vector.load %arg0[%c0, %c0_0, %c0_1] : memref<2x4x256xbf16, #tpu.memory_space<vmem>>, vector<2x4x256xbf16>
    %1 = arith.extf %0 : vector<2x4x256xbf16> to vector<2x4x256xf32>
    %cst = arith.constant dense<0.000000e+00> : vector<2x256xf32>
    %2 = vector.multi_reduction <add>, %1, %cst [1] : vector<2x4x256xf32> to vector<2x256xf32>
    %cst_2 = arith.constant 4.000000e+00 : f32
    %3 = vector.broadcast %cst_2 : f32 to vector<2x256xf32>
    %4 = arith.divf %2, %3 : vector<2x256xf32>
    %c0_3 = arith.constant 0 : index
    %c0_4 = arith.constant 0 : index
    %5 = vector.load %arg1[%c0_3, %c0_4] : memref<256x64xf32, #tpu.memory_space<vmem>>, vector<256x64xf32>
    %cst_5 = arith.constant dense<0.000000e+00> : vector<2x64xf32>
    %6 = tpu.matmul %4, %5, %cst_5 {dimension_numbers = #tpu.dot_dimension_numbers<[1], [0], [0], [1], [0, 0, 1, 1], [], []>} : vector<2x256xf32>, vector<256x64xf32>, vector<2x64xf32> -> vector<2x64xf32>
    %c0_6 = arith.constant 0 : index
    %c0_7 = arith.constant 0 : index
    %7 = vector.load %arg2[%c0_6, %c0_7] : memref<1x64xf32, #tpu.memory_space<vmem>>, vector<1x64xf32>
    %8 = vector.broadcast %7 : vector<1x64xf32> to vector<2x64xf32>
    %9 = arith.addf %6, %8 : vector<2x64xf32>
    %cst_8 = arith.constant 0.000000e+00 : f32
    %10 = vector.broadcast %cst_8 : f32 to vector<2x64xf32>
    %11 = arith.maximumf %9, %10 : vector<2x64xf32>
    %c0_9 = arith.constant 0 : index
    %c0_10 = arith.constant 0 : index
    %12 = vector.load %arg3[%c0_9, %c0_10] : memref<64x10xf32, #tpu.memory_space<vmem>>, vector<64x10xf32>
    %cst_11 = arith.constant dense<0.000000e+00> : vector<2x10xf32>
    %13 = tpu.matmul %11, %12, %cst_11 {dimension_numbers = #tpu.dot_dimension_numbers<[1], [0], [0], [1], [0, 0, 1, 1], [], []>} : vector<2x64xf32>, vector<64x10xf32>, vector<2x10xf32> -> vector<2x10xf32>
    %c0_12 = arith.constant 0 : index
    %c0_13 = arith.constant 0 : index
    %14 = vector.load %arg4[%c0_12, %c0_13] : memref<1x10xf32, #tpu.memory_space<vmem>>, vector<1x10xf32>
    %15 = vector.broadcast %14 : vector<1x10xf32> to vector<2x10xf32>
    %16 = arith.addf %13, %15 : vector<2x10xf32>
    %17 = vector.extract_strided_slice %16 {offsets = [0, 0], sizes = [2, 8], strides = [1, 1]} : vector<2x10xf32> to vector<2x8xf32>
    %cst_14 = arith.constant dense<0xFF800000> : vector<2xf32>
    %18 = vector.multi_reduction <maximumf>, %17, %cst_14 [1] : vector<2x8xf32> to vector<2xf32>
    %19 = vector.shape_cast %18 : vector<2xf32> to vector<2x1xf32>
    %20 = vector.broadcast %19 : vector<2x1xf32> to vector<2x8xf32>
    %21 = arith.subf %17, %20 : vector<2x8xf32>
    %22 = math.exp %21 : vector<2x8xf32>
    %cst_15 = arith.constant dense<0.000000e+00> : vector<2xf32>
    %23 = vector.multi_reduction <add>, %22, %cst_15 [1] : vector<2x8xf32> to vector<2xf32>
    %24 = vector.shape_cast %23 : vector<2xf32> to vector<2x1xf32>
    %25 = vector.broadcast %24 : vector<2x1xf32> to vector<2x8xf32>
    %26 = arith.divf %22, %25 : vector<2x8xf32>
    %27 = tpu.iota {dimensions = array<i32: 1>} : vector<2x8xi32>
    %28 = arith.sitofp %27 : vector<2x8xi32> to vector<2x8xf32>
    %29 = arith.mulf %26, %28 : vector<2x8xf32>
    %cst_16 = arith.constant dense<0.000000e+00> : vector<2xf32>
    %30 = vector.multi_reduction <add>, %29, %cst_16 [1] : vector<2x8xf32> to vector<2xf32>
    %31 = vector.shape_cast %30 : vector<2xf32> to vector<2x1xf32>
    %c0_17 = arith.constant 0 : index
    %c0_18 = arith.constant 0 : index
    %32 = vector.load %arg5[%c0_17, %c0_18] : memref<2x1xf32, #tpu.memory_space<vmem>>, vector<2x1xf32>
    tpu.vector_store %arg5[%c0_17, %c0_18], %31 {strides = array<i32>} : memref<2x1xf32, #tpu.memory_space<vmem>>, vector<2x1xf32>,
    %33 = vector.extract_strided_slice %16 {offsets = [0, 8], sizes = [2, 2], strides = [1, 1]} : vector<2x10xf32> to vector<2x2xf32>
    %34 = arith.negf %33 : vector<2x2xf32>
    %35 = math.exp %34 : vector<2x2xf32>
    %cst_19 = arith.constant 1.000000e+00 : f32
    %36 = vector.broadcast %cst_19 : f32 to vector<2x2xf32>
    %37 = arith.addf %36, %35 : vector<2x2xf32>
    %38 = arith.divf %36, %37 : vector<2x2xf32>
    %c0_20 = arith.constant 0 : index
    %c0_21 = arith.constant 0 : index
    %39 = vector.load %arg6[%c0_20, %c0_21] : memref<2x2xf32, #tpu.memory_space<vmem>>, vector<2x2xf32>
    tpu.vector_store %arg6[%c0_20, %c0_21], %38 {strides = array<i32>} : memref<2x2xf32, #tpu.memory_space<vmem>>, vector<2x2xf32>,
    return
  }
}

module attributes {stable_mosaic.version = 11 : i64} {
  func.func @conv1x1_kernel(%arg0: i32, %arg1: i32, %arg2: i32, %arg3: memref<1x1x8x16x32xbf16, #tpu.memory_space<vmem>>, %arg4: memref<1x32x24xbf16, #tpu.memory_space<vmem>>, %arg5: memref<1x1x24xf32, #tpu.memory_space<vmem>>, %arg6: memref<1x1x24x128xf32, #tpu.memory_space<vmem>>) attributes {dimension_semantics = [#tpu.dimension_semantics<parallel>, #tpu.dimension_semantics<parallel>, #tpu.dimension_semantics<parallel>], iteration_bounds = array<i64: 2, 2, 2>, scalar_prefetch = 0 : i64, scratch_operands = 0 : i64, tpu.core_type = #tpu.core_type<tc>, window_params = [{transform_indices = @transform_0, window_bounds = array<i64: 1, 1, 8, 16, 32>}, {transform_indices = @transform_1, window_bounds = array<i64: 1, 32, 24>}, {transform_indices = @transform_2, window_bounds = array<i64: 1, 1, 24>}, {transform_indices = @transform_3, window_bounds = array<i64: 1, 1, 24, 128>}]} {
    %c0 = arith.constant 0 : index
    %c0_0 = arith.constant 0 : index
    %c0_1 = arith.constant 0 : index
    %c0_2 = arith.constant 0 : index
    %c0_3 = arith.constant 0 : index
    %0 = vector.load %arg3[%c0, %c0_0, %c0_1, %c0_2, %c0_3] : memref<1x1x8x16x32xbf16, #tpu.memory_space<vmem>>, vector<1x1x8x16x32xbf16>
    %1 = vector.shape_cast %0 : vector<1x1x8x16x32xbf16> to vector<8x16x32xbf16>
    %2 = vector.shape_cast %1 : vector<8x16x32xbf16> to vector<128x32xbf16>
    %c0_4 = arith.constant 0 : index
    %c0_5 = arith.constant 0 : index
    %c0_6 = arith.constant 0 : index
    %3 = vector.load %arg4[%c0_4, %c0_5, %c0_6] : memref<1x32x24xbf16, #tpu.memory_space<vmem>>, vector<1x32x24xbf16>
    %4 = vector.shape_cast %3 : vector<1x32x24xbf16> to vector<32x24xbf16>
    %cst = arith.constant dense<0.000000e+00> : vector<128x24xf32>
    %5 = tpu.matmul %2, %4, %cst {dimension_numbers = #tpu.dot_dimension_numbers<[1], [0], [0], [1], [0, 0, 1, 1], [], []>} : vector<128x32xbf16>, vector<32x24xbf16>, vector<128x24xf32> -> vector<128x24xf32>
    %c0_7 = arith.constant 0 : index
    %c0_8 = arith.constant 0 : index
    %c0_9 = arith.constant 0 : index
    %6 = vector.load %arg5[%c0_7, %c0_8, %c0_9] : memref<1x1x24xf32, #tpu.memory_space<vmem>>, vector<1x1x24xf32>
    %7 = vector.shape_cast %6 : vector<1x1x24xf32> to vector<1x24xf32>
    %8 = vector.broadcast %7 : vector<1x24xf32> to vector<128x24xf32>
    %9 = arith.addf %5, %8 : vector<128x24xf32>
    %10 = tpu.transpose %9, [1, 0] : vector<128x24xf32> -> vector<24x128xf32>
    %c0_10 = arith.constant 0 : index
    %c0_11 = arith.constant 0 : index
    %c0_12 = arith.constant 0 : index
    %c0_13 = arith.constant 0 : index
    %11 = vector.load %arg6[%c0_10, %c0_11, %c0_12, %c0_13] : memref<1x1x24x128xf32, #tpu.memory_space<vmem>>, vector<1x1x24x128xf32>
    %12 = vector.shape_cast %11 : vector<1x1x24x128xf32> to vector<24x128xf32>
    %13 = vector.shape_cast %10 : vector<24x128xf32> to vector<1x1x24x128xf32>
    tpu.vector_store %arg6[%c0_10, %c0_11, %c0_12, %c0_13], %13 {strides = array<i32>} : memref<1x1x24x128xf32, #tpu.memory_space<vmem>>, vector<1x1x24x128xf32>,
    return
  }
  func.func @transform_0(%arg0: i32, %arg1: i32, %arg2: i32) -> (i32, i32, i32, i32, i32) {
    %c0_i32 = arith.constant 0 : i32
    %c0_i32_0 = arith.constant 0 : i32
    %c0_i32_1 = arith.constant 0 : i32
    return %arg0, %arg1, %arg2, %c0_i32, %c0_i32_0 : i32, i32, i32, i32, i32
  }
  func.func @transform_1(%arg0: i32, %arg1: i32, %arg2: i32) -> (i32, i32, i32) {
    %c0_i32 = arith.constant 0 : i32
    %c0_i32_0 = arith.constant 0 : i32
    %c0_i32_1 = arith.constant 0 : i32
    return %arg0, %c0_i32, %c0_i32_0 : i32, i32, i32
  }
  func.func @transform_2(%arg0: i32, %arg1: i32, %arg2: i32) -> (i32, i32, i32) {
    %c0_i32 = arith.constant 0 : i32
    %c0_i32_0 = arith.constant 0 : i32
    %c0_i32_1 = arith.constant 0 : i32
    return %arg0, %c0_i32, %c0_i32_0 : i32, i32, i32
  }
  func.func @transform_3(%arg0: i32, %arg1: i32, %arg2: i32) -> (i32, i32, i32, i32) {
    %c0_i32 = arith.constant 0 : i32
    %c0_i32_0 = arith.constant 0 : i32
    return %arg1, %arg0, %c0_i32, %arg2 : i32, i32, i32, i32
  }
}

</mosaic_0001>

<llo_original>
// kernel: squeeze.13
$region0: #{squeeze.13}
  %s0 = inlined_call_operand.vmem [shape: bf16[1,2,9,256], index: 0, kind: input, shape index: {}]
  %s1 = inlined_call_operand.vmem [shape: bf16[2,3,3,2,2,2,32], index: 1, kind: output, shape index: {}]
  $region1: #{squeeze.13} parent=0
    #allocation0 [shape = 'u8[294912]{0}', space=vmem, size = 0x48000, scoped, tag = 'scoped mem for output reshape']
    #allocation1 [shape = 'u8[73728]{0}', space=vmem, size = 0x12000, scoped, tag = 'scoped mem for input reshape']
    %s3 = smul.u32 1, 2
    %s4 = sshll.u32 1, %s3
    %s5 = ssub.s32 %s4, 1
    %s6 = smul.addr 1, 17
    %s7 = scalar_lea.vmem %s0, %s6
    %s8 = sshrl.u32 %s5, 1
    %s9 = sor.u32 %s5, %s8
    %s10 = sand.u32 %s9, 85
    %s11 = sshrl.u32 %s10, 1
    %s12 = sor.u32 %s10, %s11
    %s13 = sand.u32 51, %s12
    %s14 = sshrl.u32 %s13, 2
    %s15 = sor.u32 %s13, %s14
    %s16 = sand.u32 15, %s15
    %v17 = vld [vmem:[%s7] sm:%s16]
    %v18 = vunpack.c.l.bf16 %v17
    %v19 = vunpack.c.h.bf16 %v17
    %s20 = scalar_lea.vmem [#allocation1], 136
    %21 = vst [vmem:[%s20] sm:%s5] %v18
    %s22 = smul.addr 1, 16
    %s23 = scalar_lea.vmem %s0, %s22
    %s24 = sshrl.u32 %s5, 1
    %s25 = sor.u32 %s5, %s24
    %s26 = sand.u32 %s25, 85
    %s27 = sshrl.u32 %s26, 1
    %s28 = sor.u32 %s26, %s27
    %s29 = sand.u32 51, %s28
    %s30 = sshrl.u32 %s29, 2
    %s31 = sor.u32 %s29, %s30
    %s32 = sand.u32 15, %s31
    %v33 = vld [vmem:[%s23] sm:%s32]
    %v34 = vunpack.c.l.bf16 %v33
    %v35 = vunpack.c.h.bf16 %v33
    %s36 = scalar_lea.vmem [#allocation1], 128
    %37 = vst [vmem:[%s36] sm:%s5] %v34
    %s38 = smul.addr 1, 15
    %s39 = scalar_lea.vmem %s0, %s38
    %s40 = sshrl.u32 %s5, 1
    %s41 = sor.u32 %s5, %s40
    %s42 = sand.u32 %s41, 85
    %s43 = sshrl.u32 %s42, 1
    %s44 = sor.u32 %s42, %s43
    %s45 = sand.u32 51, %s44
    %s46 = sshrl.u32 %s45, 2
    %s47 = sor.u32 %s45, %s46
    %s48 = sand.u32 15, %s47
    %v49 = vld [vmem:[%s39] sm:%s48]
    %v50 = vunpack.c.l.bf16 %v49
    %v51 = vunpack.c.h.bf16 %v49
    %s52 = scalar_lea.vmem [#allocation1], 120
    %53 = vst [vmem:[%s52] sm:%s5] %v50
    %s54 = smul.addr 1, 14
    %s55 = scalar_lea.vmem %s0, %s54
    %s56 = sshrl.u32 %s5, 1
    %s57 = sor.u32 %s5, %s56
    %s58 = sand.u32 %s57, 85
    %s59 = sshrl.u32 %s58, 1
    %s60 = sor.u32 %s58, %s59
    %s61 = sand.u32 51, %s60
    %s62 = sshrl.u32 %s61, 2
    %s63 = sor.u32 %s61, %s62
    %s64 = sand.u32 15, %s63
    %v65 = vld [vmem:[%s55] sm:%s64]
    %v66 = vunpack.c.l.bf16 %v65
    %v67 = vunpack.c.h.bf16 %v65
    %s68 = scalar_lea.vmem [#allocation1], 112
    %69 = vst [vmem:[%s68] sm:%s5] %v66
    %s70 = smul.addr 1, 13
    %s71 = scalar_lea.vmem %s0, %s70
    %s72 = sshrl.u32 %s5, 1
    %s73 = sor.u32 %s5, %s72
    %s74 = sand.u32 %s73, 85
    %s75 = sshrl.u32 %s74, 1
    %s76 = sor.u32 %s74, %s75
    %s77 = sand.u32 51, %s76
    %s78 = sshrl.u32 %s77, 2
    %s79 = sor.u32 %s77, %s78
    %s80 = sand.u32 15, %s79
    %v81 = vld [vmem:[%s71] sm:%s80]
    %v82 = vunpack.c.l.bf16 %v81
    %v83 = vunpack.c.h.bf16 %v81
    %s84 = scalar_lea.vmem [#allocation1], 104
    %85 = vst [vmem:[%s84] sm:%s5] %v82
    %s86 = smul.addr 1, 12
    %s87 = scalar_lea.vmem %s0, %s86
    %s88 = sshrl.u32 %s5, 1
    %s89 = sor.u32 %s5, %s88
    %s90 = sand.u32 %s89, 85
    %s91 = sshrl.u32 %s90, 1
    %s92 = sor.u32 %s90, %s91
    %s93 = sand.u32 51, %s92
    %s94 = sshrl.u32 %s93, 2
    %s95 = sor.u32 %s93, %s94
    %s96 = sand.u32 15, %s95
    %v97 = vld [vmem:[%s87] sm:%s96]
    %v98 = vunpack.c.l.bf16 %v97
    %v99 = vunpack.c.h.bf16 %v97
    %s100 = scalar_lea.vmem [#allocation1], 96
    %101 = vst [vmem:[%s100] sm:%s5] %v98
    %s102 = smul.addr 1, 11
    %s103 = scalar_lea.vmem %s0, %s102
    %s104 = sshrl.u32 %s5, 1
    %s105 = sor.u32 %s5, %s104
    %s106 = sand.u32 %s105, 85
    %s107 = sshrl.u32 %s106, 1
    %s108 = sor.u32 %s106, %s107
    %s109 = sand.u32 51, %s108
    %s110 = sshrl.u32 %s109, 2
    %s111 = sor.u32 %s109, %s110
    %s112 = sand.u32 15, %s111
    %v113 = vld [vmem:[%s103] sm:%s112]
    %v114 = vunpack.c.l.bf16 %v113
    %v115 = vunpack.c.h.bf16 %v113
    %s116 = scalar_lea.vmem [#allocation1], 88
    %117 = vst [vmem:[%s116] sm:%s5] %v114
    %s118 = smul.addr 1, 10
    %s119 = scalar_lea.vmem %s0, %s118
    %s120 = sshrl.u32 %s5, 1
    %s121 = sor.u32 %s5, %s120
    %s122 = sand.u32 %s121, 85
    %s123 = sshrl.u32 %s122, 1
    %s124 = sor.u32 %s122, %s123
    %s125 = sand.u32 51, %s124
    %s126 = sshrl.u32 %s125, 2
    %s127 = sor.u32 %s125, %s126
    %s128 = sand.u32 15, %s127
    %v129 = vld [vmem:[%s119] sm:%s128]
    %v130 = vunpack.c.l.bf16 %v129
    %v131 = vunpack.c.h.bf16 %v129
    %s132 = scalar_lea.vmem [#allocation1], 80
    %133 = vst [vmem:[%s132] sm:%s5] %v130
    %s134 = smul.addr 1, 9
    %s135 = scalar_lea.vmem %s0, %s134
    %s136 = sshrl.u32 %s5, 1
    %s137 = sor.u32 %s5, %s136
    %s138 = sand.u32 %s137, 85
    %s139 = sshrl.u32 %s138, 1
    %s140 = sor.u32 %s138, %s139
    %s141 = sand.u32 51, %s140
    %s142 = sshrl.u32 %s141, 2
    %s143 = sor.u32 %s141, %s142
    %s144 = sand.u32 15, %s143
    %v145 = vld [vmem:[%s135] sm:%s144]
    %v146 = vunpack.c.l.bf16 %v145
    %v147 = vunpack.c.h.bf16 %v145
    %s148 = scalar_lea.vmem [#allocation1], 72
    %149 = vst [vmem:[%s148] sm:%s5] %v146
    %s150 = smul.addr 1, 8
    %s151 = scalar_lea.vmem %s0, %s150
    %s152 = sshrl.u32 %s5, 1
    %s153 = sor.u32 %s5, %s152
    %s154 = sand.u32 %s153, 85
    %s155 = sshrl.u32 %s154, 1
    %s156 = sor.u32 %s154, %s155
    %s157 = sand.u32 51, %s156
    %s158 = sshrl.u32 %s157, 2
    %s159 = sor.u32 %s157, %s158
    %s160 = sand.u32 15, %s159
    %v161 = vld [vmem:[%s151] sm:%s160]
    %v162 = vunpack.c.l.bf16 %v161
    %v163 = vunpack.c.h.bf16 %v161
    %s164 = scalar_lea.vmem [#allocation1], 64
    %165 = vst [vmem:[%s164] sm:%s5] %v162
    %s166 = smul.addr 1, 7
    %s167 = scalar_lea.vmem %s0, %s166
    %s168 = sshrl.u32 %s5, 1
    %s169 = sor.u32 %s5, %s168
    %s170 = sand.u32 %s169, 85
    %s171 = sshrl.u32 %s170, 1
    %s172 = sor.u32 %s170, %s171
    %s173 = sand.u32 51, %s172
    %s174 = sshrl.u32 %s173, 2
    %s175 = sor.u32 %s173, %s174
    %s176 = sand.u32 15, %s175
    %v177 = vld [vmem:[%s167] sm:%s176]
    %v178 = vunpack.c.l.bf16 %v177
    %v179 = vunpack.c.h.bf16 %v177
    %s180 = scalar_lea.vmem [#allocation1], 56
    %181 = vst [vmem:[%s180] sm:%s5] %v178
    %s182 = smul.addr 1, 6
    %s183 = scalar_lea.vmem %s0, %s182
    %s184 = sshrl.u32 %s5, 1
    %s185 = sor.u32 %s5, %s184
    %s186 = sand.u32 %s185, 85
    %s187 = sshrl.u32 %s186, 1
    %s188 = sor.u32 %s186, %s187
    %s189 = sand.u32 51, %s188
    %s190 = sshrl.u32 %s189, 2
    %s191 = sor.u32 %s189, %s190
    %s192 = sand.u32 15, %s191
    %v193 = vld [vmem:[%s183] sm:%s192]
    %v194 = vunpack.c.l.bf16 %v193
    %v195 = vunpack.c.h.bf16 %v193
    %s196 = scalar_lea.vmem [#allocation1], 48
    %197 = vst [vmem:[%s196] sm:%s5] %v194
    %s198 = smul.addr 1, 5
    %s199 = scalar_lea.vmem %s0, %s198
    %s200 = sshrl.u32 %s5, 1
    %s201 = sor.u32 %s5, %s200
    %s202 = sand.u32 %s201, 85
    %s203 = sshrl.u32 %s202, 1
    %s204 = sor.u32 %s202, %s203
    %s205 = sand.u32 51, %s204
    %s206 = sshrl.u32 %s205, 2
    %s207 = sor.u32 %s205, %s206
    %s208 = sand.u32 15, %s207
    %v209 = vld [vmem:[%s199] sm:%s208]
    %v210 = vunpack.c.l.bf16 %v209
    %v211 = vunpack.c.h.bf16 %v209
    %s212 = scalar_lea.vmem [#allocation1], 40
    %213 = vst [vmem:[%s212] sm:%s5] %v210
    %s214 = smul.addr 1, 4
    %s215 = scalar_lea.vmem %s0, %s214
    %s216 = sshrl.u32 %s5, 1
    %s217 = sor.u32 %s5, %s216
    %s218 = sand.u32 %s217, 85
    %s219 = sshrl.u32 %s218, 1
    %s220 = sor.u32 %s218, %s219
    %s221 = sand.u32 51, %s220
    %s222 = sshrl.u32 %s221, 2
    %s223 = sor.u32 %s221, %s222
    %s224 = sand.u32 15, %s223
    %v225 = vld [vmem:[%s215] sm:%s224]
    %v226 = vunpack.c.l.bf16 %v225
    %v227 = vunpack.c.h.bf16 %v225
    %s228 = scalar_lea.vmem [#allocation1], 32
    %229 = vst [vmem:[%s228] sm:%s5] %v226
    %s230 = smul.addr 1, 3
    %s231 = scalar_lea.vmem %s0, %s230
    %s232 = sshrl.u32 %s5, 1
    %s233 = sor.u32 %s5, %s232
    %s234 = sand.u32 %s233, 85
    %s235 = sshrl.u32 %s234, 1
    %s236 = sor.u32 %s234, %s235
    %s237 = sand.u32 51, %s236
    %s238 = sshrl.u32 %s237, 2
    %s239 = sor.u32 %s237, %s238
    %s240 = sand.u32 15, %s239
    %v241 = vld [vmem:[%s231] sm:%s240]
    %v242 = vunpack.c.l.bf16 %v241
    %v243 = vunpack.c.h.bf16 %v241
    %s244 = scalar_lea.vmem [#allocation1], 24
    %245 = vst [vmem:[%s244] sm:%s5] %v242
    %s246 = smul.addr 1, 2
    %s247 = scalar_lea.vmem %s0, %s246
    %s248 = sshrl.u32 %s5, 1
    %s249 = sor.u32 %s5, %s248
    %s250 = sand.u32 %s249, 85
    %s251 = sshrl.u32 %s250, 1
    %s252 = sor.u32 %s250, %s251
    %s253 = sand.u32 51, %s252
    %s254 = sshrl.u32 %s253, 2
    %s255 = sor.u32 %s253, %s254
    %s256 = sand.u32 15, %s255
    %v257 = vld [vmem:[%s247] sm:%s256]
    %v258 = vunpack.c.l.bf16 %v257
    %v259 = vunpack.c.h.bf16 %v257
    %s260 = scalar_lea.vmem [#allocation1], 16
    %261 = vst [vmem:[%s260] sm:%s5] %v258
    %s262 = scalar_lea.vmem %s0, 1
    %s263 = sshrl.u32 %s5, 1
    %s264 = sor.u32 %s5, %s263
    %s265 = sand.u32 %s264, 85
    %s266 = sshrl.u32 %s265, 1
    %s267 = sor.u32 %s265, %s266
    %s268 = sand.u32 51, %s267
    %s269 = sshrl.u32 %s268, 2
    %s270 = sor.u32 %s268, %s269
    %s271 = sand.u32 15, %s270
    %v272 = vld [vmem:[%s262] sm:%s271]
    %v273 = vunpack.c.l.bf16 %v272
    %v274 = vunpack.c.h.bf16 %v272
    %s275 = scalar_lea.vmem [#allocation1], 8
    %276 = vst [vmem:[%s275] sm:%s5] %v273
    %s277 = sshrl.u32 %s5, 1
    %s278 = sor.u32 %s5, %s277
    %s279 = sand.u32 %s278, 85
    %s280 = sshrl.u32 %s279, 1
    %s281 = sor.u32 %s279, %s280
    %s282 = sand.u32 51, %s281
    %s283 = sshrl.u32 %s282, 2
    %s284 = sor.u32 %s282, %s283
    %s285 = sand.u32 15, %s284
    %v286 = vld [vmem:[%s0] sm:%s285]
    %v287 = vunpack.c.l.bf16 %v286
    %v288 = vunpack.c.h.bf16 %v286
    %289 = vst [vmem:[#allocation1] sm:%s5] %v287
    %v290 = vld [vmem:[#allocation1] sm:$0x3]
    %vm291 = vcmask 261120
    %292 = vst.msk [vmem:[#allocation0] sm:$0x1] %vm291, %v290
    %s293 = scalar_lea.vmem [#allocation0], 31
    %294 = vst.msk [vmem:[%s293] sm:$0x2] %vm291, %v290
    %s295 = scalar_lea.vmem [#allocation1], 8
    %v296 = vld [vmem:[%s295] sm:$0x3]
    %vm297 = vcmask 261120
    %s298 = scalar_lea.vmem [#allocation0], 16
    %299 = vst.msk [vmem:[%s298] sm:$0x1] %vm297, %v296
    %s300 = scalar_lea.vmem [#allocation0], 47
    %301 = vst.msk [vmem:[%s300] sm:$0x2] %vm297, %v296
    %s302 = scalar_lea.vmem [#allocation1], 16
    %v303 = vld [vmem:[%s302] sm:$0x3]
    %vm304 = vcmask 261120
    %s305 = scalar_lea.vmem [#allocation0], 64
    %306 = vst.msk [vmem:[%s305] sm:$0x1] %vm304, %v303
    %s307 = scalar_lea.vmem [#allocation0], 95
    %308 = vst.msk [vmem:[%s307] sm:$0x2] %vm304, %v303
    %s309 = scalar_lea.vmem [#allocation1], 24
    %v310 = vld [vmem:[%s309] sm:$0x3]
    %vm311 = vcmask 261120
    %s312 = scalar_lea.vmem [#allocation0], 80
    %313 = vst.msk [vmem:[%s312] sm:$0x1] %vm311, %v310
    %s314 = scalar_lea.vmem [#allocation0], 111
    %315 = vst.msk [vmem:[%s314] sm:$0x2] %vm311, %v310
    %s316 = scalar_lea.vmem [#allocation1], 32
    %v317 = vld [vmem:[%s316] sm:$0x3]
    %vm318 = vcmask 261120
    %s319 = scalar_lea.vmem [#allocation0], 128
    %320 = vst.msk [vmem:[%s319] sm:$0x1] %vm318, %v317
    %s321 = scalar_lea.vmem [#allocation0], 159
    %322 = vst.msk [vmem:[%s321] sm:$0x2] %vm318, %v317
    %s323 = scalar_lea.vmem [#allocation1], 40
    %v324 = vld [vmem:[%s323] sm:$0x3]
    %vm325 = vcmask 261120
    %s326 = scalar_lea.vmem [#allocation0], 144
    %327 = vst.msk [vmem:[%s326] sm:$0x1] %vm325, %v324
    %s328 = scalar_lea.vmem [#allocation0], 175
    %329 = vst.msk [vmem:[%s328] sm:$0x2] %vm325, %v324
    %s330 = scalar_lea.vmem [#allocation1], 48
    %v331 = vld [vmem:[%s330] sm:$0x3]
    %vm332 = vcmask 261120
    %s333 = scalar_lea.vmem [#allocation0], 192
    %334 = vst.msk [vmem:[%s333] sm:$0x1] %vm332, %v331
    %s335 = scalar_lea.vmem [#allocation0], 223
    %336 = vst.msk [vmem:[%s335] sm:$0x2] %vm332, %v331
    %s337 = scalar_lea.vmem [#allocation1], 56
    %v338 = vld [vmem:[%s337] sm:$0x3]
    %vm339 = vcmask 261120
    %s340 = scalar_lea.vmem [#allocation0], 208
    %341 = vst.msk [vmem:[%s340] sm:$0x1] %vm339, %v338
    %s342 = scalar_lea.vmem [#allocation0], 239
    %343 = vst.msk [vmem:[%s342] sm:$0x2] %vm339, %v338
    %s344 = scalar_lea.vmem [#allocation1], 64
    %v345 = vld [vmem:[%s344] sm:$0x3]
    %vm346 = vcmask 261120
    %s347 = scalar_lea.vmem [#allocation0], 256
    %348 = vst.msk [vmem:[%s347] sm:$0x1] %vm346, %v345
    %s349 = scalar_lea.vmem [#allocation0], 287
    %350 = vst.msk [vmem:[%s349] sm:$0x2] %vm346, %v345
    %s351 = scalar_lea.vmem [#allocation1], 72
    %v352 = vld [vmem:[%s351] sm:$0x3]
    %vm353 = vcmask 261120
    %s354 = scalar_lea.vmem [#allocation0], 272
    %355 = vst.msk [vmem:[%s354] sm:$0x1] %vm353, %v352
    %s356 = scalar_lea.vmem [#allocation0], 303
    %357 = vst.msk [vmem:[%s356] sm:$0x2] %vm353, %v352
    %s358 = scalar_lea.vmem [#allocation1], 80
    %v359 = vld [vmem:[%s358] sm:$0x3]
    %vm360 = vcmask 261120
    %s361 = scalar_lea.vmem [#allocation0], 320
    %362 = vst.msk [vmem:[%s361] sm:$0x1] %vm360, %v359
    %s363 = scalar_lea.vmem [#allocation0], 351
    %364 = vst.msk [vmem:[%s363] sm:$0x2] %vm360, %v359
    %s365 = scalar_lea.vmem [#allocation1], 88
    %v366 = vld [vmem:[%s365] sm:$0x3]
    %vm367 = vcmask 261120
    %s368 = scalar_lea.vmem [#allocation0], 336
    %369 = vst.msk [vmem:[%s368] sm:$0x1] %vm367, %v366
    %s370 = scalar_lea.vmem [#allocation0], 367
    %371 = vst.msk [vmem:[%s370] sm:$0x2] %vm367, %v366
    %s372 = scalar_lea.vmem [#allocation1], 96
    %v373 = vld [vmem:[%s372] sm:$0x3]
    %vm374 = vcmask 261120
    %s375 = scalar_lea.vmem [#allocation0], 384
    %376 = vst.msk [vmem:[%s375] sm:$0x1] %vm374, %v373
    %s377 = scalar_lea.vmem [#allocation0], 415
    %378 = vst.msk [vmem:[%s377] sm:$0x2] %vm374, %v373
    %s379 = scalar_lea.vmem [#allocation1], 104
    %v380 = vld [vmem:[%s379] sm:$0x3]
    %vm381 = vcmask 261120
    %s382 = scalar_lea.vmem [#allocation0], 400
    %383 = vst.msk [vmem:[%s382] sm:$0x1] %vm381, %v380
    %s384 = scalar_lea.vmem [#allocation0], 431
    %385 = vst.msk [vmem:[%s384] sm:$0x2] %vm381, %v380
    %s386 = scalar_lea.vmem [#allocation1], 112
    %v387 = vld [vmem:[%s386] sm:$0x3]
    %vm388 = vcmask 261120
    %s389 = scalar_lea.vmem [#allocation0], 448
    %390 = vst.msk [vmem:[%s389] sm:$0x1] %vm388, %v387
    %s391 = scalar_lea.vmem [#allocation0], 479
    %392 = vst.msk [vmem:[%s391] sm:$0x2] %vm388, %v387
    %s393 = scalar_lea.vmem [#allocation1], 120
    %v394 = vld [vmem:[%s393] sm:$0x3]
    %vm395 = vcmask 261120
    %s396 = scalar_lea.vmem [#allocation0], 464
    %397 = vst.msk [vmem:[%s396] sm:$0x1] %vm395, %v394
    %s398 = scalar_lea.vmem [#allocation0], 495
    %399 = vst.msk [vmem:[%s398] sm:$0x2] %vm395, %v394
    %s400 = scalar_lea.vmem [#allocation1], 128
    %v401 = vld [vmem:[%s400] sm:$0x3]
    %vm402 = vcmask 261120
    %s403 = scalar_lea.vmem [#allocation0], 512
    %404 = vst.msk [vmem:[%s403] sm:$0x1] %vm402, %v401
    %s405 = scalar_lea.vmem [#allocation0], 543
    %406 = vst.msk [vmem:[%s405] sm:$0x2] %vm402, %v401
    %s407 = scalar_lea.vmem [#allocation1], 136
    %v408 = vld [vmem:[%s407] sm:$0x3]
    %vm409 = vcmask 261120
    %s410 = scalar_lea.vmem [#allocation0], 528
    %411 = vst.msk [vmem:[%s410] sm:$0x1] %vm409, %v408
    %s412 = scalar_lea.vmem [#allocation0], 559
    %413 = vst.msk [vmem:[%s412] sm:$0x2] %vm409, %v408
    %v414 = vld.sshfl [vmem:[#allocation1] sm:$0xff pattern:$0x99999180]
    %s415 = scalar_lea.vmem [#allocation1], 16
    %v416 = vld.sshfl [vmem:[%s415] sm:$0xff pattern:$0x91800000]
    %vm417 = vcmask 1047556
    %v418 = vsel %vm417, %v416, %v414
    %419 = vrot.lane.b32.xlu0 %v418, 96
    %v420 = vpop.permute.xlu0 %419
    %vm421 = vcmask 261120
    %s422 = scalar_lea.vmem [#allocation0], 1
    %423 = vst.msk [vmem:[%s422] ss:$16 sm:$0x3] %vm421, %v420
    %s424 = scalar_lea.vmem [#allocation0], 1
    %425 = vst.msk [vmem:[%s424] ss:$16 sm:$0xc] %vm421, %v420
    %s426 = scalar_lea.vmem [#allocation0], 1
    %427 = vst.msk [vmem:[%s426] ss:$16 sm:$0x30] %vm421, %v420
    %s428 = scalar_lea.vmem [#allocation0], 1
    %429 = vst.msk [vmem:[%s428] ss:$16 sm:$0xc0] %vm421, %v420
    %s430 = scalar_lea.vmem [#allocation1], 32
    %v431 = vld.sshfl [vmem:[%s430] sm:$0xff pattern:$0x99999180]
    %s432 = scalar_lea.vmem [#allocation1], 48
    %v433 = vld.sshfl [vmem:[%s432] sm:$0xff pattern:$0x91800000]
    %vm434 = vcmask 1047556
    %v435 = vsel %vm434, %v433, %v431
    %436 = vrot.lane.b32.xlu0 %v435, 96
    %v437 = vpop.permute.xlu0 %436
    %vm438 = vcmask 261120
    %s439 = scalar_lea.vmem [#allocation0], 129
    %440 = vst.msk [vmem:[%s439] ss:$16 sm:$0x3] %vm438, %v437
    %s441 = scalar_lea.vmem [#allocation0], 129
    %442 = vst.msk [vmem:[%s441] ss:$16 sm:$0xc] %vm438, %v437
    %s443 = scalar_lea.vmem [#allocation0], 129
    %444 = vst.msk [vmem:[%s443] ss:$16 sm:$0x30] %vm438, %v437
    %s445 = scalar_lea.vmem [#allocation0], 129
    %446 = vst.msk [vmem:[%s445] ss:$16 sm:$0xc0] %vm438, %v437
    %s447 = scalar_lea.vmem [#allocation1], 64
    %v448 = vld.sshfl [vmem:[%s447] sm:$0xff pattern:$0x99999180]
    %s449 = scalar_lea.vmem [#allocation1], 80
    %v450 = vld.sshfl [vmem:[%s449] sm:$0xff pattern:$0x91800000]
    %vm451 = vcmask 1047556
    %v452 = vsel %vm451, %v450, %v448
    %453 = vrot.lane.b32.xlu0 %v452, 96
    %v454 = vpop.permute.xlu0 %453
    %vm455 = vcmask 261120
    %s456 = scalar_lea.vmem [#allocation0], 257
    %457 = vst.msk [vmem:[%s456] ss:$16 sm:$0x3] %vm455, %v454
    %s458 = scalar_lea.vmem [#allocation0], 257
    %459 = vst.msk [vmem:[%s458] ss:$16 sm:$0xc] %vm455, %v454
    %s460 = scalar_lea.vmem [#allocation0], 257
    %461 = vst.msk [vmem:[%s460] ss:$16 sm:$0x30] %vm455, %v454
    %s462 = scalar_lea.vmem [#allocation0], 257
    %463 = vst.msk [vmem:[%s462] ss:$16 sm:$0xc0] %vm455, %v454
    %s464 = scalar_lea.vmem [#allocation1], 96
    %v465 = vld.sshfl [vmem:[%s464] sm:$0xff pattern:$0x99999180]
    %s466 = scalar_lea.vmem [#allocation1], 112
    %v467 = vld.sshfl [vmem:[%s466] sm:$0xff pattern:$0x91800000]
    %vm468 = vcmask 1047556
    %v469 = vsel %vm468, %v467, %v465
    %470 = vrot.lane.b32.xlu0 %v469, 96
    %v471 = vpop.permute.xlu0 %470
    %vm472 = vcmask 261120
    %s473 = scalar_lea.vmem [#allocation0], 385
    %474 = vst.msk [vmem:[%s473] ss:$16 sm:$0x3] %vm472, %v471
    %s475 = scalar_lea.vmem [#allocation0], 385
    %476 = vst.msk [vmem:[%s475] ss:$16 sm:$0xc] %vm472, %v471
    %s477 = scalar_lea.vmem [#allocation0], 385
    %478 = vst.msk [vmem:[%s477] ss:$16 sm:$0x30] %vm472, %v471
    %s479 = scalar_lea.vmem [#allocation0], 385
    %480 = vst.msk [vmem:[%s479] ss:$16 sm:$0xc0] %vm472, %v471
    %s481 = scalar_lea.vmem [#allocation1], 128
    %v482 = vld.sshfl [vmem:[%s481] sm:$0xff pattern:$0x99999180]
    %483 = vrot.lane.b32.xlu0 %v482, 96
    %v484 = vpop.permute.xlu0 %483
    %vm485 = vcmask 261120
    %s486 = scalar_lea.vmem [#allocation0], 513
    %487 = vst.msk [vmem:[%s486] ss:$16 sm:$0x3] %vm485, %v484
    %s488 = scalar_lea.vmem [#allocation0], 513
    %489 = vst.msk [vmem:[%s488] ss:$16 sm:$0xc] %vm485, %v484
    %v490 = vld.sshfl [vmem:[#allocation1] sm:$0xff pattern:$0x99999180]
    %s491 = scalar_lea.vmem [#allocation1], 16
    %v492 = vld.sshfl [vmem:[%s491] sm:$0xff pattern:$0x91800000]
    %vm493 = vcmask 1047556
    %v494 = vsel %vm493, %v492, %v490
    %495 = vrot.lane.b32.xlu0 %v494, 64
    %v496 = vpop.permute.xlu0 %495
    %vm497 = vcmask 261120
    %s498 = scalar_lea.vmem [#allocation0], 8
    %499 = vst.msk [vmem:[%s498] ss:$16 sm:$0x3] %vm497, %v496
    %s500 = scalar_lea.vmem [#allocation0], 8
    %501 = vst.msk [vmem:[%s500] ss:$16 sm:$0xc] %vm497, %v496
    %s502 = scalar_lea.vmem [#allocation0], 8
    %503 = vst.msk [vmem:[%s502] ss:$16 sm:$0x30] %vm497, %v496
    %s504 = scalar_lea.vmem [#allocation0], 8
    %505 = vst.msk [vmem:[%s504] ss:$16 sm:$0xc0] %vm497, %v496
    %s506 = scalar_lea.vmem [#allocation1], 32
    %v507 = vld.sshfl [vmem:[%s506] sm:$0xff pattern:$0x99999180]
    %s508 = scalar_lea.vmem [#allocation1], 48
    %v509 = vld.sshfl [vmem:[%s508] sm:$0xff pattern:$0x91800000]
    %vm510 = vcmask 1047556
    %v511 = vsel %vm510, %v509, %v507
    %512 = vrot.lane.b32.xlu0 %v511, 64
    %v513 = vpop.permute.xlu0 %512
    %vm514 = vcmask 261120
    %s515 = scalar_lea.vmem [#allocation0], 136
    %516 = vst.msk [vmem:[%s515] ss:$16 sm:$0x3] %vm514, %v513
    %s517 = scalar_lea.vmem [#allocation0], 136
    %518 = vst.msk [vmem:[%s517] ss:$16 sm:$0xc] %vm514, %v513
    %s519 = scalar_lea.vmem [#allocation0], 136
    %520 = vst.msk [vmem:[%s519] ss:$16 sm:$0x30] %vm514, %v513
    %s521 = scalar_lea.vmem [#allocation0], 136
    %522 = vst.msk [vmem:[%s521] ss:$16 sm:$0xc0] %vm514, %v513
    %s523 = scalar_lea.vmem [#allocation1], 64
    %v524 = vld.sshfl [vmem:[%s523] sm:$0xff pattern:$0x99999180]
    %s525 = scalar_lea.vmem [#allocation1], 80
    %v526 = vld.sshfl [vmem:[%s525] sm:$0xff pattern:$0x91800000]
    %vm527 = vcmask 1047556
    %v528 = vsel %vm527, %v526, %v524
    %529 = vrot.lane.b32.xlu0 %v528, 64
    %v530 = vpop.permute.xlu0 %529
    %vm531 = vcmask 261120
    %s532 = scalar_lea.vmem [#allocation0], 264
    %533 = vst.msk [vmem:[%s532] ss:$16 sm:$0x3] %vm531, %v530
    %s534 = scalar_lea.vmem [#allocation0], 264
    %535 = vst.msk [vmem:[%s534] ss:$16 sm:$0xc] %vm531, %v530
    %s536 = scalar_lea.vmem [#allocation0], 264
    %537 = vst.msk [vmem:[%s536] ss:$16 sm:$0x30] %vm531, %v530
    %s538 = scalar_lea.vmem [#allocation0], 264
    %539 = vst.msk [vmem:[%s538] ss:$16 sm:$0xc0] %vm531, %v530
    %s540 = scalar_lea.vmem [#allocation1], 96
    %v541 = vld.sshfl [vmem:[%s540] sm:$0xff pattern:$0x99999180]
    %s542 = scalar_lea.vmem [#allocation1], 112
    %v543 = vld.sshfl [vmem:[%s542] sm:$0xff pattern:$0x91800000]
    %vm544 = vcmask 1047556
    %v545 = vsel %vm544, %v543, %v541
    %546 = vrot.lane.b32.xlu0 %v545, 64
    %v547 = vpop.permute.xlu0 %546
    %vm548 = vcmask 261120
    %s549 = scalar_lea.vmem [#allocation0], 392
    %550 = vst.msk [vmem:[%s549] ss:$16 sm:$0x3] %vm548, %v547
    %s551 = scalar_lea.vmem [#allocation0], 392
    %552 = vst.msk [vmem:[%s551] ss:$16 sm:$0xc] %vm548, %v547
    %s553 = scalar_lea.vmem [#allocation0], 392
    %554 = vst.msk [vmem:[%s553] ss:$16 sm:$0x30] %vm548, %v547
    %s555 = scalar_lea.vmem [#allocation0], 392
    %556 = vst.msk [vmem:[%s555] ss:$16 sm:$0xc0] %vm548, %v547
    %s557 = scalar_lea.vmem [#allocation1], 128
    %v558 = vld.sshfl [vmem:[%s557] sm:$0xff pattern:$0x99999180]
    %559 = vrot.lane.b32.xlu0 %v558, 64
    %v560 = vpop.permute.xlu0 %559
    %vm561 = vcmask 261120
    %s562 = scalar_lea.vmem [#allocation0], 520
    %563 = vst.msk [vmem:[%s562] ss:$16 sm:$0x3] %vm561, %v560
    %s564 = scalar_lea.vmem [#allocation0], 520
    %565 = vst.msk [vmem:[%s564] ss:$16 sm:$0xc] %vm561, %v560
    %v566 = vld.sshfl [vmem:[#allocation1] sm:$0xff pattern:$0x99999180]
    %s567 = scalar_lea.vmem [#allocation1], 16
    %v568 = vld.sshfl [vmem:[%s567] sm:$0xff pattern:$0x91800000]
    %vm569 = vcmask 1047556
    %v570 = vsel %vm569, %v568, %v566
    %571 = vrot.lane.b32.xlu0 %v570, 32
    %v572 = vpop.permute.xlu0 %571
    %vm573 = vcmask 261120
    %s574 = scalar_lea.vmem [#allocation0], 9
    %575 = vst.msk [vmem:[%s574] ss:$16 sm:$0x3] %vm573, %v572
    %s576 = scalar_lea.vmem [#allocation0], 9
    %577 = vst.msk [vmem:[%s576] ss:$16 sm:$0xc] %vm573, %v572
    %s578 = scalar_lea.vmem [#allocation0], 9
    %579 = vst.msk [vmem:[%s578] ss:$16 sm:$0x30] %vm573, %v572
    %s580 = scalar_lea.vmem [#allocation0], 9
    %581 = vst.msk [vmem:[%s580] ss:$16 sm:$0xc0] %vm573, %v572
    %s582 = scalar_lea.vmem [#allocation1], 32
    %v583 = vld.sshfl [vmem:[%s582] sm:$0xff pattern:$0x99999180]
    %s584 = scalar_lea.vmem [#allocation1], 48
    %v585 = vld.sshfl [vmem:[%s584] sm:$0xff pattern:$0x91800000]
    %vm586 = vcmask 1047556
    %v587 = vsel %vm586, %v585, %v583
    %588 = vrot.lane.b32.xlu0 %v587, 32
    %v589 = vpop.permute.xlu0 %588
    %vm590 = vcmask 261120
    %s591 = scalar_lea.vmem [#allocation0], 137
    %592 = vst.msk [vmem:[%s591] ss:$16 sm:$0x3] %vm590, %v589
    %s593 = scalar_lea.vmem [#allocation0], 137
    %594 = vst.msk [vmem:[%s593] ss:$16 sm:$0xc] %vm590, %v589
    %s595 = scalar_lea.vmem [#allocation0], 137
    %596 = vst.msk [vmem:[%s595] ss:$16 sm:$0x30] %vm590, %v589
    %s597 = scalar_lea.vmem [#allocation0], 137
    %598 = vst.msk [vmem:[%s597] ss:$16 sm:$0xc0] %vm590, %v589
    %s599 = scalar_lea.vmem [#allocation1], 64
    %v600 = vld.sshfl [vmem:[%s599] sm:$0xff pattern:$0x99999180]
    %s601 = scalar_lea.vmem [#allocation1], 80
    %v602 = vld.sshfl [vmem:[%s601] sm:$0xff pattern:$0x91800000]
    %vm603 = vcmask 1047556
    %v604 = vsel %vm603, %v602, %v600
    %605 = vrot.lane.b32.xlu0 %v604, 32
    %v606 = vpop.permute.xlu0 %605
    %vm607 = vcmask 261120
    %s608 = scalar_lea.vmem [#allocation0], 265
    %609 = vst.msk [vmem:[%s608] ss:$16 sm:$0x3] %vm607, %v606
    %s610 = scalar_lea.vmem [#allocation0], 265
    %611 = vst.msk [vmem:[%s610] ss:$16 sm:$0xc] %vm607, %v606
    %s612 = scalar_lea.vmem [#allocation0], 265
    %613 = vst.msk [vmem:[%s612] ss:$16 sm:$0x30] %vm607, %v606
    %s614 = scalar_lea.vmem [#allocation0], 265
    %615 = vst.msk [vmem:[%s614] ss:$16 sm:$0xc0] %vm607, %v606
    %s616 = scalar_lea.vmem [#allocation1], 96
    %v617 = vld.sshfl [vmem:[%s616] sm:$0xff pattern:$0x99999180]
    %s618 = scalar_lea.vmem [#allocation1], 112
    %v619 = vld.sshfl [vmem:[%s618] sm:$0xff pattern:$0x91800000]
    %vm620 = vcmask 1047556
    %v621 = vsel %vm620, %v619, %v617
    %622 = vrot.lane.b32.xlu0 %v621, 32
    %v623 = vpop.permute.xlu0 %622
    %vm624 = vcmask 261120
    %s625 = scalar_lea.vmem [#allocation0], 393
    %626 = vst.msk [vmem:[%s625] ss:$16 sm:$0x3] %vm624, %v623
    %s627 = scalar_lea.vmem [#allocation0], 393
    %628 = vst.msk [vmem:[%s627] ss:$16 sm:$0xc] %vm624, %v623
    %s629 = scalar_lea.vmem [#allocation0], 393
    %630 = vst.msk [vmem:[%s629] ss:$16 sm:$0x30] %vm624, %v623
    %s631 = scalar_lea.vmem [#allocation0], 393
    %632 = vst.msk [vmem:[%s631] ss:$16 sm:$0xc0] %vm624, %v623
    %s633 = scalar_lea.vmem [#allocation1], 128
    %v634 = vld.sshfl [vmem:[%s633] sm:$0xff pattern:$0x99999180]
    %635 = vrot.lane.b32.xlu0 %v634, 32
    %v636 = vpop.permute.xlu0 %635
    %vm637 = vcmask 261120
    %s638 = scalar_lea.vmem [#allocation0], 521
    %639 = vst.msk [vmem:[%s638] ss:$16 sm:$0x3] %vm637, %v636
    %s640 = scalar_lea.vmem [#allocation0], 521
    %641 = vst.msk [vmem:[%s640] ss:$16 sm:$0xc] %vm637, %v636
    %s643 = smul.u32 1, 2
    %s644 = sshll.u32 1, %s643
    %s645 = ssub.s32 %s644, 1
    %s646 = sshrl.u32 %s643, 1
    %v647 = vld [vmem:[#allocation0] sm:%s645]
    %v648 = vpack.c.bf16 0.0, %v647
    %s649 = sshll.u32 1, %s646
    %s650 = ssub.s32 %s649, 1
    %651 = vst [vmem:[%s1] sm:%s650] %v648
    %s652 = scalar_lea.vmem [#allocation0], 8
    %v653 = vld [vmem:[%s652] sm:%s645]
    %v654 = vpack.c.bf16 0.0, %v653
    %s655 = sshll.u32 1, %s646
    %s656 = ssub.s32 %s655, 1
    %s657 = scalar_lea.vmem %s1, 1
    %658 = vst [vmem:[%s657] sm:%s656] %v654
    %s659 = scalar_lea.vmem [#allocation0], 16
    %v660 = vld [vmem:[%s659] sm:%s645]
    %v661 = vpack.c.bf16 0.0, %v660
    %s662 = sshll.u32 1, %s646
    %s663 = ssub.s32 %s662, 1
    %s664 = smul.addr 1, 2
    %s665 = scalar_lea.vmem %s1, %s664
    %666 = vst [vmem:[%s665] sm:%s663] %v661
    %s667 = scalar_lea.vmem [#allocation0], 24
    %v668 = vld [vmem:[%s667] sm:%s645]
    %v669 = vpack.c.bf16 0.0, %v668
    %s670 = sshll.u32 1, %s646
    %s671 = ssub.s32 %s670, 1
    %s672 = smul.addr 1, 3
    %s673 = scalar_lea.vmem %s1, %s672
    %674 = vst [vmem:[%s673] sm:%s671] %v669
    %s675 = scalar_lea.vmem [#allocation0], 32
    %v676 = vld [vmem:[%s675] sm:%s645]
    %v677 = vpack.c.bf16 0.0, %v676
    %s678 = sshll.u32 1, %s646
    %s679 = ssub.s32 %s678, 1
    %s680 = smul.addr 1, 4
    %s681 = scalar_lea.vmem %s1, %s680
    %682 = vst [vmem:[%s681] sm:%s679] %v677
    %s683 = scalar_lea.vmem [#allocation0], 40
    %v684 = vld [vmem:[%s683] sm:%s645]
    %v685 = vpack.c.bf16 0.0, %v684
    %s686 = sshll.u32 1, %s646
    %s687 = ssub.s32 %s686, 1
    %s688 = smul.addr 1, 5
    %s689 = scalar_lea.vmem %s1, %s688
    %690 = vst [vmem:[%s689] sm:%s687] %v685
    %s691 = scalar_lea.vmem [#allocation0], 48
    %v692 = vld [vmem:[%s691] sm:%s645]
    %v693 = vpack.c.bf16 0.0, %v692
    %s694 = sshll.u32 1, %s646
    %s695 = ssub.s32 %s694, 1
    %s696 = smul.addr 1, 6
    %s697 = scalar_lea.vmem %s1, %s696
    %698 = vst [vmem:[%s697] sm:%s695] %v693
    %s699 = scalar_lea.vmem [#allocation0], 56
    %v700 = vld [vmem:[%s699] sm:%s645]
    %v701 = vpack.c.bf16 0.0, %v700
    %s702 = sshll.u32 1, %s646
    %s703 = ssub.s32 %s702, 1
    %s704 = smul.addr 1, 7
    %s705 = scalar_lea.vmem %s1, %s704
    %706 = vst [vmem:[%s705] sm:%s703] %v701
    %s707 = scalar_lea.vmem [#allocation0], 64
    %v708 = vld [vmem:[%s707] sm:%s645]
    %v709 = vpack.c.bf16 0.0, %v708
    %s710 = sshll.u32 1, %s646
    %s711 = ssub.s32 %s710, 1
    %s712 = smul.addr 1, 8
    %s713 = scalar_lea.vmem %s1, %s712
    %714 = vst [vmem:[%s713] sm:%s711] %v709
    %s715 = scalar_lea.vmem [#allocation0], 72
    %v716 = vld [vmem:[%s715] sm:%s645]
    %v717 = vpack.c.bf16 0.0, %v716
    %s718 = sshll.u32 1, %s646
    %s719 = ssub.s32 %s718, 1
    %s720 = smul.addr 1, 9
    %s721 = scalar_lea.vmem %s1, %s720
    %722 = vst [vmem:[%s721] sm:%s719] %v717
    %s723 = scalar_lea.vmem [#allocation0], 80
    %v724 = vld [vmem:[%s723] sm:%s645]
    %v725 = vpack.c.bf16 0.0, %v724
    %s726 = sshll.u32 1, %s646
    %s727 = ssub.s32 %s726, 1
    %s728 = smul.addr 1, 10
    %s729 = scalar_lea.vmem %s1, %s728
    %730 = vst [vmem:[%s729] sm:%s727] %v725
    %s731 = scalar_lea.vmem [#allocation0], 88
    %v732 = vld [vmem:[%s731] sm:%s645]
    %v733 = vpack.c.bf16 0.0, %v732
    %s734 = sshll.u32 1, %s646
    %s735 = ssub.s32 %s734, 1
    %s736 = smul.addr 1, 11
    %s737 = scalar_lea.vmem %s1, %s736
    %738 = vst [vmem:[%s737] sm:%s735] %v733
    %s739 = scalar_lea.vmem [#allocation0], 96
    %v740 = vld [vmem:[%s739] sm:%s645]
    %v741 = vpack.c.bf16 0.0, %v740
    %s742 = sshll.u32 1, %s646
    %s743 = ssub.s32 %s742, 1
    %s744 = smul.addr 1, 12
    %s745 = scalar_lea.vmem %s1, %s744
    %746 = vst [vmem:[%s745] sm:%s743] %v741
    %s747 = scalar_lea.vmem [#allocation0], 104
    %v748 = vld [vmem:[%s747] sm:%s645]
    %v749 = vpack.c.bf16 0.0, %v748
    %s750 = sshll.u32 1, %s646
    %s751 = ssub.s32 %s750, 1
    %s752 = smul.addr 1, 13
    %s753 = scalar_lea.vmem %s1, %s752
    %754 = vst [vmem:[%s753] sm:%s751] %v749
    %s755 = scalar_lea.vmem [#allocation0], 112
    %v756 = vld [vmem:[%s755] sm:%s645]
    %v757 = vpack.c.bf16 0.0, %v756
    %s758 = sshll.u32 1, %s646
    %s759 = ssub.s32 %s758, 1
    %s760 = smul.addr 1, 14
    %s761 = scalar_lea.vmem %s1, %s760
    %762 = vst [vmem:[%s761] sm:%s759] %v757
    %s763 = scalar_lea.vmem [#allocation0], 120
    %v764 = vld [vmem:[%s763] sm:%s645]
    %v765 = vpack.c.bf16 0.0, %v764
    %s766 = sshll.u32 1, %s646
    %s767 = ssub.s32 %s766, 1
    %s768 = smul.addr 1, 15
    %s769 = scalar_lea.vmem %s1, %s768
    %770 = vst [vmem:[%s769] sm:%s767] %v765
    %s771 = scalar_lea.vmem [#allocation0], 128
    %v772 = vld [vmem:[%s771] sm:%s645]
    %v773 = vpack.c.bf16 0.0, %v772
    %s774 = sshll.u32 1, %s646
    %s775 = ssub.s32 %s774, 1
    %s776 = smul.addr 1, 16
    %s777 = scalar_lea.vmem %s1, %s776
    %778 = vst [vmem:[%s777] sm:%s775] %v773
    %s779 = scalar_lea.vmem [#allocation0], 136
    %v780 = vld [vmem:[%s779] sm:%s645]
    %v781 = vpack.c.bf16 0.0, %v780
    %s782 = sshll.u32 1, %s646
    %s783 = ssub.s32 %s782, 1
    %s784 = smul.addr 1, 17
    %s785 = scalar_lea.vmem %s1, %s784
    %786 = vst [vmem:[%s785] sm:%s783] %v781
    %s787 = scalar_lea.vmem [#allocation0], 144
    %v788 = vld [vmem:[%s787] sm:%s645]
    %v789 = vpack.c.bf16 0.0, %v788
    %s790 = sshll.u32 1, %s646
    %s791 = ssub.s32 %s790, 1
    %s792 = smul.addr 1, 18
    %s793 = scalar_lea.vmem %s1, %s792
    %794 = vst [vmem:[%s793] sm:%s791] %v789
    %s795 = scalar_lea.vmem [#allocation0], 152
    %v796 = vld [vmem:[%s795] sm:%s645]
    %v797 = vpack.c.bf16 0.0, %v796
    %s798 = sshll.u32 1, %s646
    %s799 = ssub.s32 %s798, 1
    %s800 = smul.addr 1, 19
    %s801 = scalar_lea.vmem %s1, %s800
    %802 = vst [vmem:[%s801] sm:%s799] %v797
    %s803 = scalar_lea.vmem [#allocation0], 160
    %v804 = vld [vmem:[%s803] sm:%s645]
    %v805 = vpack.c.bf16 0.0, %v804
    %s806 = sshll.u32 1, %s646
    %s807 = ssub.s32 %s806, 1
    %s808 = smul.addr 1, 20
    %s809 = scalar_lea.vmem %s1, %s808
    %810 = vst [vmem:[%s809] sm:%s807] %v805
    %s811 = scalar_lea.vmem [#allocation0], 168
    %v812 = vld [vmem:[%s811] sm:%s645]
    %v813 = vpack.c.bf16 0.0, %v812
    %s814 = sshll.u32 1, %s646
    %s815 = ssub.s32 %s814, 1
    %s816 = smul.addr 1, 21
    %s817 = scalar_lea.vmem %s1, %s816
    %818 = vst [vmem:[%s817] sm:%s815] %v813
    %s819 = scalar_lea.vmem [#allocation0], 176
    %v820 = vld [vmem:[%s819] sm:%s645]
    %v821 = vpack.c.bf16 0.0, %v820
    %s822 = sshll.u32 1, %s646
    %s823 = ssub.s32 %s822, 1
    %s824 = smul.addr 1, 22
    %s825 = scalar_lea.vmem %s1, %s824
    %826 = vst [vmem:[%s825] sm:%s823] %v821
    %s827 = scalar_lea.vmem [#allocation0], 184
    %v828 = vld [vmem:[%s827] sm:%s645]
    %v829 = vpack.c.bf16 0.0, %v828
    %s830 = sshll.u32 1, %s646
    %s831 = ssub.s32 %s830, 1
    %s832 = smul.addr 1, 23
    %s833 = scalar_lea.vmem %s1, %s832
    %834 = vst [vmem:[%s833] sm:%s831] %v829
    %s835 = scalar_lea.vmem [#allocation0], 192
    %v836 = vld [vmem:[%s835] sm:%s645]
    %v837 = vpack.c.bf16 0.0, %v836
    %s838 = sshll.u32 1, %s646
    %s839 = ssub.s32 %s838, 1
    %s840 = smul.addr 1, 24
    %s841 = scalar_lea.vmem %s1, %s840
    %842 = vst [vmem:[%s841] sm:%s839] %v837
    %s843 = scalar_lea.vmem [#allocation0], 200
    %v844 = vld [vmem:[%s843] sm:%s645]
    %v845 = vpack.c.bf16 0.0, %v844
    %s846 = sshll.u32 1, %s646
    %s847 = ssub.s32 %s846, 1
    %s848 = smul.addr 1, 25
    %s849 = scalar_lea.vmem %s1, %s848
    %850 = vst [vmem:[%s849] sm:%s847] %v845
    %s851 = scalar_lea.vmem [#allocation0], 208
    %v852 = vld [vmem:[%s851] sm:%s645]
    %v853 = vpack.c.bf16 0.0, %v852
    %s854 = sshll.u32 1, %s646
    %s855 = ssub.s32 %s854, 1
    %s856 = smul.addr 1, 26
    %s857 = scalar_lea.vmem %s1, %s856
    %858 = vst [vmem:[%s857] sm:%s855] %v853
    %s859 = scalar_lea.vmem [#allocation0], 216
    %v860 = vld [vmem:[%s859] sm:%s645]
    %v861 = vpack.c.bf16 0.0, %v860
    %s862 = sshll.u32 1, %s646
    %s863 = ssub.s32 %s862, 1
    %s864 = smul.addr 1, 27
    %s865 = scalar_lea.vmem %s1, %s864
    %866 = vst [vmem:[%s865] sm:%s863] %v861
    %s867 = scalar_lea.vmem [#allocation0], 224
    %v868 = vld [vmem:[%s867] sm:%s645]
    %v869 = vpack.c.bf16 0.0, %v868
    %s870 = sshll.u32 1, %s646
    %s871 = ssub.s32 %s870, 1
    %s872 = smul.addr 1, 28
    %s873 = scalar_lea.vmem %s1, %s872
    %874 = vst [vmem:[%s873] sm:%s871] %v869
    %s875 = scalar_lea.vmem [#allocation0], 232
    %v876 = vld [vmem:[%s875] sm:%s645]
    %v877 = vpack.c.bf16 0.0, %v876
    %s878 = sshll.u32 1, %s646
    %s879 = ssub.s32 %s878, 1
    %s880 = smul.addr 1, 29
    %s881 = scalar_lea.vmem %s1, %s880
    %882 = vst [vmem:[%s881] sm:%s879] %v877
    %s883 = scalar_lea.vmem [#allocation0], 240
    %v884 = vld [vmem:[%s883] sm:%s645]
    %v885 = vpack.c.bf16 0.0, %v884
    %s886 = sshll.u32 1, %s646
    %s887 = ssub.s32 %s886, 1
    %s888 = smul.addr 1, 30
    %s889 = scalar_lea.vmem %s1, %s888
    %890 = vst [vmem:[%s889] sm:%s887] %v885
    %s891 = scalar_lea.vmem [#allocation0], 248
    %v892 = vld [vmem:[%s891] sm:%s645]
    %v893 = vpack.c.bf16 0.0, %v892
    %s894 = sshll.u32 1, %s646
    %s895 = ssub.s32 %s894, 1
    %s896 = smul.addr 1, 31
    %s897 = scalar_lea.vmem %s1, %s896
    %898 = vst [vmem:[%s897] sm:%s895] %v893
    %s899 = scalar_lea.vmem [#allocation0], 256
    %v900 = vld [vmem:[%s899] sm:%s645]
    %v901 = vpack.c.bf16 0.0, %v900
    %s902 = sshll.u32 1, %s646
    %s903 = ssub.s32 %s902, 1
    %s904 = smul.addr 1, 32
    %s905 = scalar_lea.vmem %s1, %s904
    %906 = vst [vmem:[%s905] sm:%s903] %v901
    %s907 = scalar_lea.vmem [#allocation0], 264
    %v908 = vld [vmem:[%s907] sm:%s645]
    %v909 = vpack.c.bf16 0.0, %v908
    %s910 = sshll.u32 1, %s646
    %s911 = ssub.s32 %s910, 1
    %s912 = smul.addr 1, 33
    %s913 = scalar_lea.vmem %s1, %s912
    %914 = vst [vmem:[%s913] sm:%s911] %v909
    %s915 = scalar_lea.vmem [#allocation0], 272
    %v916 = vld [vmem:[%s915] sm:%s645]
    %v917 = vpack.c.bf16 0.0, %v916
    %s918 = sshll.u32 1, %s646
    %s919 = ssub.s32 %s918, 1
    %s920 = smul.addr 1, 34
    %s921 = scalar_lea.vmem %s1, %s920
    %922 = vst [vmem:[%s921] sm:%s919] %v917
    %s923 = scalar_lea.vmem [#allocation0], 280
    %v924 = vld [vmem:[%s923] sm:%s645]
    %v925 = vpack.c.bf16 0.0, %v924
    %s926 = sshll.u32 1, %s646
    %s927 = ssub.s32 %s926, 1
    %s928 = smul.addr 1, 35
    %s929 = scalar_lea.vmem %s1, %s928
    %930 = vst [vmem:[%s929] sm:%s927] %v925
    %s931 = scalar_lea.vmem [#allocation0], 288
    %v932 = vld [vmem:[%s931] sm:%s645]
    %v933 = vpack.c.bf16 0.0, %v932
    %s934 = sshll.u32 1, %s646
    %s935 = ssub.s32 %s934, 1
    %s936 = smul.addr 1, 36
    %s937 = scalar_lea.vmem %s1, %s936
    %938 = vst [vmem:[%s937] sm:%s935] %v933
    %s939 = scalar_lea.vmem [#allocation0], 296
    %v940 = vld [vmem:[%s939] sm:%s645]
    %v941 = vpack.c.bf16 0.0, %v940
    %s942 = sshll.u32 1, %s646
    %s943 = ssub.s32 %s942, 1
    %s944 = smul.addr 1, 37
    %s945 = scalar_lea.vmem %s1, %s944
    %946 = vst [vmem:[%s945] sm:%s943] %v941
    %s947 = scalar_lea.vmem [#allocation0], 304
    %v948 = vld [vmem:[%s947] sm:%s645]
    %v949 = vpack.c.bf16 0.0, %v948
    %s950 = sshll.u32 1, %s646
    %s951 = ssub.s32 %s950, 1
    %s952 = smul.addr 1, 38
    %s953 = scalar_lea.vmem %s1, %s952
    %954 = vst [vmem:[%s953] sm:%s951] %v949
    %s955 = scalar_lea.vmem [#allocation0], 312
    %v956 = vld [vmem:[%s955] sm:%s645]
    %v957 = vpack.c.bf16 0.0, %v956
    %s958 = sshll.u32 1, %s646
    %s959 = ssub.s32 %s958, 1
    %s960 = smul.addr 1, 39
    %s961 = scalar_lea.vmem %s1, %s960
    %962 = vst [vmem:[%s961] sm:%s959] %v957
    %s963 = scalar_lea.vmem [#allocation0], 320
    %v964 = vld [vmem:[%s963] sm:%s645]
    %v965 = vpack.c.bf16 0.0, %v964
    %s966 = sshll.u32 1, %s646
    %s967 = ssub.s32 %s966, 1
    %s968 = smul.addr 1, 40
    %s969 = scalar_lea.vmem %s1, %s968
    %970 = vst [vmem:[%s969] sm:%s967] %v965
    %s971 = scalar_lea.vmem [#allocation0], 328
    %v972 = vld [vmem:[%s971] sm:%s645]
    %v973 = vpack.c.bf16 0.0, %v972
    %s974 = sshll.u32 1, %s646
    %s975 = ssub.s32 %s974, 1
    %s976 = smul.addr 1, 41
    %s977 = scalar_lea.vmem %s1, %s976
    %978 = vst [vmem:[%s977] sm:%s975] %v973
    %s979 = scalar_lea.vmem [#allocation0], 336
    %v980 = vld [vmem:[%s979] sm:%s645]
    %v981 = vpack.c.bf16 0.0, %v980
    %s982 = sshll.u32 1, %s646
    %s983 = ssub.s32 %s982, 1
    %s984 = smul.addr 1, 42
    %s985 = scalar_lea.vmem %s1, %s984
    %986 = vst [vmem:[%s985] sm:%s983] %v981
    %s987 = scalar_lea.vmem [#allocation0], 344
    %v988 = vld [vmem:[%s987] sm:%s645]
    %v989 = vpack.c.bf16 0.0, %v988
    %s990 = sshll.u32 1, %s646
    %s991 = ssub.s32 %s990, 1
    %s992 = smul.addr 1, 43
    %s993 = scalar_lea.vmem %s1, %s992
    %994 = vst [vmem:[%s993] sm:%s991] %v989
    %s995 = scalar_lea.vmem [#allocation0], 352
    %v996 = vld [vmem:[%s995] sm:%s645]
    %v997 = vpack.c.bf16 0.0, %v996
    %s998 = sshll.u32 1, %s646
    %s999 = ssub.s32 %s998, 1
    %s1000 = smul.addr 1, 44
    %s1001 = scalar_lea.vmem %s1, %s1000
    %1002 = vst [vmem:[%s1001] sm:%s999] %v997
    %s1003 = scalar_lea.vmem [#allocation0], 360
    %v1004 = vld [vmem:[%s1003] sm:%s645]
    %v1005 = vpack.c.bf16 0.0, %v1004
    %s1006 = sshll.u32 1, %s646
    %s1007 = ssub.s32 %s1006, 1
    %s1008 = smul.addr 1, 45
    %s1009 = scalar_lea.vmem %s1, %s1008
    %1010 = vst [vmem:[%s1009] sm:%s1007] %v1005
    %s1011 = scalar_lea.vmem [#allocation0], 368
    %v1012 = vld [vmem:[%s1011] sm:%s645]
    %v1013 = vpack.c.bf16 0.0, %v1012
    %s1014 = sshll.u32 1, %s646
    %s1015 = ssub.s32 %s1014, 1
    %s1016 = smul.addr 1, 46
    %s1017 = scalar_lea.vmem %s1, %s1016
    %1018 = vst [vmem:[%s1017] sm:%s1015] %v1013
    %s1019 = scalar_lea.vmem [#allocation0], 376
    %v1020 = vld [vmem:[%s1019] sm:%s645]
    %v1021 = vpack.c.bf16 0.0, %v1020
    %s1022 = sshll.u32 1, %s646
    %s1023 = ssub.s32 %s1022, 1
    %s1024 = smul.addr 1, 47
    %s1025 = scalar_lea.vmem %s1, %s1024
    %1026 = vst [vmem:[%s1025] sm:%s1023] %v1021
    %s1027 = scalar_lea.vmem [#allocation0], 384
    %v1028 = vld [vmem:[%s1027] sm:%s645]
    %v1029 = vpack.c.bf16 0.0, %v1028
    %s1030 = sshll.u32 1, %s646
    %s1031 = ssub.s32 %s1030, 1
    %s1032 = smul.addr 1, 48
    %s1033 = scalar_lea.vmem %s1, %s1032
    %1034 = vst [vmem:[%s1033] sm:%s1031] %v1029
    %s1035 = scalar_lea.vmem [#allocation0], 392
    %v1036 = vld [vmem:[%s1035] sm:%s645]
    %v1037 = vpack.c.bf16 0.0, %v1036
    %s1038 = sshll.u32 1, %s646
    %s1039 = ssub.s32 %s1038, 1
    %s1040 = smul.addr 1, 49
    %s1041 = scalar_lea.vmem %s1, %s1040
    %1042 = vst [vmem:[%s1041] sm:%s1039] %v1037
    %s1043 = scalar_lea.vmem [#allocation0], 400
    %v1044 = vld [vmem:[%s1043] sm:%s645]
    %v1045 = vpack.c.bf16 0.0, %v1044
    %s1046 = sshll.u32 1, %s646
    %s1047 = ssub.s32 %s1046, 1
    %s1048 = smul.addr 1, 50
    %s1049 = scalar_lea.vmem %s1, %s1048
    %1050 = vst [vmem:[%s1049] sm:%s1047] %v1045
    %s1051 = scalar_lea.vmem [#allocation0], 408
    %v1052 = vld [vmem:[%s1051] sm:%s645]
    %v1053 = vpack.c.bf16 0.0, %v1052
    %s1054 = sshll.u32 1, %s646
    %s1055 = ssub.s32 %s1054, 1
    %s1056 = smul.addr 1, 51
    %s1057 = scalar_lea.vmem %s1, %s1056
    %1058 = vst [vmem:[%s1057] sm:%s1055] %v1053
    %s1059 = scalar_lea.vmem [#allocation0], 416
    %v1060 = vld [vmem:[%s1059] sm:%s645]
    %v1061 = vpack.c.bf16 0.0, %v1060
    %s1062 = sshll.u32 1, %s646
    %s1063 = ssub.s32 %s1062, 1
    %s1064 = smul.addr 1, 52
    %s1065 = scalar_lea.vmem %s1, %s1064
    %1066 = vst [vmem:[%s1065] sm:%s1063] %v1061
    %s1067 = scalar_lea.vmem [#allocation0], 424
    %v1068 = vld [vmem:[%s1067] sm:%s645]
    %v1069 = vpack.c.bf16 0.0, %v1068
    %s1070 = sshll.u32 1, %s646
    %s1071 = ssub.s32 %s1070, 1
    %s1072 = smul.addr 1, 53
    %s1073 = scalar_lea.vmem %s1, %s1072
    %1074 = vst [vmem:[%s1073] sm:%s1071] %v1069
    %s1075 = scalar_lea.vmem [#allocation0], 432
    %v1076 = vld [vmem:[%s1075] sm:%s645]
    %v1077 = vpack.c.bf16 0.0, %v1076
    %s1078 = sshll.u32 1, %s646
    %s1079 = ssub.s32 %s1078, 1
    %s1080 = smul.addr 1, 54
    %s1081 = scalar_lea.vmem %s1, %s1080
    %1082 = vst [vmem:[%s1081] sm:%s1079] %v1077
    %s1083 = scalar_lea.vmem [#allocation0], 440
    %v1084 = vld [vmem:[%s1083] sm:%s645]
    %v1085 = vpack.c.bf16 0.0, %v1084
    %s1086 = sshll.u32 1, %s646
    %s1087 = ssub.s32 %s1086, 1
    %s1088 = smul.addr 1, 55
    %s1089 = scalar_lea.vmem %s1, %s1088
    %1090 = vst [vmem:[%s1089] sm:%s1087] %v1085
    %s1091 = scalar_lea.vmem [#allocation0], 448
    %v1092 = vld [vmem:[%s1091] sm:%s645]
    %v1093 = vpack.c.bf16 0.0, %v1092
    %s1094 = sshll.u32 1, %s646
    %s1095 = ssub.s32 %s1094, 1
    %s1096 = smul.addr 1, 56
    %s1097 = scalar_lea.vmem %s1, %s1096
    %1098 = vst [vmem:[%s1097] sm:%s1095] %v1093
    %s1099 = scalar_lea.vmem [#allocation0], 456
    %v1100 = vld [vmem:[%s1099] sm:%s645]
    %v1101 = vpack.c.bf16 0.0, %v1100
    %s1102 = sshll.u32 1, %s646
    %s1103 = ssub.s32 %s1102, 1
    %s1104 = smul.addr 1, 57
    %s1105 = scalar_lea.vmem %s1, %s1104
    %1106 = vst [vmem:[%s1105] sm:%s1103] %v1101
    %s1107 = scalar_lea.vmem [#allocation0], 464
    %v1108 = vld [vmem:[%s1107] sm:%s645]
    %v1109 = vpack.c.bf16 0.0, %v1108
    %s1110 = sshll.u32 1, %s646
    %s1111 = ssub.s32 %s1110, 1
    %s1112 = smul.addr 1, 58
    %s1113 = scalar_lea.vmem %s1, %s1112
    %1114 = vst [vmem:[%s1113] sm:%s1111] %v1109
    %s1115 = scalar_lea.vmem [#allocation0], 472
    %v1116 = vld [vmem:[%s1115] sm:%s645]
    %v1117 = vpack.c.bf16 0.0, %v1116
    %s1118 = sshll.u32 1, %s646
    %s1119 = ssub.s32 %s1118, 1
    %s1120 = smul.addr 1, 59
    %s1121 = scalar_lea.vmem %s1, %s1120
    %1122 = vst [vmem:[%s1121] sm:%s1119] %v1117
    %s1123 = scalar_lea.vmem [#allocation0], 480
    %v1124 = vld [vmem:[%s1123] sm:%s645]
    %v1125 = vpack.c.bf16 0.0, %v1124
    %s1126 = sshll.u32 1, %s646
    %s1127 = ssub.s32 %s1126, 1
    %s1128 = smul.addr 1, 60
    %s1129 = scalar_lea.vmem %s1, %s1128
    %1130 = vst [vmem:[%s1129] sm:%s1127] %v1125
    %s1131 = scalar_lea.vmem [#allocation0], 488
    %v1132 = vld [vmem:[%s1131] sm:%s645]
    %v1133 = vpack.c.bf16 0.0, %v1132
    %s1134 = sshll.u32 1, %s646
    %s1135 = ssub.s32 %s1134, 1
    %s1136 = smul.addr 1, 61
    %s1137 = scalar_lea.vmem %s1, %s1136
    %1138 = vst [vmem:[%s1137] sm:%s1135] %v1133
    %s1139 = scalar_lea.vmem [#allocation0], 496
    %v1140 = vld [vmem:[%s1139] sm:%s645]
    %v1141 = vpack.c.bf16 0.0, %v1140
    %s1142 = sshll.u32 1, %s646
    %s1143 = ssub.s32 %s1142, 1
    %s1144 = smul.addr 1, 62
    %s1145 = scalar_lea.vmem %s1, %s1144
    %1146 = vst [vmem:[%s1145] sm:%s1143] %v1141
    %s1147 = scalar_lea.vmem [#allocation0], 504
    %v1148 = vld [vmem:[%s1147] sm:%s645]
    %v1149 = vpack.c.bf16 0.0, %v1148
    %s1150 = sshll.u32 1, %s646
    %s1151 = ssub.s32 %s1150, 1
    %s1152 = smul.addr 1, 63
    %s1153 = scalar_lea.vmem %s1, %s1152
    %1154 = vst [vmem:[%s1153] sm:%s1151] %v1149
    %s1155 = scalar_lea.vmem [#allocation0], 512
    %v1156 = vld [vmem:[%s1155] sm:%s645]
    %v1157 = vpack.c.bf16 0.0, %v1156
    %s1158 = sshll.u32 1, %s646
    %s1159 = ssub.s32 %s1158, 1
    %s1160 = smul.addr 1, 64
    %s1161 = scalar_lea.vmem %s1, %s1160
    %1162 = vst [vmem:[%s1161] sm:%s1159] %v1157
    %s1163 = scalar_lea.vmem [#allocation0], 520
    %v1164 = vld [vmem:[%s1163] sm:%s645]
    %v1165 = vpack.c.bf16 0.0, %v1164
    %s1166 = sshll.u32 1, %s646
    %s1167 = ssub.s32 %s1166, 1
    %s1168 = smul.addr 1, 65
    %s1169 = scalar_lea.vmem %s1, %s1168
    %1170 = vst [vmem:[%s1169] sm:%s1167] %v1165
    %s1171 = scalar_lea.vmem [#allocation0], 528
    %v1172 = vld [vmem:[%s1171] sm:%s645]
    %v1173 = vpack.c.bf16 0.0, %v1172
    %s1174 = sshll.u32 1, %s646
    %s1175 = ssub.s32 %s1174, 1
    %s1176 = smul.addr 1, 66
    %s1177 = scalar_lea.vmem %s1, %s1176
    %1178 = vst [vmem:[%s1177] sm:%s1175] %v1173
    %s1179 = scalar_lea.vmem [#allocation0], 536
    %v1180 = vld [vmem:[%s1179] sm:%s645]
    %v1181 = vpack.c.bf16 0.0, %v1180
    %s1182 = sshll.u32 1, %s646
    %s1183 = ssub.s32 %s1182, 1
    %s1184 = smul.addr 1, 67
    %s1185 = scalar_lea.vmem %s1, %s1184
    %1186 = vst [vmem:[%s1185] sm:%s1183] %v1181
    %s1187 = scalar_lea.vmem [#allocation0], 544
    %v1188 = vld [vmem:[%s1187] sm:%s645]
    %v1189 = vpack.c.bf16 0.0, %v1188
    %s1190 = sshll.u32 1, %s646
    %s1191 = ssub.s32 %s1190, 1
    %s1192 = smul.addr 1, 68
    %s1193 = scalar_lea.vmem %s1, %s1192
    %1194 = vst [vmem:[%s1193] sm:%s1191] %v1189
    %s1195 = scalar_lea.vmem [#allocation0], 552
    %v1196 = vld [vmem:[%s1195] sm:%s645]
    %v1197 = vpack.c.bf16 0.0, %v1196
    %s1198 = sshll.u32 1, %s646
    %s1199 = ssub.s32 %s1198, 1
    %s1200 = smul.addr 1, 69
    %s1201 = scalar_lea.vmem %s1, %s1200
    %1202 = vst [vmem:[%s1201] sm:%s1199] %v1197
    %s1203 = scalar_lea.vmem [#allocation0], 560
    %v1204 = vld [vmem:[%s1203] sm:%s645]
    %v1205 = vpack.c.bf16 0.0, %v1204
    %s1206 = sshll.u32 1, %s646
    %s1207 = ssub.s32 %s1206, 1
    %s1208 = smul.addr 1, 70
    %s1209 = scalar_lea.vmem %s1, %s1208
    %1210 = vst [vmem:[%s1209] sm:%s1207] %v1205
    %s1211 = scalar_lea.vmem [#allocation0], 568
    %v1212 = vld [vmem:[%s1211] sm:%s645]
    %v1213 = vpack.c.bf16 0.0, %v1212
    %s1214 = sshll.u32 1, %s646
    %s1215 = ssub.s32 %s1214, 1
    %s1216 = smul.addr 1, 71
    %s1217 = scalar_lea.vmem %s1, %s1216
    %1218 = vst [vmem:[%s1217] sm:%s1215] %v1213

// kernel: posenet_forward.5
$region0: #{posenet_forward.5}
  #allocation0 [shape = 'u32[]', space=smem, size = 0x4, offset = 0x4, fixed_abs, tag = 'smem constant byte address 0x4 - core index']
  #allocation1 [shape = 'u32[144,128]{1,0:T(1,128)}', space=vmem, size = 0x12000, scoped, tag = 'internal scratch']
  #allocation2 [shape = 'bf16[4,4,128]{2,1,0:T(4,128)(2,1)}', space=vmem, size = 0x1000, scoped, tag = 'scratch operand']
  #allocation3 [shape = 'bf16[9,512]{1,0:T(8,128)(2,1)}', space=vmem, size = 0x4000, scoped, tag = 'scratch operand']
  #allocation4 [shape = 'f32[9,256]{1,0:T(8,128)}', space=vmem, size = 0x4000, scoped, tag = 'scratch operand']
  %s0 = inlined_call_operand.vmem [shape: bf16[1,2,2,2,256], index: 0, kind: input, shape index: {}]
  %s1 = inlined_call_operand.hbm [shape: bf16[1,1024,256], index: 1, kind: input, shape index: {}]
  %s2 = inlined_call_operand.vmem [shape: f32[1,1,256], index: 2, kind: input, shape index: {}]
  %s3 = inlined_call_operand.vmem [shape: bf16[1,2,9,256], index: 3, kind: output, shape index: {}]
  %s4 = sld [smem:[#allocation0]]
  $region91: #{posenet_forward.5} parent=0
    _
  %s6 = ssub.s32 1, %s4
  %s7 = scalar_select 0, %s6, %s4
  $region1: #{posenet_forward.5} parent=0
    #allocation5 [shape = 'u8[2048]{0}', space=vmem, size = 0x800, scoped, tag = 'input window, operand 0']
    #allocation6 [shape = 'u8[524288]{0}', space=vmem, size = 0x80000, scoped, tag = 'input window, operand 1']
    #allocation7 [shape = 's32[2]{0}', space=sflag, size = 0x8, scoped, tag = 'scoped memory for posenet_forward.5']
    %8 = vsyncpa [#allocation7], 0
    %s9 = scalar_lea.sflag [#allocation7], 1
    %10 = vsyncpa %s9, 0
    loop: start=0, step=1, limit=6
    $region2: #{posenet_forward.5} parent=1 // loop_pre_header
      _
    $region3: #{posenet_forward.5} parent=1 // loop_header
      %s12 = sphi 0, %s16
      %p13 = scmp.ge.s32.totalorder %s12, 6
      %s19 = sphi 0, %s38
      %s20 = sphi 0, %s34
      %s21 = sphi 0, %s30
      %s22 = sphi 0, %s19
      %s23 = sphi 0, %s20
      %s24 = sphi 0, %s21
      %s25 = sphi 0, %s22
      %s26 = sphi 0, %s23
      %s27 = sphi 0, %s24
      %s45 = sphi 0, %s47
      %s48 = sphi 0, %s45
      %s49 = sphi 0, %s48
      %s65 = sphi 0, %s49
      %s73 = sphi 0, %s75
      %s76 = sphi 0, %s73
      %s77 = sphi 0, %s76
      %s93 = sphi 0, %s77
      %s99 = sphi 0, %s101
      %s102 = sphi 0, %s99
      %s103 = sphi 0, %s102
      %s119 = sphi 0, %s103
      %s127 = sphi 0, %s129
      %s130 = sphi 0, %s127
      %s131 = sphi 0, %s130
      %s147 = sphi 0, %s131
    $region4: #{posenet_forward.5} parent=1 // loop_header_branch
      %15 = sbr.rel (%p13) target = $region8
    $region5: #{posenet_forward.5} parent=1 // loop_body
      %s17 = ssub.s32 %s12, 1
      %s18 = ssub.s32 %s12, 2
      %s28 = sadd.s32 1, %s21
      %p29 = scmp.ge.s32.totalorder %s28, 2
      %s30 = scalar_select %p29, 0, %s28
      %s31 = sadd.s32 1, %s20
      %s32 = scalar_select %p29, %s31, %s20
      %p33 = scmp.ge.s32.totalorder %s32, 2
      %s34 = scalar_select %p33, 0, %s32
      %s35 = sadd.s32 1, %s19
      %s36 = scalar_select %p33, %s35, %s19
      %p37 = scmp.ge.s32.totalorder %s36, 1
      %s38 = scalar_select %p37, 0, %s36
      %s39 = ssub.s32 %s19, %s38
      %s40 = ssub.s32 %s20, %s34
      %s41 = sor.u32 %s39, %s40
      %s42 = ssub.s32 %s21, %s30
      %s43 = sor.u32 %s41, %s42
      %p44 = scmp.eq.s32.totalorder %s43, 0
      %s46 = sadd.s32 %s45, 1
      %s47 = scalar_select %p44, %s45, %s46
      %p50 = pneg %p44
      %p51 = scmp.eq.s32.totalorder %s12, 3
      %p52 = por %p50, %p51
      %p53 = scmp.ne.s32.totalorder %s45, %s48
      %p54 = scmp.eq.s32.totalorder %s12, 0
      %p55 = por %p53, %p54
      %p56 = scmp.ne.s32.totalorder %s45, %s48
      %p57 = scmp.eq.s32.totalorder %s17, 3
      %p58 = por %p56, %p57
      %p59 = scmp.ne.s32.totalorder %s48, %s49
      %p60 = scmp.eq.s32.totalorder %s17, 0
      %p61 = por %p59, %p60
      %p62 = scmp.ne.s32.totalorder %s48, %s49
      %p63 = scmp.eq.s32.totalorder %s18, 3
      %p64 = por %p62, %p63
      %p66 = scmp.ne.s32.totalorder %s49, %s65
      %p67 = scmp.eq.s32.totalorder %s18, 0
      %p68 = por %p66, %p67
      %s69 = ssub.s32 %s19, %s38
      %s70 = ssub.s32 %s21, %s30
      %s71 = sor.u32 %s69, %s70
      %p72 = scmp.eq.s32.totalorder %s71, 0
      %s74 = sadd.s32 %s73, 1
      %s75 = scalar_select %p72, %s73, %s74
      %p78 = pneg %p72
      %p79 = scmp.eq.s32.totalorder %s12, 3
      %p80 = por %p78, %p79
      %p81 = scmp.ne.s32.totalorder %s73, %s76
      %p82 = scmp.eq.s32.totalorder %s12, 0
      %p83 = por %p81, %p82
      %p84 = scmp.ne.s32.totalorder %s73, %s76
      %p85 = scmp.eq.s32.totalorder %s17, 3
      %p86 = por %p84, %p85
      %p87 = scmp.ne.s32.totalorder %s76, %s77
      %p88 = scmp.eq.s32.totalorder %s17, 0
      %p89 = por %p87, %p88
      %p90 = scmp.ne.s32.totalorder %s76, %s77
      %p91 = scmp.eq.s32.totalorder %s18, 3
      %p92 = por %p90, %p91
      %p94 = scmp.ne.s32.totalorder %s77, %s93
      %p95 = scmp.eq.s32.totalorder %s18, 0
      %p96 = por %p94, %p95
      %s97 = ssub.s32 %s19, %s38
      %p98 = scmp.eq.s32.totalorder %s97, 0
      %s100 = sadd.s32 %s99, 1
      %s101 = scalar_select %p98, %s99, %s100
      %p104 = pneg %p98
      %p105 = scmp.eq.s32.totalorder %s12, 3
      %p106 = por %p104, %p105
      %p107 = scmp.ne.s32.totalorder %s99, %s102
      %p108 = scmp.eq.s32.totalorder %s12, 0
      %p109 = por %p107, %p108
      %p110 = scmp.ne.s32.totalorder %s99, %s102
      %p111 = scmp.eq.s32.totalorder %s17, 3
      %p112 = por %p110, %p111
      %p113 = scmp.ne.s32.totalorder %s102, %s103
      %p114 = scmp.eq.s32.totalorder %s17, 0
      %p115 = por %p113, %p114
      %p116 = scmp.ne.s32.totalorder %s102, %s103
      %p117 = scmp.eq.s32.totalorder %s18, 3
      %p118 = por %p116, %p117
      %p120 = scmp.ne.s32.totalorder %s103, %s119
      %p121 = scmp.eq.s32.totalorder %s18, 0
      %p122 = por %p120, %p121
      %s123 = ssub.s32 %s19, %s38
      %s124 = ssub.s32 %s20, %s34
      %s125 = sor.u32 %s123, %s124
      %p126 = scmp.eq.s32.totalorder %s125, 0
      %s128 = sadd.s32 %s127, 1
      %s129 = scalar_select %p126, %s127, %s128
      %p132 = pneg %p126
      %p133 = scmp.eq.s32.totalorder %s12, 3
      %p134 = por %p132, %p133
      %p135 = scmp.ne.s32.totalorder %s127, %s130
      %p136 = scmp.eq.s32.totalorder %s12, 0
      %p137 = por %p135, %p136
      %p138 = scmp.ne.s32.totalorder %s127, %s130
      %p139 = scmp.eq.s32.totalorder %s17, 3
      %p140 = por %p138, %p139
      %p141 = scmp.ne.s32.totalorder %s130, %s131
      %p142 = scmp.eq.s32.totalorder %s17, 0
      %p143 = por %p141, %p142
      %p144 = scmp.ne.s32.totalorder %s130, %s131
      %p145 = scmp.eq.s32.totalorder %s18, 3
      %p146 = por %p144, %p145
      %p148 = scmp.ne.s32.totalorder %s131, %s147
      %p149 = scmp.eq.s32.totalorder %s18, 0
      %p150 = por %p148, %p149
      %p151 = scmp.le.s32.totalorder 1, %s12
      %p152 = scmp.lt.s32.totalorder %s12, 5
      %p153 = pnand %p151, %p152
      %p154 = pneg %p153
      // Predicated region
      $region9: #{posenet_forward.5} parent=5 // pred_check
        _
      $region10: #{posenet_forward.5} parent=5 // pred_check_branch
        %156 = sbr.rel (%p153) target = $region12
      $region11: #{posenet_forward.5} parent=5 // pred_region
        %s157 = ssub.s32 %s12, 1
        // Predicated region
        $region13: #{posenet_forward.5} parent=11 // pred_check
          %p158 = pneg %p115
        $region14: #{posenet_forward.5} parent=11 // pred_check_branch
          %160 = sbr.rel (%p158) target = $region16
        $region15: #{posenet_forward.5} parent=11 // pred_region
          %p161 = scmp.lt.s32.totalorder %s22, 0
          %s162 = scalar_select %p161, %s22, 0
          %s163 = smul.addr %s162, 2
          %s164 = scalar_lea.vmem %s2, %s163
        $region16: #{posenet_forward.5} parent=11 // pred_fallthru
          _
      $region12: #{posenet_forward.5} parent=5 // pred_fallthru
        _
      %p165 = scmp.lt.s32.totalorder %s12, 4
      // Predicated region
      $region17: #{posenet_forward.5} parent=5 // pred_check
        %p166 = pneg %p165
      $region18: #{posenet_forward.5} parent=5 // pred_check_branch
        %168 = sbr.rel (%p166) target = $region20
      $region19: #{posenet_forward.5} parent=5 // pred_region
        // Predicated region
        $region21: #{posenet_forward.5} parent=19 // pred_check
          %p169 = pneg %p55
        $region22: #{posenet_forward.5} parent=19 // pred_check_branch
          %171 = sbr.rel (%p169) target = $region24
        $region23: #{posenet_forward.5} parent=19 // pred_region
          %s172 = sand.u32 %s45, 1
          %s173 = sand.u32 %s45, 1
          %s174 = smul.addr %s173, 2
          %s175 = scalar_lea.vmem [#allocation5], %s174
          %s176 = smul.addr %s20, 4
          %s177 = sadd.s32 %s21, %s176
          %s178 = smul.addr %s19, 8
          %s179 = sadd.s32 %s177, %s178
          %s180 = scalar_lea.vmem %s0, %s179
          // Predicated region
          $region25: #{posenet_forward.5} parent=23 // pred_check
            _
          $region26: #{posenet_forward.5} parent=23 // pred_check_branch
            %182 = sbr.rel (0) target = $region28
          $region27: #{posenet_forward.5} parent=23 // pred_region
            // Predicated region
            $region29: #{posenet_forward.5} parent=27 // pred_check
              _
            $region30: #{posenet_forward.5} parent=27 // pred_check_branch
              %184 = sbr.rel target = $region32
            $region31: #{posenet_forward.5} parent=27 // pred_region
              // Predicated region
              $region44: #{posenet_forward.5} parent=31 // pred_check
                _
              $region45: #{posenet_forward.5} parent=31 // pred_check_branch
                %202 = sbr.rel (0) target = $region47
              $region46: #{posenet_forward.5} parent=31 // pred_region
                %s204 = ssub.s32 2, 1
                loop: start=0, step=1, limit=1
                $region48: #{posenet_forward.5} parent=46 // loop_pre_header
                  _
                $region49: #{posenet_forward.5} parent=46 // loop_header
                  %s206 = sphi 0, %s210
                  %p207 = scmp.ge.s32.totalorder %s206, 1
                  %s211 = sphi %s180, %s180
                  %s212 = sphi %s175, %s175
                $region50: #{posenet_forward.5} parent=46 // loop_header_branch
                  %209 = sbr.rel (%p207) target = $region54
                $region51: #{posenet_forward.5} parent=46 // loop_body
                  %v213 = vld [vmem:[%s211] sm:%s204]
                  %214 = vst [vmem:[%s212] sm:%s204] %v213
                  %v215 = vld [vmem:[%s211 + $0x2] sm:%s204]
                  %216 = vst [vmem:[%s212 + $0x1] sm:%s204] %v215
                $region52: #{posenet_forward.5} parent=46 // loop_footer
                  %s210 = sadd.s32 1, %s206
                $region53: #{posenet_forward.5} parent=46 // loop_footer_branch
                  %205 = sbr.rel target = $region49
                $region54: #{posenet_forward.5} parent=46 // loop_exit
                  _
              $region47: #{posenet_forward.5} parent=31 // pred_fallthru
                _
            $region32: #{posenet_forward.5} parent=27 // pred_fallthru
              _
            // Predicated region
            $region33: #{posenet_forward.5} parent=27 // pred_check
              _
            $region34: #{posenet_forward.5} parent=27 // pred_check_branch
              %186 = sbr.rel (0) target = $region36
            $region35: #{posenet_forward.5} parent=27 // pred_region
              %s188 = ssub.s32 2, 1
              loop: start=0, step=1, limit=1
              $region37: #{posenet_forward.5} parent=35 // loop_pre_header
                _
              $region38: #{posenet_forward.5} parent=35 // loop_header
                %s190 = sphi 0, %s194
                %p191 = scmp.ge.s32.totalorder %s190, 1
                %s195 = sphi %s180, %s180
                %s196 = sphi %s175, %s175
              $region39: #{posenet_forward.5} parent=35 // loop_header_branch
                %193 = sbr.rel (%p191) target = $region43
              $region40: #{posenet_forward.5} parent=35 // loop_body
                %v197 = vld [vmem:[%s195] sm:%s188]
                %198 = vst [vmem:[%s196] sm:%s188] %v197
                %v199 = vld [vmem:[%s195 + $0x2] sm:%s188]
                %200 = vst [vmem:[%s196 + $0x1] sm:%s188] %v199
              $region41: #{posenet_forward.5} parent=35 // loop_footer
                %s194 = sadd.s32 1, %s190
              $region42: #{posenet_forward.5} parent=35 // loop_footer_branch
                %189 = sbr.rel target = $region38
              $region43: #{posenet_forward.5} parent=35 // loop_exit
                _
            $region36: #{posenet_forward.5} parent=27 // pred_fallthru
              _
          $region28: #{posenet_forward.5} parent=23 // pred_fallthru
            _
          %217 = vnop
        $region24: #{posenet_forward.5} parent=19 // pred_fallthru
          _
        // Predicated region
        $region55: #{posenet_forward.5} parent=19 // pred_check
          %p218 = pneg %p83
        $region56: #{posenet_forward.5} parent=19 // pred_check_branch
          %220 = sbr.rel (%p218) target = $region58
        $region57: #{posenet_forward.5} parent=19 // pred_region
          %s221 = sand.u32 %s73, 1
          %s222 = scalar_lea.sflag [#allocation7], %s221
          %s223 = sand.u32 %s73, 1
          %s224 = smul.addr %s223, 512
          %s225 = scalar_lea.vmem [#allocation6], %s224
          %s226 = smul.u32 64, %s21
          %s228 = ssub.s32 8192, 8192
          %229 = vsyncadd %s222, %s228
          %s230 = smul.addr %s226, 2
          %s231 = smul.addr %s19, 256
          %s232 = sadd.s32 %s230, %s231
          %s233 = smul.addr %s232, 64
          %s234 = scalar_lea.hbm %s1, %s233
          %s235 = sshll.u32 %s225, 4
          %s236 = int_to_ptr.vmem [resolvable:$true] %s235
          %241 = dma.hbm_to_vmem [thread:$0]  %s234, 8192, %s236, %s222, 128, 128, 8
        $region58: #{posenet_forward.5} parent=19 // pred_fallthru
          _
      $region20: #{posenet_forward.5} parent=5 // pred_fallthru
        _
      %p242 = scmp.le.s32.totalorder 1, %s12
      %p243 = scmp.lt.s32.totalorder %s12, 5
      %p244 = pnand %p242, %p243
      %p245 = pneg %p244
      // Predicated region
      $region59: #{posenet_forward.5} parent=5 // pred_check
        _
      $region60: #{posenet_forward.5} parent=5 // pred_check_branch
        %247 = sbr.rel (%p244) target = $region62
      $region61: #{posenet_forward.5} parent=5 // pred_region
        %s248 = ssub.s32 %s12, 1
        %s249 = sand.u32 %s48, 1
        %s250 = sand.u32 %s48, 1
        %s251 = smul.addr %s250, 2
        %s252 = scalar_lea.vmem [#allocation5], %s251
        // Predicated region
        $region63: #{posenet_forward.5} parent=61 // pred_check
          %p253 = pneg %p61
        $region64: #{posenet_forward.5} parent=61 // pred_check_branch
          %255 = sbr.rel (%p253) target = $region66
        $region65: #{posenet_forward.5} parent=61 // pred_region
          _
        $region66: #{posenet_forward.5} parent=61 // pred_fallthru
          _
        %s256 = sand.u32 %s76, 1
        %s257 = scalar_lea.sflag [#allocation7], %s256
        %s258 = sand.u32 %s76, 1
        %s259 = smul.addr %s258, 512
        %s260 = scalar_lea.vmem [#allocation6], %s259
        // Predicated region
        $region67: #{posenet_forward.5} parent=61 // pred_check
          %p261 = pneg %p89
        $region68: #{posenet_forward.5} parent=61 // pred_check_branch
          %263 = sbr.rel (%p261) target = $region70
        $region69: #{posenet_forward.5} parent=61 // pred_region
          %264 = dma.done %s257, 8192
        $region70: #{posenet_forward.5} parent=61 // pred_fallthru
          _
        %s265 = sand.u32 %s48, 1
        %s266 = sand.u32 %s48, 1
        %s267 = smul.addr %s266, 2
        %s268 = scalar_lea.vmem [#allocation5], %s267
        %p269 = pneg %p61
        %p270 = pneg %p58
        %s271 = sand.u32 %s76, 1
        %s272 = scalar_lea.sflag [#allocation7], %s271
        %s273 = sand.u32 %s76, 1
        %s274 = smul.addr %s273, 512
        %s275 = scalar_lea.vmem [#allocation6], %s274
        %p276 = pneg %p89
        %p277 = pneg %p86
        %p278 = scmp.lt.s32.totalorder %s22, 0
        %s279 = scalar_select %p278, %s22, 0
        %s280 = smul.addr %s279, 2
        %s281 = scalar_lea.vmem %s2, %s280
        %p282 = pneg %p115
        %p283 = pneg %p112
        %p284 = pneg %p143
        %p285 = pneg %p140
        %p286 = scmp.lt.s32.totalorder %s22, 0
        %s287 = scalar_select %p286, %s22, 0
        %p288 = scmp.lt.s32.totalorder %s23, 1
        %s289 = scalar_select %p288, %s23, 1
        %s290 = smul.addr %s289, 4
        %s291 = smul.addr %s287, 8
        %s292 = sadd.s32 %s290, %s291
        %s293 = smul.addr %s292, 4
        %s294 = scalar_lea.vmem %s3, %s293
        %s295 = smul.u32 64, %s24
        %p296 = scmp.lt.s32.totalorder %s22, 0
        %s297 = scalar_select %p296, %s22, 0
        %s298 = smul.addr %s297, 2
        %s299 = scalar_lea.vmem %s2, %s298
        %p300 = scmp.lt.s32.totalorder %s22, 0
        %s301 = scalar_select %p300, %s22, 0
        %p302 = scmp.lt.s32.totalorder %s23, 1
        %s303 = scalar_select %p302, %s23, 1
        %s304 = smul.addr %s303, 4
        %s305 = smul.addr %s301, 8
        %s306 = sadd.s32 %s304, %s305
        %s307 = smul.addr %s306, 4
        %s308 = scalar_lea.vmem %s3, %s307
        %p310 = scmp.eq.s32.totalorder %s24, 0
        // Predicated region
        $region71: #{posenet_forward.5} parent=61 // pred_check
          %p311 = pneg %p310
        $region72: #{posenet_forward.5} parent=61 // pred_check_branch
          %313 = sbr.rel (%p311) target = $region74
        $region73: #{posenet_forward.5} parent=61 // pred_region
          %314 = vst [vmem:[#allocation4] sm:$0xff] 0.0
          %315 = vst [vmem:[#allocation4 + $0x8] sm:$0xff] 0.0
          %316 = vst [vmem:[#allocation4 + $0x10] sm:$0x1] 0.0
          %317 = vst [vmem:[#allocation4 + $0x18] sm:$0x1] 0.0
        $region74: #{posenet_forward.5} parent=61 // pred_fallthru
          _
        %318 = vst [vmem:[#allocation2] sm:$0x3] 0
        %319 = vst [vmem:[#allocation2 + $0x2] sm:$0x3] 0
        %320 = vst [vmem:[#allocation2 + $0x4] sm:$0x3] 0
        %321 = vst [vmem:[#allocation2 + $0x6] sm:$0x3] 0
        %v322 = vld [vmem:[%s252] sm:$0x1]
        %v323 = vld [vmem:[%s252 + $0x1] sm:$0x1]
        %v327 = vunpack.c.l.s4 1935823168
        %v328 = vunpack.c.0.s8 %v327
        %v329 = vlaneseq
        %v330 = vshrl.u32 %v329, 7
        %v331 = vsub.s32 %v328, %v330
        %v332 = vrot.slane %v322, %v331
        %v334 = vunpack.c.l.s4 1935823168
        %v335 = vunpack.c.0.s8 %v334
        %v336 = vlaneseq
        %v337 = vshrl.u32 %v336, 7
        %v338 = vsub.s32 %v335, %v337
        %v339 = vrot.slane %v323, %v338
        %v341 = vshrl.u32 %v332, 16
        %v343 = vrot.slane %v341, 7
        %v344 = vshll.u32 %v332, 16
        %v346 = vor.u32 %v343, %v344
        %v348 = vshrl.u32 %v339, 16
        %v350 = vrot.slane %v348, 7
        %v351 = vshll.u32 %v339, 16
        %v353 = vor.u32 %v350, %v351
        %s356 = scalar_lea.vmem [#allocation2], 2
        %vm357 = vcmask 1041408
        %vm358 = vsmask.f32 1282
        %vm359 = vmand %vm357, %vm358
        %v360 = vld [vmem:[%s356] sm:$0x3]
        %v361 = vsel %vm359, %v346, %v360
        %362 = vst [vmem:[%s356] sm:$0x3] %v361
        %v363 = vld [vmem:[%s356 + $0x2] sm:$0x3]
        %v364 = vsel %vm359, %v353, %v363
        %365 = vst [vmem:[%s356 + $0x2] sm:$0x3] %v364
        %v366 = vld [vmem:[#allocation2] sm:$0x3]
        %v367 = vld [vmem:[%s356] sm:$0x3]
        %v370 = vunpack.c.l.s4 1983009808
        %v371 = vunpack.c.0.s8 %v370
        %v372 = vlaneseq
        %v373 = vshrl.u32 %v372, 7
        %v374 = vsub.s32 %v371, %v373
        %v375 = vrot.slane %v366, %v374
        %v377 = vshrl.u32 %v375, 16
        %v379 = vshll.u32 %v375, 16
        %v381 = vrot.slane %v379, 1
        %v382 = vor.u32 %v377, %v381
        %v385 = vunpack.c.l.s4 1983009808
        %v386 = vunpack.c.0.s8 %v385
        %v387 = vlaneseq
        %v388 = vshrl.u32 %v387, 7
        %v389 = vsub.s32 %v386, %v388
        %v390 = vrot.slane %v367, %v389
        %v392 = vshrl.u32 %v390, 16
        %v394 = vshll.u32 %v390, 16
        %v396 = vrot.slane %v394, 1
        %v397 = vor.u32 %v392, %v396
        %v398 = vunpack.c.l.b16 %v366
        %v399 = vunpack.c.l.b16 %v382
        %v400 = vunpack.c.l.b16 %v367
        %v401 = vunpack.c.l.b16 %v397
        %v402 = vpack.c.b16 %v399, %v398
        %v403 = vpack.c.b16 %v401, %v400
        %vm406 = vsmask.f32 1280
        %vm407 = vmand %vm357, %vm406
        %vm408 = vcmask 1045508
        %vm409 = vsmask.f32 5376
        %vm410 = vmand %vm408, %vm409
        %vm411 = vmor %vm410, %vm407
        %v412 = vld [vmem:[#allocation3] sm:$0x33]
        %v413 = vsel %vm411, %v402, %v412
        %414 = vst [vmem:[#allocation3] sm:$0x33] %v413
        %v415 = vld [vmem:[#allocation3 + $0x8] sm:$0x33]
        %v416 = vsel %vm411, %v403, %v415
        %417 = vst [vmem:[#allocation3 + $0x8] sm:$0x33] %v416
        %v418 = vld [vmem:[%s356] sm:$0x3]
        %s419 = scalar_lea.vmem [#allocation2], 4
        %v420 = vld [vmem:[%s419] sm:$0x3]
        %v423 = vunpack.c.l.s4 1983009808
        %v424 = vunpack.c.0.s8 %v423
        %v425 = vlaneseq
        %v426 = vshrl.u32 %v425, 7
        %v427 = vsub.s32 %v424, %v426
        %v428 = vrot.slane %v418, %v427
        %v430 = vshrl.u32 %v428, 16
        %v432 = vshll.u32 %v428, 16
        %v434 = vrot.slane %v432, 1
        %v435 = vor.u32 %v430, %v434
        %v438 = vunpack.c.l.s4 1983009808
        %v439 = vunpack.c.0.s8 %v438
        %v440 = vlaneseq
        %v441 = vshrl.u32 %v440, 7
        %v442 = vsub.s32 %v439, %v441
        %v443 = vrot.slane %v420, %v442
        %v445 = vshrl.u32 %v443, 16
        %v447 = vshll.u32 %v443, 16
        %v449 = vrot.slane %v447, 1
        %v450 = vor.u32 %v445, %v449
        %v451 = vunpack.c.l.b16 %v418
        %v452 = vunpack.c.l.b16 %v435
        %v453 = vunpack.c.l.b16 %v420
        %v454 = vunpack.c.l.b16 %v450
        %v455 = vpack.c.b16 %v452, %v451
        %v456 = vpack.c.b16 %v454, %v453
        %v458 = vshrl.u32 %v455, 16
        %v460 = vrot.slane %v458, 6
        %v461 = vshll.u32 %v455, 16
        %v463 = vrot.slane %v461, 7
        %v464 = vor.u32 %v460, %v463
        %v466 = vshrl.u32 %v456, 16
        %v468 = vrot.slane %v466, 6
        %v469 = vshll.u32 %v456, 16
        %v471 = vrot.slane %v469, 7
        %v472 = vor.u32 %v468, %v471
        %vm475 = vcmask 1042433
        %vm476 = vsmask.f32 7942
        %vm477 = vmand %vm475, %vm476
        %vm478 = vcmask 1046533
        %vm479 = vsmask.f32 7958
        %vm480 = vmand %vm478, %vm479
        %vm481 = vmor %vm480, %vm477
        %v482 = vld [vmem:[#allocation3] sm:$0x66]
        %v483 = vsel %vm481, %v464, %v482
        %484 = vst [vmem:[#allocation3] sm:$0x66] %v483
        %v485 = vld [vmem:[#allocation3 + $0x8] sm:$0x66]
        %v486 = vsel %vm481, %v472, %v485
        %487 = vst [vmem:[#allocation3 + $0x8] sm:$0x66] %v486
        %v488 = vld [vmem:[%s419] sm:$0x3]
        %s489 = scalar_lea.vmem [#allocation2], 6
        %v490 = vld [vmem:[%s489] sm:$0x3]
        %v493 = vunpack.c.l.s4 1983009808
        %v494 = vunpack.c.0.s8 %v493
        %v495 = vlaneseq
        %v496 = vshrl.u32 %v495, 7
        %v497 = vsub.s32 %v494, %v496
        %v498 = vrot.slane %v488, %v497
        %v500 = vshrl.u32 %v498, 16
        %v502 = vshll.u32 %v498, 16
        %v504 = vrot.slane %v502, 1
        %v505 = vor.u32 %v500, %v504
        %v508 = vunpack.c.l.s4 1983009808
        %v509 = vunpack.c.0.s8 %v508
        %v510 = vlaneseq
        %v511 = vshrl.u32 %v510, 7
        %v512 = vsub.s32 %v509, %v511
        %v513 = vrot.slane %v490, %v512
        %v515 = vshrl.u32 %v513, 16
        %v517 = vshll.u32 %v513, 16
        %v519 = vrot.slane %v517, 1
        %v520 = vor.u32 %v515, %v519
        %v521 = vunpack.c.l.b16 %v488
        %v522 = vunpack.c.l.b16 %v505
        %v523 = vunpack.c.l.b16 %v490
        %v524 = vunpack.c.l.b16 %v520
        %v525 = vpack.c.b16 %v522, %v521
        %v526 = vpack.c.b16 %v524, %v523
        %v527 = vrot.slane %v525, 5
        %v528 = vrot.slane %v526, 5
        %v529 = vrot.slane %v527, 4
        %v530 = vrot.slane %v528, 4
        %535 = vst [vmem:[#allocation3] sm:$0x88] %v527
        %536 = vst [vmem:[#allocation3 + $0x8] sm:$0x88] %v528
        %vm537 = vcmask 1040384
        %vm538 = vsmask.f32 256
        %vm539 = vmand %vm537, %vm538
        %vm540 = vcmask 1044484
        %vm541 = vsmask.f32 4352
        %vm542 = vmand %vm540, %vm541
        %vm543 = vmor %vm542, %vm539
        %v544 = vld [vmem:[#allocation3 + $0x10] sm:$0x11]
        %v545 = vsel %vm543, %v529, %v544
        %546 = vst [vmem:[#allocation3 + $0x10] sm:$0x11] %v545
        %v547 = vld [vmem:[#allocation3 + $0x18] sm:$0x11]
        %v548 = vsel %vm543, %v530, %v547
        %549 = vst [vmem:[#allocation3 + $0x18] sm:$0x11] %v548
        %v550 = vld [vmem:[#allocation4] sm:$0xff]
        %v551 = vld [vmem:[#allocation4 + $0x8] sm:$0xff]
        %v552 = vld [vmem:[#allocation4 + $0x10] sm:$0x1]
        %v553 = vld [vmem:[#allocation4 + $0x18] sm:$0x1]
        %v554 = vld [vmem:[#allocation3] sm:$0xff]
        %v555 = vld [vmem:[#allocation3 + $0x8] sm:$0xff]
        %v556 = vld [vmem:[#allocation3 + $0x10] sm:$0x11]
        %v557 = vld [vmem:[#allocation3 + $0x18] sm:$0x11]
        %v558 = vld [vmem:[%s260] sm:$0xff]
        %v559 = vld [vmem:[%s260 + $0x8] sm:$0xff]
        %v560 = vld [vmem:[%s260 + $0x10] sm:$0xff]
        %v561 = vld [vmem:[%s260 + $0x18] sm:$0xff]
        %v562 = vld [vmem:[%s260 + $0x20] sm:$0xff]
        %v563 = vld [vmem:[%s260 + $0x28] sm:$0xff]
        %v564 = vld [vmem:[%s260 + $0x30] sm:$0xff]
        %v565 = vld [vmem:[%s260 + $0x38] sm:$0xff]
        %v566 = vld [vmem:[%s260 + $0x40] sm:$0xff]
        %v567 = vld [vmem:[%s260 + $0x48] sm:$0xff]
        %v568 = vld [vmem:[%s260 + $0x50] sm:$0xff]
        %v569 = vld [vmem:[%s260 + $0x58] sm:$0xff]
        %v570 = vld [vmem:[%s260 + $0x60] sm:$0xff]
        %v571 = vld [vmem:[%s260 + $0x68] sm:$0xff]
        %v572 = vld [vmem:[%s260 + $0x70] sm:$0xff]
        %v573 = vld [vmem:[%s260 + $0x78] sm:$0xff]
        %v574 = vld [vmem:[%s260 + $0x80] sm:$0xff]
        %v575 = vld [vmem:[%s260 + $0x88] sm:$0xff]
        %v576 = vld [vmem:[%s260 + $0x90] sm:$0xff]
        %v577 = vld [vmem:[%s260 + $0x98] sm:$0xff]
        %v578 = vld [vmem:[%s260 + $0xa0] sm:$0xff]
        %v579 = vld [vmem:[%s260 + $0xa8] sm:$0xff]
        %v580 = vld [vmem:[%s260 + $0xb0] sm:$0xff]
        %v581 = vld [vmem:[%s260 + $0xb8] sm:$0xff]
        %v582 = vld [vmem:[%s260 + $0xc0] sm:$0xff]
        %v583 = vld [vmem:[%s260 + $0xc8] sm:$0xff]
        %v584 = vld [vmem:[%s260 + $0xd0] sm:$0xff]
        %v585 = vld [vmem:[%s260 + $0xd8] sm:$0xff]
        %v586 = vld [vmem:[%s260 + $0xe0] sm:$0xff]
        %v587 = vld [vmem:[%s260 + $0xe8] sm:$0xff]
        %v588 = vld [vmem:[%s260 + $0xf0] sm:$0xff]
        %v589 = vld [vmem:[%s260 + $0xf8] sm:$0xff]
        %v590 = vld [vmem:[%s260 + $0x100] sm:$0xff]
        %v591 = vld [vmem:[%s260 + $0x108] sm:$0xff]
        %v592 = vld [vmem:[%s260 + $0x110] sm:$0xff]
        %v593 = vld [vmem:[%s260 + $0x118] sm:$0xff]
        %v594 = vld [vmem:[%s260 + $0x120] sm:$0xff]
        %v595 = vld [vmem:[%s260 + $0x128] sm:$0xff]
        %v596 = vld [vmem:[%s260 + $0x130] sm:$0xff]
        %v597 = vld [vmem:[%s260 + $0x138] sm:$0xff]
        %v598 = vld [vmem:[%s260 + $0x140] sm:$0xff]
        %v599 = vld [vmem:[%s260 + $0x148] sm:$0xff]
        %v600 = vld [vmem:[%s260 + $0x150] sm:$0xff]
        %v601 = vld [vmem:[%s260 + $0x158] sm:$0xff]
        %v602 = vld [vmem:[%s260 + $0x160] sm:$0xff]
        %v603 = vld [vmem:[%s260 + $0x168] sm:$0xff]
        %v604 = vld [vmem:[%s260 + $0x170] sm:$0xff]
        %v605 = vld [vmem:[%s260 + $0x178] sm:$0xff]
        %v606 = vld [vmem:[%s260 + $0x180] sm:$0xff]
        %v607 = vld [vmem:[%s260 + $0x188] sm:$0xff]
        %v608 = vld [vmem:[%s260 + $0x190] sm:$0xff]
        %v609 = vld [vmem:[%s260 + $0x198] sm:$0xff]
        %v610 = vld [vmem:[%s260 + $0x1a0] sm:$0xff]
        %v611 = vld [vmem:[%s260 + $0x1a8] sm:$0xff]
        %v612 = vld [vmem:[%s260 + $0x1b0] sm:$0xff]
        %v613 = vld [vmem:[%s260 + $0x1b8] sm:$0xff]
        %v614 = vld [vmem:[%s260 + $0x1c0] sm:$0xff]
        %v615 = vld [vmem:[%s260 + $0x1c8] sm:$0xff]
        %v616 = vld [vmem:[%s260 + $0x1d0] sm:$0xff]
        %v617 = vld [vmem:[%s260 + $0x1d8] sm:$0xff]
        %v618 = vld [vmem:[%s260 + $0x1e0] sm:$0xff]
        %v619 = vld [vmem:[%s260 + $0x1e8] sm:$0xff]
        %v620 = vld [vmem:[%s260 + $0x1f0] sm:$0xff]
        %v621 = vld [vmem:[%s260 + $0x1f8] sm:$0xff]
        %v626 = vunpack.c.l.b16 %v554
        %v627 = vunpack.c.h.b16 %v554
        %v628 = vunpack.c.l.b16 %v555
        %v629 = vunpack.c.h.b16 %v555
        %v630 = vunpack.c.l.b16 %v556
        %v631 = vunpack.c.h.b16 %v556
        %v632 = vunpack.c.l.b16 %v557
        %v633 = vunpack.c.h.b16 %v557
        %v634 = vpack.c.b16 %v630, %v626
        %v635 = vpack.c.b16 %v631, %v627
        %v636 = vpack.c.b16 %v632, %v628
        %v637 = vpack.c.b16 %v633, %v629
        %v706 = vunpack.c.l.b16 %v558
        %v707 = vunpack.c.h.b16 %v558
        %v708 = vunpack.c.l.b16 %v559
        %v709 = vunpack.c.h.b16 %v559
        %v710 = vunpack.c.l.b16 %v560
        %v711 = vunpack.c.h.b16 %v560
        %v712 = vunpack.c.l.b16 %v561
        %v713 = vunpack.c.h.b16 %v561
        %v714 = vunpack.c.l.b16 %v562
        %v715 = vunpack.c.h.b16 %v562
        %v716 = vunpack.c.l.b16 %v563
        %v717 = vunpack.c.h.b16 %v563
        %v718 = vunpack.c.l.b16 %v564
        %v719 = vunpack.c.h.b16 %v564
        %v720 = vunpack.c.l.b16 %v565
        %v721 = vunpack.c.h.b16 %v565
        %v722 = vunpack.c.l.b16 %v566
        %v723 = vunpack.c.h.b16 %v566
        %v724 = vunpack.c.l.b16 %v567
        %v725 = vunpack.c.h.b16 %v567
        %v726 = vunpack.c.l.b16 %v568
        %v727 = vunpack.c.h.b16 %v568
        %v728 = vunpack.c.l.b16 %v569
        %v729 = vunpack.c.h.b16 %v569
        %v730 = vunpack.c.l.b16 %v570
        %v731 = vunpack.c.h.b16 %v570
        %v732 = vunpack.c.l.b16 %v571
        %v733 = vunpack.c.h.b16 %v571
        %v734 = vunpack.c.l.b16 %v572
        %v735 = vunpack.c.h.b16 %v572
        %v736 = vunpack.c.l.b16 %v573
        %v737 = vunpack.c.h.b16 %v573
        %v738 = vunpack.c.l.b16 %v574
        %v739 = vunpack.c.h.b16 %v574
        %v740 = vunpack.c.l.b16 %v575
        %v741 = vunpack.c.h.b16 %v575
        %v742 = vunpack.c.l.b16 %v576
        %v743 = vunpack.c.h.b16 %v576
        %v744 = vunpack.c.l.b16 %v577
        %v745 = vunpack.c.h.b16 %v577
        %v746 = vunpack.c.l.b16 %v578
        %v747 = vunpack.c.h.b16 %v578
        %v748 = vunpack.c.l.b16 %v579
        %v749 = vunpack.c.h.b16 %v579
        %v750 = vunpack.c.l.b16 %v580
        %v751 = vunpack.c.h.b16 %v580
        %v752 = vunpack.c.l.b16 %v581
        %v753 = vunpack.c.h.b16 %v581
        %v754 = vunpack.c.l.b16 %v582
        %v755 = vunpack.c.h.b16 %v582
        %v756 = vunpack.c.l.b16 %v583
        %v757 = vunpack.c.h.b16 %v583
        %v758 = vunpack.c.l.b16 %v584
        %v759 = vunpack.c.h.b16 %v584
        %v760 = vunpack.c.l.b16 %v585
        %v761 = vunpack.c.h.b16 %v585
        %v762 = vunpack.c.l.b16 %v586
        %v763 = vunpack.c.h.b16 %v586
        %v764 = vunpack.c.l.b16 %v587
        %v765 = vunpack.c.h.b16 %v587
        %v766 = vunpack.c.l.b16 %v588
        %v767 = vunpack.c.h.b16 %v588
        %v768 = vunpack.c.l.b16 %v589
        %v769 = vunpack.c.h.b16 %v589
        %v770 = vunpack.c.l.b16 %v590
        %v771 = vunpack.c.h.b16 %v590
        %v772 = vunpack.c.l.b16 %v591
        %v773 = vunpack.c.h.b16 %v591
        %v774 = vunpack.c.l.b16 %v592
        %v775 = vunpack.c.h.b16 %v592
        %v776 = vunpack.c.l.b16 %v593
        %v777 = vunpack.c.h.b16 %v593
        %v778 = vunpack.c.l.b16 %v594
        %v779 = vunpack.c.h.b16 %v594
        %v780 = vunpack.c.l.b16 %v595
        %v781 = vunpack.c.h.b16 %v595
        %v782 = vunpack.c.l.b16 %v596
        %v783 = vunpack.c.h.b16 %v596
        %v784 = vunpack.c.l.b16 %v597
        %v785 = vunpack.c.h.b16 %v597
        %v786 = vunpack.c.l.b16 %v598
        %v787 = vunpack.c.h.b16 %v598
        %v788 = vunpack.c.l.b16 %v599
        %v789 = vunpack.c.h.b16 %v599
        %v790 = vunpack.c.l.b16 %v600
        %v791 = vunpack.c.h.b16 %v600
        %v792 = vunpack.c.l.b16 %v601
        %v793 = vunpack.c.h.b16 %v601
        %v794 = vunpack.c.l.b16 %v602
        %v795 = vunpack.c.h.b16 %v602
        %v796 = vunpack.c.l.b16 %v603
        %v797 = vunpack.c.h.b16 %v603
        %v798 = vunpack.c.l.b16 %v604
        %v799 = vunpack.c.h.b16 %v604
        %v800 = vunpack.c.l.b16 %v605
        %v801 = vunpack.c.h.b16 %v605
        %v802 = vunpack.c.l.b16 %v606
        %v803 = vunpack.c.h.b16 %v606
        %v804 = vunpack.c.l.b16 %v607
        %v805 = vunpack.c.h.b16 %v607
        %v806 = vunpack.c.l.b16 %v608
        %v807 = vunpack.c.h.b16 %v608
        %v808 = vunpack.c.l.b16 %v609
        %v809 = vunpack.c.h.b16 %v609
        %v810 = vunpack.c.l.b16 %v610
        %v811 = vunpack.c.h.b16 %v610
        %v812 = vunpack.c.l.b16 %v611
        %v813 = vunpack.c.h.b16 %v611
        %v814 = vunpack.c.l.b16 %v612
        %v815 = vunpack.c.h.b16 %v612
        %v816 = vunpack.c.l.b16 %v613
        %v817 = vunpack.c.h.b16 %v613
        %v818 = vunpack.c.l.b16 %v614
        %v819 = vunpack.c.h.b16 %v614
        %v820 = vunpack.c.l.b16 %v615
        %v821 = vunpack.c.h.b16 %v615
        %v822 = vunpack.c.l.b16 %v616
        %v823 = vunpack.c.h.b16 %v616
        %v824 = vunpack.c.l.b16 %v617
        %v825 = vunpack.c.h.b16 %v617
        %v826 = vunpack.c.l.b16 %v618
        %v827 = vunpack.c.h.b16 %v618
        %v828 = vunpack.c.l.b16 %v619
        %v829 = vunpack.c.h.b16 %v619
        %v830 = vunpack.c.l.b16 %v620
        %v831 = vunpack.c.h.b16 %v620
        %v832 = vunpack.c.l.b16 %v621
        %v833 = vunpack.c.h.b16 %v621
        %v834 = vpack.c.b16 %v708, %v706
        %v835 = vpack.c.b16 %v709, %v707
        %v836 = vpack.c.b16 %v712, %v710
        %v837 = vpack.c.b16 %v713, %v711
        %v838 = vpack.c.b16 %v716, %v714
        %v839 = vpack.c.b16 %v717, %v715
        %v840 = vpack.c.b16 %v720, %v718
        %v841 = vpack.c.b16 %v721, %v719
        %v842 = vpack.c.b16 %v724, %v722
        %v843 = vpack.c.b16 %v725, %v723
        %v844 = vpack.c.b16 %v728, %v726
        %v845 = vpack.c.b16 %v729, %v727
        %v846 = vpack.c.b16 %v732, %v730
        %v847 = vpack.c.b16 %v733, %v731
        %v848 = vpack.c.b16 %v736, %v734
        %v849 = vpack.c.b16 %v737, %v735
        %v850 = vpack.c.b16 %v740, %v738
        %v851 = vpack.c.b16 %v741, %v739
        %v852 = vpack.c.b16 %v744, %v742
        %v853 = vpack.c.b16 %v745, %v743
        %v854 = vpack.c.b16 %v748, %v746
        %v855 = vpack.c.b16 %v749, %v747
        %v856 = vpack.c.b16 %v752, %v750
        %v857 = vpack.c.b16 %v753, %v751
        %v858 = vpack.c.b16 %v756, %v754
        %v859 = vpack.c.b16 %v757, %v755
        %v860 = vpack.c.b16 %v760, %v758
        %v861 = vpack.c.b16 %v761, %v759
        %v862 = vpack.c.b16 %v764, %v762
        %v863 = vpack.c.b16 %v765, %v763
        %v864 = vpack.c.b16 %v768, %v766
        %v865 = vpack.c.b16 %v769, %v767
        %v866 = vpack.c.b16 %v772, %v770
        %v867 = vpack.c.b16 %v773, %v771
        %v868 = vpack.c.b16 %v776, %v774
        %v869 = vpack.c.b16 %v777, %v775
        %v870 = vpack.c.b16 %v780, %v778
        %v871 = vpack.c.b16 %v781, %v779
        %v872 = vpack.c.b16 %v784, %v782
        %v873 = vpack.c.b16 %v785, %v783
        %v874 = vpack.c.b16 %v788, %v786
        %v875 = vpack.c.b16 %v789, %v787
        %v876 = vpack.c.b16 %v792, %v790
        %v877 = vpack.c.b16 %v793, %v791
        %v878 = vpack.c.b16 %v796, %v794
        %v879 = vpack.c.b16 %v797, %v795
        %v880 = vpack.c.b16 %v800, %v798
        %v881 = vpack.c.b16 %v801, %v799
        %v882 = vpack.c.b16 %v804, %v802
        %v883 = vpack.c.b16 %v805, %v803
        %v884 = vpack.c.b16 %v808, %v806
        %v885 = vpack.c.b16 %v809, %v807
        %v886 = vpack.c.b16 %v812, %v810
        %v887 = vpack.c.b16 %v813, %v811
        %v888 = vpack.c.b16 %v816, %v814
        %v889 = vpack.c.b16 %v817, %v815
        %v890 = vpack.c.b16 %v820, %v818
        %v891 = vpack.c.b16 %v821, %v819
        %v892 = vpack.c.b16 %v824, %v822
        %v893 = vpack.c.b16 %v825, %v823
        %v894 = vpack.c.b16 %v828, %v826
        %v895 = vpack.c.b16 %v829, %v827
        %v896 = vpack.c.b16 %v832, %v830
        %v897 = vpack.c.b16 %v833, %v831
        %962 = vmatprep.subr.bf16.mxu0 %v849
        %963 = vmatpush1.bf16.msra.mxu0 %v848
        %964 = vmatprep.subr.bf16.mxu0 %v847
        %965 = vmatpush1.bf16.msra.mxu0 %v846
        %966 = vmatprep.subr.bf16.mxu0 %v845
        %967 = vmatpush1.bf16.msra.mxu0 %v844
        %968 = vmatprep.subr.bf16.mxu0 %v843
        %969 = vmatpush1.bf16.msra.mxu0 %v842
        %970 = vmatprep.subr.bf16.mxu0 %v841
        %971 = vmatpush1.bf16.msra.mxu0 %v840
        %972 = vmatprep.subr.bf16.mxu0 %v839
        %973 = vmatpush1.bf16.msra.mxu0 %v838
        %974 = vmatprep.subr.bf16.mxu0 %v837
        %975 = vmatpush1.bf16.msra.mxu0 %v836
        %976 = vmatprep.subr.bf16.mxu0 %v835
        %977 = vmatpush1.bf16.msra.mxu0 %v834
        %978 = vmatprep.subr.bf16.mxu0 %v865
        %979 = vmatpush2.bf16.msra.mxu0 %v864
        %980 = vmatprep.subr.bf16.mxu0 %v863
        %981 = vmatpush2.bf16.msra.mxu0 %v862
        %982 = vmatprep.subr.bf16.mxu0 %v861
        %983 = vmatpush2.bf16.msra.mxu0 %v860
        %984 = vmatprep.subr.bf16.mxu0 %v859
        %985 = vmatpush2.bf16.msra.mxu0 %v858
        %986 = vmatprep.subr.bf16.mxu0 %v857
        %987 = vmatpush2.bf16.msra.mxu0 %v856
        %988 = vmatprep.subr.bf16.mxu0 %v855
        %989 = vmatpush2.bf16.msra.mxu0 %v854
        %990 = vmatprep.subr.bf16.mxu0 %v853
        %991 = vmatpush2.bf16.msra.mxu0 %v852
        %992 = vmatprep.subr.bf16.mxu0 %v851
        %993 = vmatpush2.bf16.msra.mxu0 %v850
        %994 = vmatprep.mubr.bf16.mxu0 %v635
        %995 = vmatmul.mubr.bf16.gmra.mxu0 %v634
        %v996 = vpop.f32.mrf.mxu0
        %v997 = vadd.f32 0.0, %v996
        %v998 = vpop.f32.mrf.mxu0
        %v999 = vadd.f32 0.0, %v998
        %v1000 = vpop.f32.mrf.mxu0
        %v1001 = vadd.f32 0.0, %v1000
        %v1002 = vpop.f32.mrf.mxu0
        %v1003 = vadd.f32 0.0, %v1002
        %1004 = vdwg.mxu0
        %1005 = vmatprep.subr.bf16.mxu0 %v881
        %1006 = vmatpush1.bf16.msra.mxu0 %v880
        %1007 = vmatprep.subr.bf16.mxu0 %v879
        %1008 = vmatpush1.bf16.msra.mxu0 %v878
        %1009 = vmatprep.subr.bf16.mxu0 %v877
        %1010 = vmatpush1.bf16.msra.mxu0 %v876
        %1011 = vmatprep.subr.bf16.mxu0 %v875
        %1012 = vmatpush1.bf16.msra.mxu0 %v874
        %1013 = vmatprep.subr.bf16.mxu0 %v873
        %1014 = vmatpush1.bf16.msra.mxu0 %v872
        %1015 = vmatprep.subr.bf16.mxu0 %v871
        %1016 = vmatpush1.bf16.msra.mxu0 %v870
        %1017 = vmatprep.subr.bf16.mxu0 %v869
        %1018 = vmatpush1.bf16.msra.mxu0 %v868
        %1019 = vmatprep.subr.bf16.mxu0 %v867
        %1020 = vmatpush1.bf16.msra.mxu0 %v866
        %1021 = vmatprep.subr.bf16.mxu0 %v897
        %1022 = vmatpush2.bf16.msra.mxu0 %v896
        %1023 = vmatprep.subr.bf16.mxu0 %v895
        %1024 = vmatpush2.bf16.msra.mxu0 %v894
        %1025 = vmatprep.subr.bf16.mxu0 %v893
        %1026 = vmatpush2.bf16.msra.mxu0 %v892
        %1027 = vmatprep.subr.bf16.mxu0 %v891
        %1028 = vmatpush2.bf16.msra.mxu0 %v890
        %1029 = vmatprep.subr.bf16.mxu0 %v889
        %1030 = vmatpush2.bf16.msra.mxu0 %v888
        %1031 = vmatprep.subr.bf16.mxu0 %v887
        %1032 = vmatpush2.bf16.msra.mxu0 %v886
        %1033 = vmatprep.subr.bf16.mxu0 %v885
        %1034 = vmatpush2.bf16.msra.mxu0 %v884
        %1035 = vmatprep.subr.bf16.mxu0 %v883
        %1036 = vmatpush2.bf16.msra.mxu0 %v882
        %1037 = vmatprep.mubr.bf16.mxu0 %v637
        %1038 = vmatmul.mubr.bf16.gmra.mxu0 %v636
        %v1039 = vpop.f32.mrf.mxu0
        %v1040 = vadd.f32 %v997, %v1039
        %v1041 = vpop.f32.mrf.mxu0
        %v1042 = vadd.f32 %v999, %v1041
        %v1043 = vpop.f32.mrf.mxu0
        %v1044 = vadd.f32 %v1001, %v1043
        %v1045 = vpop.f32.mrf.mxu0
        %v1046 = vadd.f32 %v1003, %v1045
        %1047 = vdwg.mxu0
        %v1048 = vadd.f32 %v550, %v1040
        %v1049 = vadd.f32 %v551, %v1042
        %v1050 = vadd.f32 %v552, %v1044
        %v1051 = vadd.f32 %v553, %v1046
        %1052 = vst [vmem:[#allocation4] sm:$0xff] %v1048
        %1053 = vst [vmem:[#allocation4 + $0x8] sm:$0xff] %v1049
        %1054 = vst [vmem:[#allocation4 + $0x10] sm:$0x1] %v1050
        %1055 = vst [vmem:[#allocation4 + $0x18] sm:$0x1] %v1051
        %p1056 = scmp.eq.s32.totalorder %s24, 1
        // Predicated region
        $region75: #{posenet_forward.5} parent=61 // pred_check
          %p1057 = pneg %p1056
        $region76: #{posenet_forward.5} parent=61 // pred_check_branch
          %1059 = sbr.rel (%p1057) target = $region78
        $region77: #{posenet_forward.5} parent=61 // pred_region
          %v1060 = vld [vmem:[#allocation4] sm:$0xff]
          %v1061 = vld [vmem:[#allocation4 + $0x8] sm:$0xff]
          %v1062 = vld [vmem:[#allocation4 + $0x10] sm:$0x1]
          %v1063 = vld [vmem:[#allocation4 + $0x18] sm:$0x1]
          %v1064 = vld [vmem:[%s299] sm:$0x3]
          %v1066 = vlaneseq
          %v1067 = vshrl.u32 %v1066, 7
          %v1068 = vsub.s32 0, %v1067
          %v1069 = vrot.slane %v1064, %v1068
          %v1070 = vlaneseq
          %v1071 = vshrl.u32 %v1070, 7
          %v1072 = vsub.s32 1, %v1071
          %v1073 = vrot.slane %v1064, %v1072
          %v1076 = vadd.f32 %v1060, %v1069
          %v1077 = vadd.f32 %v1061, %v1073
          %v1078 = vadd.f32 %v1062, %v1069
          %v1079 = vadd.f32 %v1063, %v1073
          %v1080 = vmax.f32 %v1076, 0.0
          %v1081 = vmax.f32 %v1077, 0.0
          %v1082 = vmax.f32 %v1078, 0.0
          %v1083 = vmax.f32 %v1079, 0.0
          %v1084 = vpack.c.bf16 %v1082, %v1080
          %v1085 = vpack.c.bf16 %v1083, %v1081
          %v1088 = vunpack.c.l.b16 %v1084
          %v1089 = vunpack.c.l.b16 %v1085
          %v1090 = vunpack.c.h.b16 %v1084
          %v1091 = vunpack.c.h.b16 %v1085
          %v1092 = vpack.c.b16 %v1089, %v1088
          %v1093 = vpack.c.b16 %v1091, %v1090
          %1096 = vst [vmem:[%s308] sm:$0xff] %v1092
          %v1097 = vld [vmem:[%s308 + $0x8] sm:$0x11]
          %v1098 = vsel %vm543, %v1093, %v1097
          %1099 = vst [vmem:[%s308 + $0x8] sm:$0x11] %v1098
        $region78: #{posenet_forward.5} parent=61 // pred_fallthru
          _
        %p1100 = scmp.lt.s32.totalorder %s22, 0
        %s1101 = scalar_select %p1100, %s22, 0
        %p1102 = scmp.lt.s32.totalorder %s23, 1
        %s1103 = scalar_select %p1102, %s23, 1
        %s1104 = smul.addr %s1103, 4
        %s1105 = smul.addr %s1101, 8
        %s1106 = sadd.s32 %s1104, %s1105
        %s1107 = smul.addr %s1106, 4
        %s1108 = scalar_lea.vmem %s3, %s1107
        // Predicated region
        $region79: #{posenet_forward.5} parent=61 // pred_check
          %p1109 = pneg %p140
        $region80: #{posenet_forward.5} parent=61 // pred_check_branch
          %1111 = sbr.rel (%p1109) target = $region82
        $region81: #{posenet_forward.5} parent=61 // pred_region
          _
        $region82: #{posenet_forward.5} parent=61 // pred_fallthru
          _
      $region62: #{posenet_forward.5} parent=5 // pred_fallthru
        _
      %p1112 = scmp.le.s32.totalorder 2, %s12
      // Predicated region
      $region83: #{posenet_forward.5} parent=5 // pred_check
        %p1113 = pneg %p1112
      $region84: #{posenet_forward.5} parent=5 // pred_check_branch
        %1115 = sbr.rel (%p1113) target = $region86
      $region85: #{posenet_forward.5} parent=5 // pred_region
        %s1116 = ssub.s32 %s12, 2
        // Predicated region
        $region87: #{posenet_forward.5} parent=85 // pred_check
          %p1117 = pneg %p146
        $region88: #{posenet_forward.5} parent=85 // pred_check_branch
          %1119 = sbr.rel (%p1117) target = $region90
        $region89: #{posenet_forward.5} parent=85 // pred_region
          %p1120 = scmp.lt.s32.totalorder %s25, 0
          %s1121 = scalar_select %p1120, %s25, 0
          %p1122 = scmp.lt.s32.totalorder %s26, 1
          %s1123 = scalar_select %p1122, %s26, 1
          %s1124 = smul.addr %s1123, 4
          %s1125 = smul.addr %s1121, 8
          %s1126 = sadd.s32 %s1124, %s1125
          %s1127 = smul.addr %s1126, 4
          %s1128 = scalar_lea.vmem %s3, %s1127
        $region90: #{posenet_forward.5} parent=85 // pred_fallthru
          _
      $region86: #{posenet_forward.5} parent=5 // pred_fallthru
        _
    $region6: #{posenet_forward.5} parent=1 // loop_footer
      %s16 = sadd.s32 1, %s12
    $region7: #{posenet_forward.5} parent=1 // loop_footer_branch
      %11 = sbr.rel target = $region3
    $region8: #{posenet_forward.5} parent=1 // loop_exit
      _
    %1129 = vsyncpa [#allocation7], 1
    %s1130 = scalar_lea.sflag [#allocation7], 1
    %1131 = vsyncpa %s1130, 1

// kernel: posenet_forward.6
$region0: #{posenet_forward.6}
  #allocation0 [shape = 'u32[]', space=smem, size = 0x4, offset = 0x4, fixed_abs, tag = 'smem constant byte address 0x4 - core index']
  #allocation1 [shape = 'u32[144,128]{1,0:T(1,128)}', space=vmem, size = 0x12000, scoped, tag = 'internal scratch']
  #allocation2 [shape = 'bf16[6,6,32]{2,1,0:T(8,128)(2,1)}', space=vmem, size = 0x3000, scoped, tag = 'scratch operand']
  #allocation3 [shape = 'bf16[25,128]{1,0:T(8,128)(2,1)}', space=vmem, size = 0x2000, scoped, tag = 'scratch operand']
  %s0 = inlined_call_operand.vmem [shape: bf16[2,2,4,4,32], index: 0, kind: input, shape index: {}]
  %s1 = inlined_call_operand.vmem [shape: bf16[2,128,128], index: 1, kind: input, shape index: {}]
  %s2 = inlined_call_operand.vmem [shape: f32[2,1,128], index: 2, kind: input, shape index: {}]
  %s3 = inlined_call_operand.vmem [shape: bf16[2,2,25,128], index: 3, kind: output, shape index: {}]
  %s4 = sld [smem:[#allocation0]]
  $region45: #{posenet_forward.6} parent=0
    _
  %s6 = ssub.s32 1, %s4
  %s7 = scalar_select 0, %s6, %s4
  loop: start=0, step=1, limit=6
  $region2: #{posenet_forward.6} parent=0 // loop_pre_header
    _
  $region3: #{posenet_forward.6} parent=0 // loop_header
    %s9 = sphi 0, %s13
    %p10 = scmp.ge.s32.totalorder %s9, 6
    %s16 = sphi 0, %s28
    %s17 = sphi 0, %s24
    %s18 = sphi 0, %s16
    %s19 = sphi 0, %s17
    %s20 = sphi 0, %s18
    %s21 = sphi 0, %s19
    %s33 = sphi 0, %s35
    %s36 = sphi 0, %s33
    %s37 = sphi 0, %s36
    %s53 = sphi 0, %s37
    %s59 = sphi 0, %s61
    %s62 = sphi 0, %s59
    %s63 = sphi 0, %s62
    %s79 = sphi 0, %s63
    %s85 = sphi 0, %s87
    %s88 = sphi 0, %s85
    %s89 = sphi 0, %s88
    %s105 = sphi 0, %s89
    %s113 = sphi 0, %s115
    %s116 = sphi 0, %s113
    %s117 = sphi 0, %s116
    %s133 = sphi 0, %s117
  $region4: #{posenet_forward.6} parent=0 // loop_header_branch
    %12 = sbr.rel (%p10) target = $region8
  $region5: #{posenet_forward.6} parent=0 // loop_body
    %s14 = ssub.s32 %s9, 1
    %s15 = ssub.s32 %s9, 2
    %s22 = sadd.s32 1, %s17
    %p23 = scmp.ge.s32.totalorder %s22, 2
    %s24 = scalar_select %p23, 0, %s22
    %s25 = sadd.s32 1, %s16
    %s26 = scalar_select %p23, %s25, %s16
    %p27 = scmp.ge.s32.totalorder %s26, 2
    %s28 = scalar_select %p27, 0, %s26
    %s29 = ssub.s32 %s16, %s28
    %s30 = ssub.s32 %s17, %s24
    %s31 = sor.u32 %s29, %s30
    %p32 = scmp.eq.s32.totalorder %s31, 0
    %s34 = sadd.s32 %s33, 1
    %s35 = scalar_select %p32, %s33, %s34
    %p38 = pneg %p32
    %p39 = scmp.eq.s32.totalorder %s9, 3
    %p40 = por %p38, %p39
    %p41 = scmp.ne.s32.totalorder %s33, %s36
    %p42 = scmp.eq.s32.totalorder %s9, 0
    %p43 = por %p41, %p42
    %p44 = scmp.ne.s32.totalorder %s33, %s36
    %p45 = scmp.eq.s32.totalorder %s14, 3
    %p46 = por %p44, %p45
    %p47 = scmp.ne.s32.totalorder %s36, %s37
    %p48 = scmp.eq.s32.totalorder %s14, 0
    %p49 = por %p47, %p48
    %p50 = scmp.ne.s32.totalorder %s36, %s37
    %p51 = scmp.eq.s32.totalorder %s15, 3
    %p52 = por %p50, %p51
    %p54 = scmp.ne.s32.totalorder %s37, %s53
    %p55 = scmp.eq.s32.totalorder %s15, 0
    %p56 = por %p54, %p55
    %s57 = ssub.s32 %s16, %s28
    %p58 = scmp.eq.s32.totalorder %s57, 0
    %s60 = sadd.s32 %s59, 1
    %s61 = scalar_select %p58, %s59, %s60
    %p64 = pneg %p58
    %p65 = scmp.eq.s32.totalorder %s9, 3
    %p66 = por %p64, %p65
    %p67 = scmp.ne.s32.totalorder %s59, %s62
    %p68 = scmp.eq.s32.totalorder %s9, 0
    %p69 = por %p67, %p68
    %p70 = scmp.ne.s32.totalorder %s59, %s62
    %p71 = scmp.eq.s32.totalorder %s14, 3
    %p72 = por %p70, %p71
    %p73 = scmp.ne.s32.totalorder %s62, %s63
    %p74 = scmp.eq.s32.totalorder %s14, 0
    %p75 = por %p73, %p74
    %p76 = scmp.ne.s32.totalorder %s62, %s63
    %p77 = scmp.eq.s32.totalorder %s15, 3
    %p78 = por %p76, %p77
    %p80 = scmp.ne.s32.totalorder %s63, %s79
    %p81 = scmp.eq.s32.totalorder %s15, 0
    %p82 = por %p80, %p81
    %s83 = ssub.s32 %s16, %s28
    %p84 = scmp.eq.s32.totalorder %s83, 0
    %s86 = sadd.s32 %s85, 1
    %s87 = scalar_select %p84, %s85, %s86
    %p90 = pneg %p84
    %p91 = scmp.eq.s32.totalorder %s9, 3
    %p92 = por %p90, %p91
    %p93 = scmp.ne.s32.totalorder %s85, %s88
    %p94 = scmp.eq.s32.totalorder %s9, 0
    %p95 = por %p93, %p94
    %p96 = scmp.ne.s32.totalorder %s85, %s88
    %p97 = scmp.eq.s32.totalorder %s14, 3
    %p98 = por %p96, %p97
    %p99 = scmp.ne.s32.totalorder %s88, %s89
    %p100 = scmp.eq.s32.totalorder %s14, 0
    %p101 = por %p99, %p100
    %p102 = scmp.ne.s32.totalorder %s88, %s89
    %p103 = scmp.eq.s32.totalorder %s15, 3
    %p104 = por %p102, %p103
    %p106 = scmp.ne.s32.totalorder %s89, %s105
    %p107 = scmp.eq.s32.totalorder %s15, 0
    %p108 = por %p106, %p107
    %s109 = ssub.s32 %s16, %s28
    %s110 = ssub.s32 %s17, %s24
    %s111 = sor.u32 %s109, %s110
    %p112 = scmp.eq.s32.totalorder %s111, 0
    %s114 = sadd.s32 %s113, 1
    %s115 = scalar_select %p112, %s113, %s114
    %p118 = pneg %p112
    %p119 = scmp.eq.s32.totalorder %s9, 3
    %p120 = por %p118, %p119
    %p121 = scmp.ne.s32.totalorder %s113, %s116
    %p122 = scmp.eq.s32.totalorder %s9, 0
    %p123 = por %p121, %p122
    %p124 = scmp.ne.s32.totalorder %s113, %s116
    %p125 = scmp.eq.s32.totalorder %s14, 3
    %p126 = por %p124, %p125
    %p127 = scmp.ne.s32.totalorder %s116, %s117
    %p128 = scmp.eq.s32.totalorder %s14, 0
    %p129 = por %p127, %p128
    %p130 = scmp.ne.s32.totalorder %s116, %s117
    %p131 = scmp.eq.s32.totalorder %s15, 3
    %p132 = por %p130, %p131
    %p134 = scmp.ne.s32.totalorder %s117, %s133
    %p135 = scmp.eq.s32.totalorder %s15, 0
    %p136 = por %p134, %p135
    %p137 = scmp.le.s32.totalorder 1, %s9
    %p138 = scmp.lt.s32.totalorder %s9, 5
    %p139 = pnand %p137, %p138
    %p140 = pneg %p139
    // Predicated region
    $region9: #{posenet_forward.6} parent=5 // pred_check
      _
    $region10: #{posenet_forward.6} parent=5 // pred_check_branch
      %142 = sbr.rel (%p139) target = $region12
    $region11: #{posenet_forward.6} parent=5 // pred_region
      %s143 = ssub.s32 %s9, 1
    $region12: #{posenet_forward.6} parent=5 // pred_fallthru
      _
    %p144 = scmp.lt.s32.totalorder %s9, 4
    // Predicated region
    $region13: #{posenet_forward.6} parent=5 // pred_check
      %p145 = pneg %p144
    $region14: #{posenet_forward.6} parent=5 // pred_check_branch
      %147 = sbr.rel (%p145) target = $region16
    $region15: #{posenet_forward.6} parent=5 // pred_region
      // Predicated region
      $region17: #{posenet_forward.6} parent=15 // pred_check
        %p148 = pneg %p43
      $region18: #{posenet_forward.6} parent=15 // pred_check_branch
        %150 = sbr.rel (%p148) target = $region20
      $region19: #{posenet_forward.6} parent=15 // pred_region
        %p151 = scmp.lt.s32.totalorder %s16, 1
        %s152 = scalar_select %p151, %s16, 1
        %p153 = scmp.lt.s32.totalorder %s17, 1
        %s154 = scalar_select %p153, %s17, 1
        %s155 = smul.addr %s154, 4
        %s156 = smul.addr %s152, 8
        %s157 = sadd.s32 %s155, %s156
        %s158 = smul.addr %s157, 2
        %s159 = scalar_lea.vmem %s0, %s158
      $region20: #{posenet_forward.6} parent=15 // pred_fallthru
        _
      // Predicated region
      $region21: #{posenet_forward.6} parent=15 // pred_check
        %p160 = pneg %p69
      $region22: #{posenet_forward.6} parent=15 // pred_check_branch
        %162 = sbr.rel (%p160) target = $region24
      $region23: #{posenet_forward.6} parent=15 // pred_region
        %p163 = scmp.lt.s32.totalorder %s16, 1
        %s164 = scalar_select %p163, %s16, 1
        %s165 = smul.addr %s164, 16
        %s166 = smul.addr %s165, 4
        %s167 = scalar_lea.vmem %s1, %s166
      $region24: #{posenet_forward.6} parent=15 // pred_fallthru
        _
      // Predicated region
      $region25: #{posenet_forward.6} parent=15 // pred_check
        %p168 = pneg %p95
      $region26: #{posenet_forward.6} parent=15 // pred_check_branch
        %170 = sbr.rel (%p168) target = $region28
      $region27: #{posenet_forward.6} parent=15 // pred_region
        %p171 = scmp.lt.s32.totalorder %s16, 1
        %s172 = scalar_select %p171, %s16, 1
        %s173 = scalar_lea.vmem %s2, %s172
      $region28: #{posenet_forward.6} parent=15 // pred_fallthru
        _
    $region16: #{posenet_forward.6} parent=5 // pred_fallthru
      _
    %p174 = scmp.le.s32.totalorder 1, %s9
    %p175 = scmp.lt.s32.totalorder %s9, 5
    %p176 = pnand %p174, %p175
    %p177 = pneg %p176
    // Predicated region
    $region29: #{posenet_forward.6} parent=5 // pred_check
      _
    $region30: #{posenet_forward.6} parent=5 // pred_check_branch
      %179 = sbr.rel (%p176) target = $region32
    $region31: #{posenet_forward.6} parent=5 // pred_region
      %s180 = ssub.s32 %s9, 1
      %p181 = scmp.lt.s32.totalorder %s18, 1
      %s182 = scalar_select %p181, %s18, 1
      %p183 = scmp.lt.s32.totalorder %s19, 1
      %s184 = scalar_select %p183, %s19, 1
      %s185 = smul.addr %s184, 4
      %s186 = smul.addr %s182, 8
      %s187 = sadd.s32 %s185, %s186
      %s188 = smul.addr %s187, 2
      %s189 = scalar_lea.vmem %s0, %s188
      %p190 = pneg %p49
      %p191 = pneg %p46
      %p192 = scmp.lt.s32.totalorder %s18, 1
      %s193 = scalar_select %p192, %s18, 1
      %s194 = smul.addr %s193, 16
      %s195 = smul.addr %s194, 4
      %s196 = scalar_lea.vmem %s1, %s195
      %p197 = pneg %p75
      %p198 = pneg %p72
      %p199 = scmp.lt.s32.totalorder %s18, 1
      %s200 = scalar_select %p199, %s18, 1
      %s201 = scalar_lea.vmem %s2, %s200
      %p202 = pneg %p101
      %p203 = pneg %p98
      %p204 = pneg %p129
      %p205 = pneg %p126
      %p206 = scmp.lt.s32.totalorder %s18, 1
      %s207 = scalar_select %p206, %s18, 1
      %p208 = scmp.lt.s32.totalorder %s19, 1
      %s209 = scalar_select %p208, %s19, 1
      %s210 = smul.addr %s209, 4
      %s211 = smul.addr %s207, 8
      %s212 = sadd.s32 %s210, %s211
      %s213 = smul.addr %s212, 4
      %s214 = scalar_lea.vmem %s3, %s213
      %p215 = scmp.lt.s32.totalorder %s18, 1
      %s216 = scalar_select %p215, %s18, 1
      %p217 = scmp.lt.s32.totalorder %s19, 1
      %s218 = scalar_select %p217, %s19, 1
      %s219 = smul.addr %s218, 4
      %s220 = smul.addr %s216, 8
      %s221 = sadd.s32 %s219, %s220
      %s222 = smul.addr %s221, 2
      %s223 = scalar_lea.vmem %s0, %s222
      %p224 = scmp.lt.s32.totalorder %s18, 1
      %s225 = scalar_select %p224, %s18, 1
      %s226 = smul.addr %s225, 16
      %s227 = smul.addr %s226, 4
      %s228 = scalar_lea.vmem %s1, %s227
      %p229 = scmp.lt.s32.totalorder %s18, 1
      %s230 = scalar_select %p229, %s18, 1
      %s231 = scalar_lea.vmem %s2, %s230
      %p232 = scmp.lt.s32.totalorder %s18, 1
      %s233 = scalar_select %p232, %s18, 1
      %p234 = scmp.lt.s32.totalorder %s19, 1
      %s235 = scalar_select %p234, %s19, 1
      %s236 = smul.addr %s235, 4
      %s237 = smul.addr %s233, 8
      %s238 = sadd.s32 %s236, %s237
      %s239 = smul.addr %s238, 4
      %s240 = scalar_lea.vmem %s3, %s239
      %vm242 = vcmask 256000
      %243 = vst.msk [vmem:[#allocation2] sm:$0x7] %vm242, 0
      %244 = vst.msk [vmem:[#allocation2 + $0x4] sm:$0x7] %vm242, 0
      %245 = vst.msk [vmem:[#allocation2 + $0x8] sm:$0x7] %vm242, 0
      %246 = vst.msk [vmem:[#allocation2 + $0xc] sm:$0x7] %vm242, 0
      %247 = vst.msk [vmem:[#allocation2 + $0x10] sm:$0x7] %vm242, 0
      %248 = vst.msk [vmem:[#allocation2 + $0x14] sm:$0x7] %vm242, 0
      %v249 = vld [vmem:[%s223] sm:$0x3]
      %v250 = vld [vmem:[%s223 + $0x2] sm:$0x3]
      %v251 = vld [vmem:[%s223 + $0x4] sm:$0x3]
      %v252 = vld [vmem:[%s223 + $0x6] sm:$0x3]
      %v258 = vunpack.c.l.s4 1983009808
      %v259 = vunpack.c.0.s8 %v258
      %v260 = vlaneseq
      %v261 = vshrl.u32 %v260, 7
      %v262 = vsub.s32 %v259, %v261
      %v263 = vrot.slane %v249, %v262
      %v265 = vunpack.c.l.s4 1983009808
      %v266 = vunpack.c.0.s8 %v265
      %v267 = vlaneseq
      %v268 = vshrl.u32 %v267, 7
      %v269 = vsub.s32 %v266, %v268
      %v270 = vrot.slane %v250, %v269
      %v272 = vunpack.c.l.s4 1983009808
      %v273 = vunpack.c.0.s8 %v272
      %v274 = vlaneseq
      %v275 = vshrl.u32 %v274, 7
      %v276 = vsub.s32 %v273, %v275
      %v277 = vrot.slane %v251, %v276
      %v279 = vunpack.c.l.s4 1983009808
      %v280 = vunpack.c.0.s8 %v279
      %v281 = vlaneseq
      %v282 = vshrl.u32 %v281, 7
      %v283 = vsub.s32 %v280, %v282
      %v284 = vrot.slane %v252, %v283
      %v286 = vshrl.u32 %v263, 16
      %v288 = vrot.slane %v286, 7
      %v289 = vshll.u32 %v263, 16
      %v291 = vor.u32 %v288, %v289
      %v293 = vshrl.u32 %v270, 16
      %v295 = vrot.slane %v293, 7
      %v296 = vshll.u32 %v270, 16
      %v298 = vor.u32 %v295, %v296
      %v300 = vshrl.u32 %v277, 16
      %v302 = vrot.slane %v300, 7
      %v303 = vshll.u32 %v277, 16
      %v305 = vor.u32 %v302, %v303
      %v307 = vshrl.u32 %v284, 16
      %v309 = vrot.slane %v307, 7
      %v310 = vshll.u32 %v284, 16
      %v312 = vor.u32 %v309, %v310
      %s317 = scalar_lea.vmem [#allocation2], 4
      %vm318 = vcmask 256000
      %vm319 = vsmask.f32 2306
      %vm320 = vmand %vm318, %vm319
      %v321 = vld [vmem:[%s317] sm:$0x7]
      %v322 = vsel %vm320, %v291, %v321
      %323 = vst [vmem:[%s317] sm:$0x7] %v322
      %v324 = vld [vmem:[%s317 + $0x4] sm:$0x7]
      %v325 = vsel %vm320, %v298, %v324
      %326 = vst [vmem:[%s317 + $0x4] sm:$0x7] %v325
      %v327 = vld [vmem:[%s317 + $0x8] sm:$0x7]
      %v328 = vsel %vm320, %v305, %v327
      %329 = vst [vmem:[%s317 + $0x8] sm:$0x7] %v328
      %v330 = vld [vmem:[%s317 + $0xc] sm:$0x7]
      %v331 = vsel %vm320, %v312, %v330
      %332 = vst [vmem:[%s317 + $0xc] sm:$0x7] %v331
      %v333 = vld [vmem:[#allocation2] sm:$0x7]
      %v334 = vld [vmem:[%s317] sm:$0x7]
      %v336 = vunpack.c.l.b16 %v333
      %v337 = vpack.c.b16 %v336, %v336
      %v339 = vshrl.u32 %v337, 16
      %v341 = vshll.u32 %v337, 16
      %v343 = vrot.slane %v341, 1
      %v344 = vor.u32 %v339, %v343
      %345 = vrot.lane.b32.xlu0 %v344, 32
      %v346 = vpop.permute.xlu0 %345
      %v348 = vunpack.c.l.b16 %v334
      %v349 = vpack.c.b16 %v348, %v348
      %350 = vrot.lane.b32.xlu0 %v349, 64
      %v351 = vpop.permute.xlu0 %350
      %v353 = vshrl.u32 %v349, 16
      %v355 = vshll.u32 %v349, 16
      %v357 = vrot.slane %v355, 1
      %v358 = vor.u32 %v353, %v357
      %359 = vrot.lane.b32.xlu0 %v358, 96
      %v360 = vpop.permute.xlu0 %359
      %vm361 = vcmask 261120
      %v364 = vsel %vm361, %v333, %v346
      %vm365 = vcmask 523264
      %v367 = vsel %vm365, %v364, %v351
      %vm368 = vcmask 785408
      %v370 = vsel %vm368, %v367, %v360
      %vm372 = vcmask 1042432
      %vm373 = vsmask.f32 2304
      %vm374 = vmand %vm372, %vm373
      %v375 = vld [vmem:[#allocation3] sm:$0x7]
      %v376 = vsel %vm374, %v370, %v375
      %377 = vst [vmem:[#allocation3] sm:$0x7] %v376
      %v378 = vld [vmem:[%s317] sm:$0x7]
      %s379 = scalar_lea.vmem [#allocation2], 8
      %v380 = vld [vmem:[%s379] sm:$0x7]
      %v382 = vunpack.c.l.b16 %v378
      %v383 = vpack.c.b16 %v382, %v382
      %v385 = vshrl.u32 %v383, 16
      %v387 = vshll.u32 %v383, 16
      %v389 = vrot.slane %v387, 1
      %v390 = vor.u32 %v385, %v389
      %391 = vrot.lane.b32.xlu0 %v390, 32
      %v392 = vpop.permute.xlu0 %391
      %v394 = vunpack.c.l.b16 %v380
      %v395 = vpack.c.b16 %v394, %v394
      %396 = vrot.lane.b32.xlu0 %v395, 64
      %v397 = vpop.permute.xlu0 %396
      %v399 = vshrl.u32 %v395, 16
      %v401 = vshll.u32 %v395, 16
      %v403 = vrot.slane %v401, 1
      %v404 = vor.u32 %v399, %v403
      %405 = vrot.lane.b32.xlu0 %v404, 96
      %v406 = vpop.permute.xlu0 %405
      %v409 = vsel %vm361, %v378, %v392
      %v411 = vsel %vm365, %v409, %v397
      %v413 = vsel %vm368, %v411, %v406
      %v415 = vunpack.c.l.b16 %v413
      %v416 = vpack.c.b16 %v415, %v415
      %v418 = vshrl.u32 %v416, 16
      %v420 = vrot.slane %v418, 5
      %v421 = vshll.u32 %v416, 16
      %v423 = vrot.slane %v421, 6
      %v424 = vor.u32 %v420, %v423
      %v425 = vrot.slane %v424, 4
      %vm428 = vcmask 1043458
      %vm429 = vsmask.f32 7946
      %vm430 = vmand %vm428, %vm429
      %v431 = vld [vmem:[#allocation3] sm:$0xc]
      %v432 = vsel %vm430, %v424, %v431
      %433 = vst [vmem:[#allocation3] sm:$0xc] %v432
      %434 = vst [vmem:[#allocation3 + $0x4] sm:$0x1] %v425
      %v435 = vld [vmem:[%s379] sm:$0x7]
      %s436 = scalar_lea.vmem [#allocation2], 12
      %v437 = vld [vmem:[%s436] sm:$0x7]
      %v439 = vunpack.c.l.b16 %v435
      %v440 = vpack.c.b16 %v439, %v439
      %v442 = vshrl.u32 %v440, 16
      %v444 = vshll.u32 %v440, 16
      %v446 = vrot.slane %v444, 1
      %v447 = vor.u32 %v442, %v446
      %448 = vrot.lane.b32.xlu0 %v447, 32
      %v449 = vpop.permute.xlu0 %448
      %v451 = vunpack.c.l.b16 %v437
      %v452 = vpack.c.b16 %v451, %v451
      %453 = vrot.lane.b32.xlu0 %v452, 64
      %v454 = vpop.permute.xlu0 %453
      %v456 = vshrl.u32 %v452, 16
      %v458 = vshll.u32 %v452, 16
      %v460 = vrot.slane %v458, 1
      %v461 = vor.u32 %v456, %v460
      %462 = vrot.lane.b32.xlu0 %v461, 96
      %v463 = vpop.permute.xlu0 %462
      %v466 = vsel %vm361, %v435, %v449
      %v468 = vsel %vm365, %v466, %v454
      %v470 = vsel %vm368, %v468, %v463
      %v472 = vunpack.c.l.b16 %v470
      %v473 = vpack.c.b16 %v472, %v472
      %v474 = vrot.slane %v473, 7
      %vm476 = vcmask 1043457
      %vm477 = vsmask.f32 3328
      %vm478 = vmand %vm476, %vm477
      %v479 = vld [vmem:[#allocation3 + $0x4] sm:$0xe]
      %v480 = vsel %vm478, %v474, %v479
      %481 = vst [vmem:[#allocation3 + $0x4] sm:$0xe] %v480
      %v482 = vld [vmem:[%s436] sm:$0x7]
      %s483 = scalar_lea.vmem [#allocation2], 16
      %v484 = vld [vmem:[%s483] sm:$0x7]
      %v486 = vunpack.c.l.b16 %v482
      %v487 = vpack.c.b16 %v486, %v486
      %v489 = vshrl.u32 %v487, 16
      %v491 = vshll.u32 %v487, 16
      %v493 = vrot.slane %v491, 1
      %v494 = vor.u32 %v489, %v493
      %495 = vrot.lane.b32.xlu0 %v494, 32
      %v496 = vpop.permute.xlu0 %495
      %v498 = vunpack.c.l.b16 %v484
      %v499 = vpack.c.b16 %v498, %v498
      %500 = vrot.lane.b32.xlu0 %v499, 64
      %v501 = vpop.permute.xlu0 %500
      %v503 = vshrl.u32 %v499, 16
      %v505 = vshll.u32 %v499, 16
      %v507 = vrot.slane %v505, 1
      %v508 = vor.u32 %v503, %v507
      %509 = vrot.lane.b32.xlu0 %v508, 96
      %v510 = vpop.permute.xlu0 %509
      %v513 = vsel %vm361, %v482, %v496
      %v515 = vsel %vm365, %v513, %v501
      %v517 = vsel %vm368, %v515, %v510
      %v519 = vunpack.c.l.b16 %v517
      %v520 = vpack.c.b16 %v519, %v519
      %v522 = vshll.u32 %v520, 16
      %v524 = vrot.slane %v522, 5
      %v525 = vshrl.u32 %v520, 16
      %v527 = vrot.slane %v525, 4
      %v528 = vor.u32 %v527, %v524
      %v529 = vrot.slane %v528, 4
      %vm532 = vcmask 1043459
      %vm533 = vsmask.f32 7950
      %vm534 = vmand %vm532, %vm533
      %v535 = vld [vmem:[#allocation3 + $0x4] sm:$0x8]
      %v536 = vsel %vm534, %v524, %v535
      %537 = vst [vmem:[#allocation3 + $0x4] sm:$0x8] %v536
      %538 = vst [vmem:[#allocation3 + $0x8] sm:$0x3] %v529
      %v539 = vld [vmem:[%s483] sm:$0x7]
      %s540 = scalar_lea.vmem [#allocation2], 20
      %v541 = vld [vmem:[%s540] sm:$0x7]
      %v543 = vunpack.c.l.b16 %v539
      %v544 = vpack.c.b16 %v543, %v543
      %v546 = vshrl.u32 %v544, 16
      %v548 = vshll.u32 %v544, 16
      %v550 = vrot.slane %v548, 1
      %v551 = vor.u32 %v546, %v550
      %552 = vrot.lane.b32.xlu0 %v551, 32
      %v553 = vpop.permute.xlu0 %552
      %v555 = vunpack.c.l.b16 %v541
      %v556 = vpack.c.b16 %v555, %v555
      %557 = vrot.lane.b32.xlu0 %v556, 64
      %v558 = vpop.permute.xlu0 %557
      %v560 = vshrl.u32 %v556, 16
      %v562 = vshll.u32 %v556, 16
      %v564 = vrot.slane %v562, 1
      %v565 = vor.u32 %v560, %v564
      %566 = vrot.lane.b32.xlu0 %v565, 96
      %v567 = vpop.permute.xlu0 %566
      %v570 = vsel %vm361, %v539, %v553
      %v572 = vsel %vm365, %v570, %v558
      %v574 = vsel %vm368, %v572, %v567
      %v576 = vunpack.c.l.b16 %v574
      %v577 = vpack.c.b16 %v576, %v576
      %v578 = vrot.slane %v577, 6
      %v579 = vrot.slane %v578, 4
      %582 = vst [vmem:[#allocation3 + $0x8] sm:$0xc] %v578
      %vm583 = vcmask 1040384
      %vm584 = vsmask.f32 256
      %vm585 = vmand %vm583, %vm584
      %v586 = vld [vmem:[#allocation3 + $0xc] sm:$0x1]
      %v587 = vsel %vm585, %v579, %v586
      %588 = vst [vmem:[#allocation3 + $0xc] sm:$0x1] %v587
      %v589 = vld [vmem:[#allocation3] sm:$0xf]
      %v590 = vld [vmem:[#allocation3 + $0x4] sm:$0xf]
      %v591 = vld [vmem:[#allocation3 + $0x8] sm:$0xf]
      %v592 = vld [vmem:[#allocation3 + $0xc] sm:$0x1]
      %v593 = vld [vmem:[%s228] sm:$0xf]
      %v594 = vld [vmem:[%s228 + $0x4] sm:$0xf]
      %v595 = vld [vmem:[%s228 + $0x8] sm:$0xf]
      %v596 = vld [vmem:[%s228 + $0xc] sm:$0xf]
      %v597 = vld [vmem:[%s228 + $0x10] sm:$0xf]
      %v598 = vld [vmem:[%s228 + $0x14] sm:$0xf]
      %v599 = vld [vmem:[%s228 + $0x18] sm:$0xf]
      %v600 = vld [vmem:[%s228 + $0x1c] sm:$0xf]
      %v601 = vld [vmem:[%s228 + $0x20] sm:$0xf]
      %v602 = vld [vmem:[%s228 + $0x24] sm:$0xf]
      %v603 = vld [vmem:[%s228 + $0x28] sm:$0xf]
      %v604 = vld [vmem:[%s228 + $0x2c] sm:$0xf]
      %v605 = vld [vmem:[%s228 + $0x30] sm:$0xf]
      %v606 = vld [vmem:[%s228 + $0x34] sm:$0xf]
      %v607 = vld [vmem:[%s228 + $0x38] sm:$0xf]
      %v608 = vld [vmem:[%s228 + $0x3c] sm:$0xf]
      %v609 = vld [vmem:[%s231] sm:$0x1]
      %v611 = vlaneseq
      %v612 = vshrl.u32 %v611, 7
      %v613 = vsub.s32 0, %v612
      %v614 = vrot.slane %v609, %v613
      %v620 = vunpack.c.l.b16 %v589
      %v621 = vunpack.c.l.b16 %v590
      %v622 = vunpack.c.l.b16 %v591
      %v623 = vunpack.c.l.b16 %v592
      %v624 = vpack.c.b16 %v621, %v620
      %v625 = vpack.c.b16 %v623, %v622
      %v644 = vunpack.c.l.b16 %v593
      %v645 = vunpack.c.l.b16 %v594
      %v646 = vunpack.c.l.b16 %v595
      %v647 = vunpack.c.l.b16 %v596
      %v648 = vunpack.c.l.b16 %v597
      %v649 = vunpack.c.l.b16 %v598
      %v650 = vunpack.c.l.b16 %v599
      %v651 = vunpack.c.l.b16 %v600
      %v652 = vunpack.c.l.b16 %v601
      %v653 = vunpack.c.l.b16 %v602
      %v654 = vunpack.c.l.b16 %v603
      %v655 = vunpack.c.l.b16 %v604
      %v656 = vunpack.c.l.b16 %v605
      %v657 = vunpack.c.l.b16 %v606
      %v658 = vunpack.c.l.b16 %v607
      %v659 = vunpack.c.l.b16 %v608
      %v660 = vpack.c.b16 %v645, %v644
      %v661 = vpack.c.b16 %v647, %v646
      %v662 = vpack.c.b16 %v649, %v648
      %v663 = vpack.c.b16 %v651, %v650
      %v664 = vpack.c.b16 %v653, %v652
      %v665 = vpack.c.b16 %v655, %v654
      %v666 = vpack.c.b16 %v657, %v656
      %v667 = vpack.c.b16 %v659, %v658
      %676 = vmatprep.subr.bf16.mxu0 0
      %677 = vmatpush1.bf16.msra.mxu0 %v667
      %678 = vmatprep.subr.bf16.mxu0 0
      %679 = vmatpush1.bf16.msra.mxu0 %v666
      %680 = vmatprep.subr.bf16.mxu0 0
      %681 = vmatpush1.bf16.msra.mxu0 %v665
      %682 = vmatprep.subr.bf16.mxu0 0
      %683 = vmatpush1.bf16.msra.mxu0 %v664
      %684 = vmatprep.subr.bf16.mxu0 0
      %685 = vmatpush1.bf16.msra.mxu0 %v663
      %686 = vmatprep.subr.bf16.mxu0 0
      %687 = vmatpush1.bf16.msra.mxu0 %v662
      %688 = vmatprep.subr.bf16.mxu0 0
      %689 = vmatpush1.bf16.msra.mxu0 %v661
      %690 = vmatprep.subr.bf16.mxu0 0
      %691 = vmatpush1.bf16.msra.mxu0 %v660
      %692 = vmatprep.subr.bf16.mxu0 0
      %693 = vmatpush2.bf16.msra.mxu0 0
      %694 = vmatprep.subr.bf16.mxu0 0
      %695 = vmatpush2.bf16.msra.mxu0 0
      %696 = vmatprep.subr.bf16.mxu0 0
      %697 = vmatpush2.bf16.msra.mxu0 0
      %698 = vmatprep.subr.bf16.mxu0 0
      %699 = vmatpush2.bf16.msra.mxu0 0
      %700 = vmatprep.subr.bf16.mxu0 0
      %701 = vmatpush2.bf16.msra.mxu0 0
      %702 = vmatprep.subr.bf16.mxu0 0
      %703 = vmatpush2.bf16.msra.mxu0 0
      %704 = vmatprep.subr.bf16.mxu0 0
      %705 = vmatpush2.bf16.msra.mxu0 0
      %706 = vmatprep.subr.bf16.mxu0 0
      %707 = vmatpush2.bf16.msra.mxu0 0
      %708 = vmatprep.mubr.bf16.mxu0 0
      %709 = vmatmul.mubr.bf16.gmra.mxu0 %v624
      %v710 = vpop.f32.mrf.mxu0
      %v711 = vadd.f32 %v614, %v710
      %v712 = vpop.f32.mrf.mxu0
      %v713 = vpop.f32.mrf.mxu0
      %v714 = vadd.f32 %v614, %v713
      %v715 = vpop.f32.mrf.mxu0
      %716 = vmatprep.mubr.bf16.mxu0 0
      %717 = vmatmul.mubr.bf16.gmra.mxu0 %v625
      %v718 = vpop.f32.mrf.mxu0
      %v719 = vadd.f32 %v614, %v718
      %v720 = vpop.f32.mrf.mxu0
      %v721 = vpop.f32.mrf.mxu0
      %v722 = vadd.f32 %v614, %v721
      %v723 = vpop.f32.mrf.mxu0
      %724 = vdwg.mxu0
      %v725 = vmax.f32 %v711, 0.0
      %v726 = vmax.f32 %v714, 0.0
      %v727 = vmax.f32 %v719, 0.0
      %v728 = vmax.f32 %v722, 0.0
      %v729 = vpack.c.bf16 %v726, %v725
      %v730 = vpack.c.bf16 %v728, %v727
      %v733 = vunpack.c.l.b16 %v729
      %v734 = vunpack.c.h.b16 %v729
      %v735 = vunpack.c.l.b16 %v730
      %v736 = vunpack.c.h.b16 %v730
      %v737 = vpack.c.b16 %v733, %v733
      %v738 = vpack.c.b16 %v734, %v734
      %v739 = vpack.c.b16 %v735, %v735
      %v740 = vpack.c.b16 %v736, %v736
      %745 = vst [vmem:[%s240] sm:$0xf] %v737
      %746 = vst [vmem:[%s240 + $0x4] sm:$0xf] %v738
      %747 = vst [vmem:[%s240 + $0x8] sm:$0xf] %v739
      %v748 = vld [vmem:[%s240 + $0xc] sm:$0x1]
      %v749 = vsel %vm585, %v740, %v748
      %750 = vst [vmem:[%s240 + $0xc] sm:$0x1] %v749
      %p751 = scmp.lt.s32.totalorder %s18, 1
      %s752 = scalar_select %p751, %s18, 1
      %p753 = scmp.lt.s32.totalorder %s19, 1
      %s754 = scalar_select %p753, %s19, 1
      %s755 = smul.addr %s754, 4
      %s756 = smul.addr %s752, 8
      %s757 = sadd.s32 %s755, %s756
      %s758 = smul.addr %s757, 4
      %s759 = scalar_lea.vmem %s3, %s758
      // Predicated region
      $region33: #{posenet_forward.6} parent=31 // pred_check
        %p760 = pneg %p126
      $region34: #{posenet_forward.6} parent=31 // pred_check_branch
        %762 = sbr.rel (%p760) target = $region36
      $region35: #{posenet_forward.6} parent=31 // pred_region
        _
      $region36: #{posenet_forward.6} parent=31 // pred_fallthru
        _
    $region32: #{posenet_forward.6} parent=5 // pred_fallthru
      _
    %p763 = scmp.le.s32.totalorder 2, %s9
    // Predicated region
    $region37: #{posenet_forward.6} parent=5 // pred_check
      %p764 = pneg %p763
    $region38: #{posenet_forward.6} parent=5 // pred_check_branch
      %766 = sbr.rel (%p764) target = $region40
    $region39: #{posenet_forward.6} parent=5 // pred_region
      %s767 = ssub.s32 %s9, 2
      // Predicated region
      $region41: #{posenet_forward.6} parent=39 // pred_check
        %p768 = pneg %p132
      $region42: #{posenet_forward.6} parent=39 // pred_check_branch
        %770 = sbr.rel (%p768) target = $region44
      $region43: #{posenet_forward.6} parent=39 // pred_region
        %p771 = scmp.lt.s32.totalorder %s20, 1
        %s772 = scalar_select %p771, %s20, 1
        %p773 = scmp.lt.s32.totalorder %s21, 1
        %s774 = scalar_select %p773, %s21, 1
        %s775 = smul.addr %s774, 4
        %s776 = smul.addr %s772, 8
        %s777 = sadd.s32 %s775, %s776
        %s778 = smul.addr %s777, 4
        %s779 = scalar_lea.vmem %s3, %s778
      $region44: #{posenet_forward.6} parent=39 // pred_fallthru
        _
    $region40: #{posenet_forward.6} parent=5 // pred_fallthru
      _
  $region6: #{posenet_forward.6} parent=0 // loop_footer
    %s13 = sadd.s32 1, %s9
  $region7: #{posenet_forward.6} parent=0 // loop_footer_branch
    %8 = sbr.rel target = $region3
  $region8: #{posenet_forward.6} parent=0 // loop_exit
    _

// kernel: posenet_forward.9
$region0: #{posenet_forward.9}
  #allocation0 [shape = 'u32[]', space=smem, size = 0x4, offset = 0x4, fixed_abs, tag = 'smem constant byte address 0x4 - core index']
  #allocation1 [shape = 'u32[144,128]{1,0:T(1,128)}', space=vmem, size = 0x12000, scoped, tag = 'internal scratch']
  %s0 = inlined_call_operand.vmem [shape: bf16[2,4,256], index: 0, kind: input, shape index: {}]
  %s1 = inlined_call_operand.vmem [shape: f32[256,64], index: 1, kind: input, shape index: {}]
  %s2 = inlined_call_operand.vmem [shape: f32[1,64], index: 2, kind: input, shape index: {}]
  %s3 = inlined_call_operand.vmem [shape: f32[64,10], index: 3, kind: input, shape index: {}]
  %s4 = inlined_call_operand.vmem [shape: f32[1,10], index: 4, kind: input, shape index: {}]
  %s5 = inlined_call_operand.vmem [shape: f32[2,1], index: 5, kind: output, shape index: {0}]
  %s6 = inlined_call_operand.hbm [shape: f32[2,2], index: 6, kind: output, shape index: {1}]
  %7 = xla_tuple %s5, %s6
  %s8 = sld [smem:[#allocation0]]
  $region38: #{posenet_forward.9} parent=0
    _
  %s10 = ssub.s32 1, %s8
  %s11 = scalar_select 0, %s10, %s8
  $region1: #{posenet_forward.9} parent=0
    #allocation2 [shape = 'u8[1024]{0}', space=vmem, size = 0x400, scoped, tag = 'output window, operand 1, single buffered']
    #allocation3 [shape = 's32[1]{0}', space=sflag, size = 0x4, scoped, tag = 'scoped memory for posenet_forward.9']
    %12 = vsyncpa [#allocation3], 0
    // Predicated region
    $region2: #{posenet_forward.9} parent=1 // pred_check
      _
    $region3: #{posenet_forward.9} parent=1 // pred_check_branch
      %14 = sbr.rel (0) target = $region5
    $region4: #{posenet_forward.9} parent=1 // pred_region
      _
    $region5: #{posenet_forward.9} parent=1 // pred_fallthru
      _
    // Predicated region
    $region6: #{posenet_forward.9} parent=1 // pred_check
      _
    $region7: #{posenet_forward.9} parent=1 // pred_check_branch
      %16 = sbr.rel (0) target = $region9
    $region8: #{posenet_forward.9} parent=1 // pred_region
      _
    $region9: #{posenet_forward.9} parent=1 // pred_fallthru
      _
    // Predicated region
    $region10: #{posenet_forward.9} parent=1 // pred_check
      _
    $region11: #{posenet_forward.9} parent=1 // pred_check_branch
      %18 = sbr.rel (0) target = $region13
    $region12: #{posenet_forward.9} parent=1 // pred_region
      _
    $region13: #{posenet_forward.9} parent=1 // pred_fallthru
      _
    // Predicated region
    $region14: #{posenet_forward.9} parent=1 // pred_check
      _
    $region15: #{posenet_forward.9} parent=1 // pred_check_branch
      %20 = sbr.rel (0) target = $region17
    $region16: #{posenet_forward.9} parent=1 // pred_region
      _
    $region17: #{posenet_forward.9} parent=1 // pred_fallthru
      _
    // Predicated region
    $region18: #{posenet_forward.9} parent=1 // pred_check
      _
    $region19: #{posenet_forward.9} parent=1 // pred_check_branch
      %22 = sbr.rel (0) target = $region21
    $region20: #{posenet_forward.9} parent=1 // pred_region
      _
    $region21: #{posenet_forward.9} parent=1 // pred_fallthru
      _
    %v23 = vld [vmem:[%s0] sm:$0xf]
    %v24 = vld [vmem:[%s0 + $0x4] sm:$0xf]
    %v25 = vunpack.c.l.bf16 %v23
    %v26 = vunpack.c.l.bf16 %v24
    %v29 = vcombine.high %v25, %v25
    %v30 = vcombine.high %v26, %v26
    %vm33 = vcmask 1043456
    %v34 = vsel %vm33, %v25, 0.0
    %v35 = vrot.slane %v34, 4
    %v36 = vadd.f32 %v34, %v35
    %v37 = vrot.slane %v36, 2
    %v38 = vadd.f32 %v36, %v37
    %v39 = vrot.slane %v38, 1
    %v40 = vadd.f32 %v38, %v39
    %v41 = vsel %vm33, %v29, 0.0
    %v42 = vrot.slane %v41, 4
    %v43 = vadd.f32 %v41, %v42
    %v44 = vrot.slane %v43, 2
    %v45 = vadd.f32 %v43, %v44
    %v46 = vrot.slane %v45, 1
    %v47 = vadd.f32 %v45, %v46
    %v48 = vsel %vm33, %v26, 0.0
    %v49 = vrot.slane %v48, 4
    %v50 = vadd.f32 %v48, %v49
    %v51 = vrot.slane %v50, 2
    %v52 = vadd.f32 %v50, %v51
    %v53 = vrot.slane %v52, 1
    %v54 = vadd.f32 %v52, %v53
    %v55 = vsel %vm33, %v30, 0.0
    %v56 = vrot.slane %v55, 4
    %v57 = vadd.f32 %v55, %v56
    %v58 = vrot.slane %v57, 2
    %v59 = vadd.f32 %v57, %v58
    %v60 = vrot.slane %v59, 1
    %v61 = vadd.f32 %v59, %v60
    %v62 = vrcp.pop 4.0
    %v63 = vmul.f32 %v40, %v62
    %v64 = vmul.f32 %v47, %v62
    %v65 = vmul.f32 %v54, %v62
    %v66 = vmul.f32 %v61, %v62
    %v67 = vld [vmem:[%s1] sm:$0xff]
    %v68 = vld [vmem:[%s1 + $0x8] sm:$0xff]
    %v69 = vld [vmem:[%s1 + $0x10] sm:$0xff]
    %v70 = vld [vmem:[%s1 + $0x18] sm:$0xff]
    %v71 = vld [vmem:[%s1 + $0x20] sm:$0xff]
    %v72 = vld [vmem:[%s1 + $0x28] sm:$0xff]
    %v73 = vld [vmem:[%s1 + $0x30] sm:$0xff]
    %v74 = vld [vmem:[%s1 + $0x38] sm:$0xff]
    %v75 = vld [vmem:[%s1 + $0x40] sm:$0xff]
    %v76 = vld [vmem:[%s1 + $0x48] sm:$0xff]
    %v77 = vld [vmem:[%s1 + $0x50] sm:$0xff]
    %v78 = vld [vmem:[%s1 + $0x58] sm:$0xff]
    %v79 = vld [vmem:[%s1 + $0x60] sm:$0xff]
    %v80 = vld [vmem:[%s1 + $0x68] sm:$0xff]
    %v81 = vld [vmem:[%s1 + $0x70] sm:$0xff]
    %v82 = vld [vmem:[%s1 + $0x78] sm:$0xff]
    %v83 = vld [vmem:[%s1 + $0x80] sm:$0xff]
    %v84 = vld [vmem:[%s1 + $0x88] sm:$0xff]
    %v85 = vld [vmem:[%s1 + $0x90] sm:$0xff]
    %v86 = vld [vmem:[%s1 + $0x98] sm:$0xff]
    %v87 = vld [vmem:[%s1 + $0xa0] sm:$0xff]
    %v88 = vld [vmem:[%s1 + $0xa8] sm:$0xff]
    %v89 = vld [vmem:[%s1 + $0xb0] sm:$0xff]
    %v90 = vld [vmem:[%s1 + $0xb8] sm:$0xff]
    %v91 = vld [vmem:[%s1 + $0xc0] sm:$0xff]
    %v92 = vld [vmem:[%s1 + $0xc8] sm:$0xff]
    %v93 = vld [vmem:[%s1 + $0xd0] sm:$0xff]
    %v94 = vld [vmem:[%s1 + $0xd8] sm:$0xff]
    %v95 = vld [vmem:[%s1 + $0xe0] sm:$0xff]
    %v96 = vld [vmem:[%s1 + $0xe8] sm:$0xff]
    %v97 = vld [vmem:[%s1 + $0xf0] sm:$0xff]
    %v98 = vld [vmem:[%s1 + $0xf8] sm:$0xff]
    %v99 = vld [vmem:[%s2] sm:$0x1]
    %v101 = vlaneseq
    %v102 = vshrl.u32 %v101, 7
    %v103 = vsub.s32 0, %v102
    %v104 = vrot.slane %v99, %v103
    %vm110 = vcmask 1041409
    %v111 = vsel %vm110, %v65, %v63
    %v112 = vsel %vm110, %v66, %v64
    %115 = vmatprep.subr.mxu0 0.0
    %116 = vmatpush1.msra.mxu0 %v82
    %117 = vmatprep.subr.mxu0 0.0
    %118 = vmatpush1.msra.mxu0 %v81
    %119 = vmatprep.subr.mxu0 0.0
    %120 = vmatpush1.msra.mxu0 %v80
    %121 = vmatprep.subr.mxu0 0.0
    %122 = vmatpush1.msra.mxu0 %v79
    %123 = vmatprep.subr.mxu0 0.0
    %124 = vmatpush1.msra.mxu0 %v78
    %125 = vmatprep.subr.mxu0 0.0
    %126 = vmatpush1.msra.mxu0 %v77
    %127 = vmatprep.subr.mxu0 0.0
    %128 = vmatpush1.msra.mxu0 %v76
    %129 = vmatprep.subr.mxu0 0.0
    %130 = vmatpush1.msra.mxu0 %v75
    %131 = vmatprep.subr.mxu0 0.0
    %132 = vmatpush1.msra.mxu0 %v74
    %133 = vmatprep.subr.mxu0 0.0
    %134 = vmatpush1.msra.mxu0 %v73
    %135 = vmatprep.subr.mxu0 0.0
    %136 = vmatpush1.msra.mxu0 %v72
    %137 = vmatprep.subr.mxu0 0.0
    %138 = vmatpush1.msra.mxu0 %v71
    %139 = vmatprep.subr.mxu0 0.0
    %140 = vmatpush1.msra.mxu0 %v70
    %141 = vmatprep.subr.mxu0 0.0
    %142 = vmatpush1.msra.mxu0 %v69
    %143 = vmatprep.subr.mxu0 0.0
    %144 = vmatpush1.msra.mxu0 %v68
    %145 = vmatprep.subr.mxu0 0.0
    %146 = vmatpush1.msra.mxu0 %v67
    %147 = vmatprep.subr.mxu0 0.0
    %148 = vmatpush2.msra.mxu0 %v98
    %149 = vmatprep.subr.mxu0 0.0
    %150 = vmatpush2.msra.mxu0 %v97
    %151 = vmatprep.subr.mxu0 0.0
    %152 = vmatpush2.msra.mxu0 %v96
    %153 = vmatprep.subr.mxu0 0.0
    %154 = vmatpush2.msra.mxu0 %v95
    %155 = vmatprep.subr.mxu0 0.0
    %156 = vmatpush2.msra.mxu0 %v94
    %157 = vmatprep.subr.mxu0 0.0
    %158 = vmatpush2.msra.mxu0 %v93
    %159 = vmatprep.subr.mxu0 0.0
    %160 = vmatpush2.msra.mxu0 %v92
    %161 = vmatprep.subr.mxu0 0.0
    %162 = vmatpush2.msra.mxu0 %v91
    %163 = vmatprep.subr.mxu0 0.0
    %164 = vmatpush2.msra.mxu0 %v90
    %165 = vmatprep.subr.mxu0 0.0
    %166 = vmatpush2.msra.mxu0 %v89
    %167 = vmatprep.subr.mxu0 0.0
    %168 = vmatpush2.msra.mxu0 %v88
    %169 = vmatprep.subr.mxu0 0.0
    %170 = vmatpush2.msra.mxu0 %v87
    %171 = vmatprep.subr.mxu0 0.0
    %172 = vmatpush2.msra.mxu0 %v86
    %173 = vmatprep.subr.mxu0 0.0
    %174 = vmatpush2.msra.mxu0 %v85
    %175 = vmatprep.subr.mxu0 0.0
    %176 = vmatpush2.msra.mxu0 %v84
    %177 = vmatprep.subr.mxu0 0.0
    %178 = vmatpush2.msra.mxu0 %v83
    %179 = vmatprep.mubr.f32.mxu0 %v112
    %180 = vmatmul.mubr.f32.gmra.mxu0 %v111
    %v181 = vpop.f32.mrf.mxu0
    %v182 = vadd.f32 %v104, %v181
    %v183 = vpop.f32.mrf.mxu0
    %184 = vdwg.mxu0
    %v185 = vmax.f32 %v182, 0.0
    %v186 = vld [vmem:[%s3] sm:$0xff]
    %v187 = vld [vmem:[%s3 + $0x8] sm:$0xff]
    %v188 = vld [vmem:[%s3 + $0x10] sm:$0xff]
    %v189 = vld [vmem:[%s3 + $0x18] sm:$0xff]
    %v190 = vld [vmem:[%s3 + $0x20] sm:$0xff]
    %v191 = vld [vmem:[%s3 + $0x28] sm:$0xff]
    %v192 = vld [vmem:[%s3 + $0x30] sm:$0xff]
    %v193 = vld [vmem:[%s3 + $0x38] sm:$0xff]
    %v194 = vld [vmem:[%s4] sm:$0x1]
    %v196 = vlaneseq
    %v197 = vshrl.u32 %v196, 7
    %v198 = vsub.s32 0, %v197
    %v199 = vrot.slane %v194, %v198
    %vm201 = vcmask 523264
    %v203 = vsel %vm201, %v185, 0
    %205 = vmatprep.subr.mxu0 0.0
    %206 = vmatpush1.msra.mxu0 0.0
    %207 = vmatprep.subr.mxu0 0.0
    %208 = vmatpush1.msra.mxu0 0.0
    %209 = vmatprep.subr.mxu0 0.0
    %210 = vmatpush1.msra.mxu0 0.0
    %211 = vmatprep.subr.mxu0 0.0
    %212 = vmatpush1.msra.mxu0 0.0
    %213 = vmatprep.subr.mxu0 0.0
    %214 = vmatpush1.msra.mxu0 0.0
    %215 = vmatprep.subr.mxu0 0.0
    %216 = vmatpush1.msra.mxu0 0.0
    %217 = vmatprep.subr.mxu0 0.0
    %218 = vmatpush1.msra.mxu0 0.0
    %219 = vmatprep.subr.mxu0 0.0
    %220 = vmatpush1.msra.mxu0 0.0
    %221 = vmatprep.subr.mxu0 0.0
    %222 = vmatpush1.msra.mxu0 %v193
    %223 = vmatprep.subr.mxu0 0.0
    %224 = vmatpush1.msra.mxu0 %v192
    %225 = vmatprep.subr.mxu0 0.0
    %226 = vmatpush1.msra.mxu0 %v191
    %227 = vmatprep.subr.mxu0 0.0
    %228 = vmatpush1.msra.mxu0 %v190
    %229 = vmatprep.subr.mxu0 0.0
    %230 = vmatpush1.msra.mxu0 %v189
    %231 = vmatprep.subr.mxu0 0.0
    %232 = vmatpush1.msra.mxu0 %v188
    %233 = vmatprep.subr.mxu0 0.0
    %234 = vmatpush1.msra.mxu0 %v187
    %235 = vmatprep.subr.mxu0 0.0
    %236 = vmatpush1.msra.mxu0 %v186
    %237 = vmatprep.subr.mxu0 0.0
    %238 = vmatpush2.msra.mxu0 0.0
    %239 = vmatprep.subr.mxu0 0.0
    %240 = vmatpush2.msra.mxu0 0.0
    %241 = vmatprep.subr.mxu0 0.0
    %242 = vmatpush2.msra.mxu0 0.0
    %243 = vmatprep.subr.mxu0 0.0
    %244 = vmatpush2.msra.mxu0 0.0
    %245 = vmatprep.subr.mxu0 0.0
    %246 = vmatpush2.msra.mxu0 0.0
    %247 = vmatprep.subr.mxu0 0.0
    %248 = vmatpush2.msra.mxu0 0.0
    %249 = vmatprep.subr.mxu0 0.0
    %250 = vmatpush2.msra.mxu0 0.0
    %251 = vmatprep.subr.mxu0 0.0
    %252 = vmatpush2.msra.mxu0 0.0
    %253 = vmatprep.subr.mxu0 0.0
    %254 = vmatpush2.msra.mxu0 0.0
    %255 = vmatprep.subr.mxu0 0.0
    %256 = vmatpush2.msra.mxu0 0.0
    %257 = vmatprep.subr.mxu0 0.0
    %258 = vmatpush2.msra.mxu0 0.0
    %259 = vmatprep.subr.mxu0 0.0
    %260 = vmatpush2.msra.mxu0 0.0
    %261 = vmatprep.subr.mxu0 0.0
    %262 = vmatpush2.msra.mxu0 0.0
    %263 = vmatprep.subr.mxu0 0.0
    %264 = vmatpush2.msra.mxu0 0.0
    %265 = vmatprep.subr.mxu0 0.0
    %266 = vmatpush2.msra.mxu0 0.0
    %267 = vmatprep.subr.mxu0 0.0
    %268 = vmatpush2.msra.mxu0 0.0
    %269 = vmatprep.mubr.f32.mxu0 0.0
    %270 = vmatmul.mubr.f32.gmra.mxu0 %v203
    %v271 = vpop.f32.mrf.mxu0
    %v272 = vadd.f32 %v199, %v271
    %v273 = vpop.f32.mrf.mxu0
    %274 = vdwg.mxu0
    %vm275 = vcmask 58368
    %v276 = vsel %vm275, %v272, -inf
    %277 = vmax.xlane.f32.xlu0 %v276
    %v278 = vpop.xlane.xlu0 %277
    %v279 = vsub.f32 %v272, %v278
    %v280 = vmul.f32 %v279, 1.442695
    %v281 = vpow.pop %v280
    %v282 = vsel %vm275, %v281, 0.0
    %283 = vadd.xlane.f32.xlu0 %v282
    %v284 = vpop.xlane.xlu0 %283
    %v285 = vrcp.pop %v284
    %v286 = vmul.f32 %v281, %v285
    %v287 = vlaneseq
    %v288 = vand.u32 %v287, 127
    %v289 = vcvt.s32.f32 %v288
    %v290 = vmul.f32 %v286, %v289
    %v291 = vsel %vm275, %v290, 0.0
    %292 = vadd.xlane.f32.xlu0 %v291
    %v293 = vpop.xlane.xlu0 %292
    %vm294 = vcmask 1024
    %295 = vst.msk [vmem:[%s5] sm:$0x3] %vm294, %v293
    %v296 = vxor.u32 %v272, 2147483648
    %v297 = vmul.f32 %v296, 1.442695
    %v298 = vpow.pop %v297
    %v299 = vadd.f32 %v298, 1.0
    %v300 = vrcp.pop %v299
    %v301 = vmul.f32 1.0, %v300
    %303 = vrot.lane.b32.xlu0 %v301, 120
    %v304 = vpop.permute.xlu0 %303
    %vm306 = vcmask 9216
    %307 = vst.msk [vmem:[#allocation2] sm:$0x3] %vm306, %v304
    // Predicated region
    $region22: #{posenet_forward.9} parent=1 // pred_check
      _
    $region23: #{posenet_forward.9} parent=1 // pred_check_branch
      %309 = sbr.rel (0) target = $region25
    $region24: #{posenet_forward.9} parent=1 // pred_region
      _
    $region25: #{posenet_forward.9} parent=1 // pred_fallthru
      _
    // Predicated region
    $region26: #{posenet_forward.9} parent=1 // pred_check
      _
    $region27: #{posenet_forward.9} parent=1 // pred_check_branch
      %311 = sbr.rel (0) target = $region29
    $region28: #{posenet_forward.9} parent=1 // pred_region
      %s313 = ssub.s32 32, 32
      %314 = vsyncadd [#allocation3], %s313
      %s316 = sshll.u32 [#allocation2], 4
      %s317 = int_to_ptr.vmem [resolvable:$true] %s316
      %319 = dma.vmem_to_hbm [thread:$0]  %s317, 32, %s6, [#allocation3]
    $region29: #{posenet_forward.9} parent=1 // pred_fallthru
      _
    // Predicated region
    $region30: #{posenet_forward.9} parent=1 // pred_check
      _
    $region31: #{posenet_forward.9} parent=1 // pred_check_branch
      %321 = sbr.rel (0) target = $region33
    $region32: #{posenet_forward.9} parent=1 // pred_region
      _
    $region33: #{posenet_forward.9} parent=1 // pred_fallthru
      _
    // Predicated region
    $region34: #{posenet_forward.9} parent=1 // pred_check
      _
    $region35: #{posenet_forward.9} parent=1 // pred_check_branch
      %323 = sbr.rel (0) target = $region37
    $region36: #{posenet_forward.9} parent=1 // pred_region
      %324 = dma.done [#allocation3], 32
    $region37: #{posenet_forward.9} parent=1 // pred_fallthru
      _
    %325 = vsyncpa [#allocation3], 1

// kernel: posenet_forward.7
$region0: #{posenet_forward.7}
  #allocation0 [shape = 'u32[]', space=smem, size = 0x4, offset = 0x4, fixed_abs, tag = 'smem constant byte address 0x4 - core index']
  #allocation1 [shape = 'u32[144,128]{1,0:T(1,128)}', space=vmem, size = 0x12000, scoped, tag = 'internal scratch']
  #allocation2 [shape = 'bf16[10,10,32]{2,1,0:T(8,128)(2,1)}', space=vmem, size = 0xa000, scoped, tag = 'scratch operand']
  #allocation3 [shape = 'bf16[81,128]{1,0:T(8,128)(2,1)}', space=vmem, size = 0x5800, scoped, tag = 'scratch operand']
  %s0 = inlined_call_operand.vmem [shape: bf16[2,2,8,8,32], index: 0, kind: input, shape index: {}]
  %s1 = inlined_call_operand.vmem [shape: bf16[2,128,128], index: 1, kind: input, shape index: {}]
  %s2 = inlined_call_operand.vmem [shape: f32[2,1,128], index: 2, kind: input, shape index: {}]
  %s3 = inlined_call_operand.vmem [shape: bf16[2,2,81,128], index: 3, kind: output, shape index: {}]
  %s4 = sld [smem:[#allocation0]]
  $region45: #{posenet_forward.7} parent=0
    _
  %s6 = ssub.s32 1, %s4
  %s7 = scalar_select 0, %s6, %s4
  loop: start=0, step=1, limit=6
  $region2: #{posenet_forward.7} parent=0 // loop_pre_header
    _
  $region3: #{posenet_forward.7} parent=0 // loop_header
    %s9 = sphi 0, %s13
    %p10 = scmp.ge.s32.totalorder %s9, 6
    %s16 = sphi 0, %s28
    %s17 = sphi 0, %s24
    %s18 = sphi 0, %s16
    %s19 = sphi 0, %s17
    %s20 = sphi 0, %s18
    %s21 = sphi 0, %s19
    %s33 = sphi 0, %s35
    %s36 = sphi 0, %s33
    %s37 = sphi 0, %s36
    %s53 = sphi 0, %s37
    %s59 = sphi 0, %s61
    %s62 = sphi 0, %s59
    %s63 = sphi 0, %s62
    %s79 = sphi 0, %s63
    %s85 = sphi 0, %s87
    %s88 = sphi 0, %s85
    %s89 = sphi 0, %s88
    %s105 = sphi 0, %s89
    %s113 = sphi 0, %s115
    %s116 = sphi 0, %s113
    %s117 = sphi 0, %s116
    %s133 = sphi 0, %s117
  $region4: #{posenet_forward.7} parent=0 // loop_header_branch
    %12 = sbr.rel (%p10) target = $region8
  $region5: #{posenet_forward.7} parent=0 // loop_body
    %s14 = ssub.s32 %s9, 1
    %s15 = ssub.s32 %s9, 2
    %s22 = sadd.s32 1, %s17
    %p23 = scmp.ge.s32.totalorder %s22, 2
    %s24 = scalar_select %p23, 0, %s22
    %s25 = sadd.s32 1, %s16
    %s26 = scalar_select %p23, %s25, %s16
    %p27 = scmp.ge.s32.totalorder %s26, 2
    %s28 = scalar_select %p27, 0, %s26
    %s29 = ssub.s32 %s16, %s28
    %s30 = ssub.s32 %s17, %s24
    %s31 = sor.u32 %s29, %s30
    %p32 = scmp.eq.s32.totalorder %s31, 0
    %s34 = sadd.s32 %s33, 1
    %s35 = scalar_select %p32, %s33, %s34
    %p38 = pneg %p32
    %p39 = scmp.eq.s32.totalorder %s9, 3
    %p40 = por %p38, %p39
    %p41 = scmp.ne.s32.totalorder %s33, %s36
    %p42 = scmp.eq.s32.totalorder %s9, 0
    %p43 = por %p41, %p42
    %p44 = scmp.ne.s32.totalorder %s33, %s36
    %p45 = scmp.eq.s32.totalorder %s14, 3
    %p46 = por %p44, %p45
    %p47 = scmp.ne.s32.totalorder %s36, %s37
    %p48 = scmp.eq.s32.totalorder %s14, 0
    %p49 = por %p47, %p48
    %p50 = scmp.ne.s32.totalorder %s36, %s37
    %p51 = scmp.eq.s32.totalorder %s15, 3
    %p52 = por %p50, %p51
    %p54 = scmp.ne.s32.totalorder %s37, %s53
    %p55 = scmp.eq.s32.totalorder %s15, 0
    %p56 = por %p54, %p55
    %s57 = ssub.s32 %s16, %s28
    %p58 = scmp.eq.s32.totalorder %s57, 0
    %s60 = sadd.s32 %s59, 1
    %s61 = scalar_select %p58, %s59, %s60
    %p64 = pneg %p58
    %p65 = scmp.eq.s32.totalorder %s9, 3
    %p66 = por %p64, %p65
    %p67 = scmp.ne.s32.totalorder %s59, %s62
    %p68 = scmp.eq.s32.totalorder %s9, 0
    %p69 = por %p67, %p68
    %p70 = scmp.ne.s32.totalorder %s59, %s62
    %p71 = scmp.eq.s32.totalorder %s14, 3
    %p72 = por %p70, %p71
    %p73 = scmp.ne.s32.totalorder %s62, %s63
    %p74 = scmp.eq.s32.totalorder %s14, 0
    %p75 = por %p73, %p74
    %p76 = scmp.ne.s32.totalorder %s62, %s63
    %p77 = scmp.eq.s32.totalorder %s15, 3
    %p78 = por %p76, %p77
    %p80 = scmp.ne.s32.totalorder %s63, %s79
    %p81 = scmp.eq.s32.totalorder %s15, 0
    %p82 = por %p80, %p81
    %s83 = ssub.s32 %s16, %s28
    %p84 = scmp.eq.s32.totalorder %s83, 0
    %s86 = sadd.s32 %s85, 1
    %s87 = scalar_select %p84, %s85, %s86
    %p90 = pneg %p84
    %p91 = scmp.eq.s32.totalorder %s9, 3
    %p92 = por %p90, %p91
    %p93 = scmp.ne.s32.totalorder %s85, %s88
    %p94 = scmp.eq.s32.totalorder %s9, 0
    %p95 = por %p93, %p94
    %p96 = scmp.ne.s32.totalorder %s85, %s88
    %p97 = scmp.eq.s32.totalorder %s14, 3
    %p98 = por %p96, %p97
    %p99 = scmp.ne.s32.totalorder %s88, %s89
    %p100 = scmp.eq.s32.totalorder %s14, 0
    %p101 = por %p99, %p100
    %p102 = scmp.ne.s32.totalorder %s88, %s89
    %p103 = scmp.eq.s32.totalorder %s15, 3
    %p104 = por %p102, %p103
    %p106 = scmp.ne.s32.totalorder %s89, %s105
    %p107 = scmp.eq.s32.totalorder %s15, 0
    %p108 = por %p106, %p107
    %s109 = ssub.s32 %s16, %s28
    %s110 = ssub.s32 %s17, %s24
    %s111 = sor.u32 %s109, %s110
    %p112 = scmp.eq.s32.totalorder %s111, 0
    %s114 = sadd.s32 %s113, 1
    %s115 = scalar_select %p112, %s113, %s114
    %p118 = pneg %p112
    %p119 = scmp.eq.s32.totalorder %s9, 3
    %p120 = por %p118, %p119
    %p121 = scmp.ne.s32.totalorder %s113, %s116
    %p122 = scmp.eq.s32.totalorder %s9, 0
    %p123 = por %p121, %p122
    %p124 = scmp.ne.s32.totalorder %s113, %s116
    %p125 = scmp.eq.s32.totalorder %s14, 3
    %p126 = por %p124, %p125
    %p127 = scmp.ne.s32.totalorder %s116, %s117
    %p128 = scmp.eq.s32.totalorder %s14, 0
    %p129 = por %p127, %p128
    %p130 = scmp.ne.s32.totalorder %s116, %s117
    %p131 = scmp.eq.s32.totalorder %s15, 3
    %p132 = por %p130, %p131
    %p134 = scmp.ne.s32.totalorder %s117, %s133
    %p135 = scmp.eq.s32.totalorder %s15, 0
    %p136 = por %p134, %p135
    %p137 = scmp.le.s32.totalorder 1, %s9
    %p138 = scmp.lt.s32.totalorder %s9, 5
    %p139 = pnand %p137, %p138
    %p140 = pneg %p139
    // Predicated region
    $region9: #{posenet_forward.7} parent=5 // pred_check
      _
    $region10: #{posenet_forward.7} parent=5 // pred_check_branch
      %142 = sbr.rel (%p139) target = $region12
    $region11: #{posenet_forward.7} parent=5 // pred_region
      %s143 = ssub.s32 %s9, 1
    $region12: #{posenet_forward.7} parent=5 // pred_fallthru
      _
    %p144 = scmp.lt.s32.totalorder %s9, 4
    // Predicated region
    $region13: #{posenet_forward.7} parent=5 // pred_check
      %p145 = pneg %p144
    $region14: #{posenet_forward.7} parent=5 // pred_check_branch
      %147 = sbr.rel (%p145) target = $region16
    $region15: #{posenet_forward.7} parent=5 // pred_region
      // Predicated region
      $region17: #{posenet_forward.7} parent=15 // pred_check
        %p148 = pneg %p43
      $region18: #{posenet_forward.7} parent=15 // pred_check_branch
        %150 = sbr.rel (%p148) target = $region20
      $region19: #{posenet_forward.7} parent=15 // pred_region
        %p151 = scmp.lt.s32.totalorder %s16, 1
        %s152 = scalar_select %p151, %s16, 1
        %p153 = scmp.lt.s32.totalorder %s17, 1
        %s154 = scalar_select %p153, %s17, 1
        %s155 = smul.addr %s154, 8
        %s156 = smul.addr %s152, 16
        %s157 = sadd.s32 %s155, %s156
        %s158 = smul.addr %s157, 4
        %s159 = scalar_lea.vmem %s0, %s158
      $region20: #{posenet_forward.7} parent=15 // pred_fallthru
        _
      // Predicated region
      $region21: #{posenet_forward.7} parent=15 // pred_check
        %p160 = pneg %p69
      $region22: #{posenet_forward.7} parent=15 // pred_check_branch
        %162 = sbr.rel (%p160) target = $region24
      $region23: #{posenet_forward.7} parent=15 // pred_region
        %p163 = scmp.lt.s32.totalorder %s16, 1
        %s164 = scalar_select %p163, %s16, 1
        %s165 = smul.addr %s164, 16
        %s166 = smul.addr %s165, 4
        %s167 = scalar_lea.vmem %s1, %s166
      $region24: #{posenet_forward.7} parent=15 // pred_fallthru
        _
      // Predicated region
      $region25: #{posenet_forward.7} parent=15 // pred_check
        %p168 = pneg %p95
      $region26: #{posenet_forward.7} parent=15 // pred_check_branch
        %170 = sbr.rel (%p168) target = $region28
      $region27: #{posenet_forward.7} parent=15 // pred_region
        %p171 = scmp.lt.s32.totalorder %s16, 1
        %s172 = scalar_select %p171, %s16, 1
        %s173 = scalar_lea.vmem %s2, %s172
      $region28: #{posenet_forward.7} parent=15 // pred_fallthru
        _
    $region16: #{posenet_forward.7} parent=5 // pred_fallthru
      _
    %p174 = scmp.le.s32.totalorder 1, %s9
    %p175 = scmp.lt.s32.totalorder %s9, 5
    %p176 = pnand %p174, %p175
    %p177 = pneg %p176
    // Predicated region
    $region29: #{posenet_forward.7} parent=5 // pred_check
      _
    $region30: #{posenet_forward.7} parent=5 // pred_check_branch
      %179 = sbr.rel (%p176) target = $region32
    $region31: #{posenet_forward.7} parent=5 // pred_region
      %s180 = ssub.s32 %s9, 1
      %p181 = scmp.lt.s32.totalorder %s18, 1
      %s182 = scalar_select %p181, %s18, 1
      %p183 = scmp.lt.s32.totalorder %s19, 1
      %s184 = scalar_select %p183, %s19, 1
      %s185 = smul.addr %s184, 8
      %s186 = smul.addr %s182, 16
      %s187 = sadd.s32 %s185, %s186
      %s188 = smul.addr %s187, 4
      %s189 = scalar_lea.vmem %s0, %s188
      %p190 = pneg %p49
      %p191 = pneg %p46
      %p192 = scmp.lt.s32.totalorder %s18, 1
      %s193 = scalar_select %p192, %s18, 1
      %s194 = smul.addr %s193, 16
      %s195 = smul.addr %s194, 4
      %s196 = scalar_lea.vmem %s1, %s195
      %p197 = pneg %p75
      %p198 = pneg %p72
      %p199 = scmp.lt.s32.totalorder %s18, 1
      %s200 = scalar_select %p199, %s18, 1
      %s201 = scalar_lea.vmem %s2, %s200
      %p202 = pneg %p101
      %p203 = pneg %p98
      %p204 = pneg %p129
      %p205 = pneg %p126
      %p206 = scmp.lt.s32.totalorder %s18, 1
      %s207 = scalar_select %p206, %s18, 1
      %p208 = scmp.lt.s32.totalorder %s19, 1
      %s209 = scalar_select %p208, %s19, 1
      %s210 = smul.addr %s209, 11
      %s211 = smul.addr %s207, 22
      %s212 = sadd.s32 %s210, %s211
      %s213 = smul.addr %s212, 4
      %s214 = scalar_lea.vmem %s3, %s213
      %p215 = scmp.lt.s32.totalorder %s18, 1
      %s216 = scalar_select %p215, %s18, 1
      %p217 = scmp.lt.s32.totalorder %s19, 1
      %s218 = scalar_select %p217, %s19, 1
      %s219 = smul.addr %s218, 8
      %s220 = smul.addr %s216, 16
      %s221 = sadd.s32 %s219, %s220
      %s222 = smul.addr %s221, 4
      %s223 = scalar_lea.vmem %s0, %s222
      %p224 = scmp.lt.s32.totalorder %s18, 1
      %s225 = scalar_select %p224, %s18, 1
      %s226 = smul.addr %s225, 16
      %s227 = smul.addr %s226, 4
      %s228 = scalar_lea.vmem %s1, %s227
      %p229 = scmp.lt.s32.totalorder %s18, 1
      %s230 = scalar_select %p229, %s18, 1
      %s231 = scalar_lea.vmem %s2, %s230
      %p232 = scmp.lt.s32.totalorder %s18, 1
      %s233 = scalar_select %p232, %s18, 1
      %p234 = scmp.lt.s32.totalorder %s19, 1
      %s235 = scalar_select %p234, %s19, 1
      %s236 = smul.addr %s235, 11
      %s237 = smul.addr %s233, 22
      %s238 = sadd.s32 %s236, %s237
      %s239 = smul.addr %s238, 4
      %s240 = scalar_lea.vmem %s3, %s239
      %vm242 = vcmask 257024
      %243 = vst.msk [vmem:[#allocation2] sm:$0xf] %vm242, 0
      %vm244 = vcmask 253952
      %245 = vst.msk [vmem:[#allocation2 + $0x4] sm:$0x1] %vm244, 0
      %246 = vst.msk [vmem:[#allocation2 + $0x8] sm:$0xf] %vm242, 0
      %247 = vst.msk [vmem:[#allocation2 + $0xc] sm:$0x1] %vm244, 0
      %248 = vst.msk [vmem:[#allocation2 + $0x10] sm:$0xf] %vm242, 0
      %249 = vst.msk [vmem:[#allocation2 + $0x14] sm:$0x1] %vm244, 0
      %250 = vst.msk [vmem:[#allocation2 + $0x18] sm:$0xf] %vm242, 0
      %251 = vst.msk [vmem:[#allocation2 + $0x1c] sm:$0x1] %vm244, 0
      %252 = vst.msk [vmem:[#allocation2 + $0x20] sm:$0xf] %vm242, 0
      %253 = vst.msk [vmem:[#allocation2 + $0x24] sm:$0x1] %vm244, 0
      %254 = vst.msk [vmem:[#allocation2 + $0x28] sm:$0xf] %vm242, 0
      %255 = vst.msk [vmem:[#allocation2 + $0x2c] sm:$0x1] %vm244, 0
      %256 = vst.msk [vmem:[#allocation2 + $0x30] sm:$0xf] %vm242, 0
      %257 = vst.msk [vmem:[#allocation2 + $0x34] sm:$0x1] %vm244, 0
      %258 = vst.msk [vmem:[#allocation2 + $0x38] sm:$0xf] %vm242, 0
      %259 = vst.msk [vmem:[#allocation2 + $0x3c] sm:$0x1] %vm244, 0
      %260 = vst.msk [vmem:[#allocation2 + $0x40] sm:$0xf] %vm242, 0
      %261 = vst.msk [vmem:[#allocation2 + $0x44] sm:$0x1] %vm244, 0
      %262 = vst.msk [vmem:[#allocation2 + $0x48] sm:$0xf] %vm242, 0
      %263 = vst.msk [vmem:[#allocation2 + $0x4c] sm:$0x1] %vm244, 0
      %v264 = vld [vmem:[%s223] sm:$0xf]
      %v265 = vld [vmem:[%s223 + $0x4] sm:$0xf]
      %v266 = vld [vmem:[%s223 + $0x8] sm:$0xf]
      %v267 = vld [vmem:[%s223 + $0xc] sm:$0xf]
      %v268 = vld [vmem:[%s223 + $0x10] sm:$0xf]
      %v269 = vld [vmem:[%s223 + $0x14] sm:$0xf]
      %v270 = vld [vmem:[%s223 + $0x18] sm:$0xf]
      %v271 = vld [vmem:[%s223 + $0x1c] sm:$0xf]
      %v273 = vshrl.u32 %v264, 16
      %v275 = vrot.slane %v273, 7
      %v276 = vshll.u32 %v264, 16
      %v278 = vor.u32 %v275, %v276
      %v279 = vrot.slane %v275, 4
      %v281 = vshrl.u32 %v265, 16
      %v283 = vrot.slane %v281, 7
      %v284 = vshll.u32 %v265, 16
      %v286 = vor.u32 %v283, %v284
      %v287 = vrot.slane %v283, 4
      %v289 = vshrl.u32 %v266, 16
      %v291 = vrot.slane %v289, 7
      %v292 = vshll.u32 %v266, 16
      %v294 = vor.u32 %v291, %v292
      %v295 = vrot.slane %v291, 4
      %v297 = vshrl.u32 %v267, 16
      %v299 = vrot.slane %v297, 7
      %v300 = vshll.u32 %v267, 16
      %v302 = vor.u32 %v299, %v300
      %v303 = vrot.slane %v299, 4
      %v305 = vshrl.u32 %v268, 16
      %v307 = vrot.slane %v305, 7
      %v308 = vshll.u32 %v268, 16
      %v310 = vor.u32 %v307, %v308
      %v311 = vrot.slane %v307, 4
      %v313 = vshrl.u32 %v269, 16
      %v315 = vrot.slane %v313, 7
      %v316 = vshll.u32 %v269, 16
      %v318 = vor.u32 %v315, %v316
      %v319 = vrot.slane %v315, 4
      %v321 = vshrl.u32 %v270, 16
      %v323 = vrot.slane %v321, 7
      %v324 = vshll.u32 %v270, 16
      %v326 = vor.u32 %v323, %v324
      %v327 = vrot.slane %v323, 4
      %v329 = vshrl.u32 %v271, 16
      %v331 = vrot.slane %v329, 7
      %v332 = vshll.u32 %v271, 16
      %v334 = vor.u32 %v331, %v332
      %v335 = vrot.slane %v331, 4
      %s352 = scalar_lea.vmem [#allocation2], 8
      %vm353 = vcmask 257024
      %vm354 = vsmask.f32 7938
      %vm355 = vmand %vm353, %vm354
      %v356 = vld [vmem:[%s352] sm:$0xf]
      %v357 = vsel %vm355, %v278, %v356
      %358 = vst [vmem:[%s352] sm:$0xf] %v357
      %vm359 = vcmask 253952
      %vm360 = vsmask.f32 256
      %vm361 = vmand %vm359, %vm360
      %v362 = vld [vmem:[%s352 + $0x4] sm:$0x1]
      %v363 = vsel %vm361, %v279, %v362
      %364 = vst [vmem:[%s352 + $0x4] sm:$0x1] %v363
      %v365 = vld [vmem:[%s352 + $0x8] sm:$0xf]
      %v366 = vsel %vm355, %v286, %v365
      %367 = vst [vmem:[%s352 + $0x8] sm:$0xf] %v366
      %v368 = vld [vmem:[%s352 + $0xc] sm:$0x1]
      %v369 = vsel %vm361, %v287, %v368
      %370 = vst [vmem:[%s352 + $0xc] sm:$0x1] %v369
      %v371 = vld [vmem:[%s352 + $0x10] sm:$0xf]
      %v372 = vsel %vm355, %v294, %v371
      %373 = vst [vmem:[%s352 + $0x10] sm:$0xf] %v372
      %v374 = vld [vmem:[%s352 + $0x14] sm:$0x1]
      %v375 = vsel %vm361, %v295, %v374
      %376 = vst [vmem:[%s352 + $0x14] sm:$0x1] %v375
      %v377 = vld [vmem:[%s352 + $0x18] sm:$0xf]
      %v378 = vsel %vm355, %v302, %v377
      %379 = vst [vmem:[%s352 + $0x18] sm:$0xf] %v378
      %v380 = vld [vmem:[%s352 + $0x1c] sm:$0x1]
      %v381 = vsel %vm361, %v303, %v380
      %382 = vst [vmem:[%s352 + $0x1c] sm:$0x1] %v381
      %v383 = vld [vmem:[%s352 + $0x20] sm:$0xf]
      %v384 = vsel %vm355, %v310, %v383
      %385 = vst [vmem:[%s352 + $0x20] sm:$0xf] %v384
      %v386 = vld [vmem:[%s352 + $0x24] sm:$0x1]
      %v387 = vsel %vm361, %v311, %v386
      %388 = vst [vmem:[%s352 + $0x24] sm:$0x1] %v387
      %v389 = vld [vmem:[%s352 + $0x28] sm:$0xf]
      %v390 = vsel %vm355, %v318, %v389
      %391 = vst [vmem:[%s352 + $0x28] sm:$0xf] %v390
      %v392 = vld [vmem:[%s352 + $0x2c] sm:$0x1]
      %v393 = vsel %vm361, %v319, %v392
      %394 = vst [vmem:[%s352 + $0x2c] sm:$0x1] %v393
      %v395 = vld [vmem:[%s352 + $0x30] sm:$0xf]
      %v396 = vsel %vm355, %v326, %v395
      %397 = vst [vmem:[%s352 + $0x30] sm:$0xf] %v396
      %v398 = vld [vmem:[%s352 + $0x34] sm:$0x1]
      %v399 = vsel %vm361, %v327, %v398
      %400 = vst [vmem:[%s352 + $0x34] sm:$0x1] %v399
      %v401 = vld [vmem:[%s352 + $0x38] sm:$0xf]
      %v402 = vsel %vm355, %v334, %v401
      %403 = vst [vmem:[%s352 + $0x38] sm:$0xf] %v402
      %v404 = vld [vmem:[%s352 + $0x3c] sm:$0x1]
      %v405 = vsel %vm361, %v335, %v404
      %406 = vst [vmem:[%s352 + $0x3c] sm:$0x1] %v405
      %v407 = vld [vmem:[#allocation2] sm:$0xf]
      %v408 = vld [vmem:[#allocation2 + $0x4] sm:$0x1]
      %v409 = vld [vmem:[%s352] sm:$0xf]
      %v410 = vld [vmem:[%s352 + $0x4] sm:$0x1]
      %v413 = vunpack.c.l.b16 %v407
      %v414 = vunpack.c.l.b16 %v408
      %v415 = vpack.c.b16 %v414, %v413
      %v417 = vshrl.u32 %v415, 16
      %v419 = vshll.u32 %v415, 16
      %v421 = vrot.slane %v419, 1
      %v422 = vor.u32 %v417, %v421
      %423 = vrot.lane.b32.xlu0 %v422, 32
      %v424 = vpop.permute.xlu0 %423
      %v427 = vunpack.c.l.b16 %v409
      %v428 = vunpack.c.l.b16 %v410
      %v429 = vpack.c.b16 %v428, %v427
      %430 = vrot.lane.b32.xlu0 %v429, 64
      %v431 = vpop.permute.xlu0 %430
      %v433 = vshrl.u32 %v429, 16
      %v435 = vshll.u32 %v429, 16
      %v437 = vrot.slane %v435, 1
      %v438 = vor.u32 %v433, %v437
      %439 = vrot.lane.b32.xlu0 %v438, 96
      %v440 = vpop.permute.xlu0 %439
      %vm441 = vcmask 261120
      %v443 = vsel %vm441, %v415, %v424
      %vm444 = vcmask 523264
      %v446 = vsel %vm444, %v443, %v431
      %vm447 = vcmask 785408
      %v449 = vsel %vm447, %v446, %v440
      %v451 = vunpack.c.l.b16 %v449
      %v452 = vunpack.c.h.b16 %v449
      %v453 = vpack.c.b16 %v451, %v451
      %v454 = vpack.c.b16 %v452, %v452
      %457 = vst [vmem:[#allocation3] sm:$0xf] %v453
      %vm458 = vcmask 1040384
      %vm459 = vmand %vm458, %vm360
      %v460 = vld [vmem:[#allocation3 + $0x4] sm:$0x1]
      %v461 = vsel %vm459, %v454, %v460
      %462 = vst [vmem:[#allocation3 + $0x4] sm:$0x1] %v461
      %v463 = vld [vmem:[%s352] sm:$0xf]
      %v464 = vld [vmem:[%s352 + $0x4] sm:$0x1]
      %s465 = scalar_lea.vmem [#allocation2], 16
      %v466 = vld [vmem:[%s465] sm:$0xf]
      %v467 = vld [vmem:[%s465 + $0x4] sm:$0x1]
      %v470 = vunpack.c.l.b16 %v463
      %v471 = vunpack.c.l.b16 %v464
      %v472 = vpack.c.b16 %v471, %v470
      %v474 = vshrl.u32 %v472, 16
      %v476 = vshll.u32 %v472, 16
      %v478 = vrot.slane %v476, 1
      %v479 = vor.u32 %v474, %v478
      %480 = vrot.lane.b32.xlu0 %v479, 32
      %v481 = vpop.permute.xlu0 %480
      %v484 = vunpack.c.l.b16 %v466
      %v485 = vunpack.c.l.b16 %v467
      %v486 = vpack.c.b16 %v485, %v484
      %487 = vrot.lane.b32.xlu0 %v486, 64
      %v488 = vpop.permute.xlu0 %487
      %v490 = vshrl.u32 %v486, 16
      %v492 = vshll.u32 %v486, 16
      %v494 = vrot.slane %v492, 1
      %v495 = vor.u32 %v490, %v494
      %496 = vrot.lane.b32.xlu0 %v495, 96
      %v497 = vpop.permute.xlu0 %496
      %v499 = vsel %vm441, %v472, %v481
      %v501 = vsel %vm444, %v499, %v488
      %v503 = vsel %vm447, %v501, %v497
      %v505 = vunpack.c.l.b16 %v503
      %v506 = vunpack.c.h.b16 %v503
      %v507 = vpack.c.b16 %v505, %v505
      %v508 = vpack.c.b16 %v506, %v506
      %vm509 = vsmask.f32 4368
      %vm510 = vmor %vm360, %vm509
      %v512 = vshrl.u32 %v507, 16
      %v514 = vrot.slane %v512, 7
      %v515 = vshll.u32 %v507, 16
      %v517 = vor.u32 %v514, %v515
      %v518 = vrot.slane %v514, 4
      %v520 = vshll.u32 %v508, 16
      %v522 = vsel %vm510, %v518, %v520
      %vm525 = vcmask 1043456
      %vm526 = vmand %vm525, %vm354
      %v527 = vld [vmem:[#allocation3 + $0x4] sm:$0xf]
      %v528 = vsel %vm526, %v517, %v527
      %529 = vst [vmem:[#allocation3 + $0x4] sm:$0xf] %v528
      %530 = vst [vmem:[#allocation3 + $0x8] sm:$0x1] %v522
      %v531 = vld [vmem:[%s465] sm:$0xf]
      %v532 = vld [vmem:[%s465 + $0x4] sm:$0x1]
      %s533 = scalar_lea.vmem [#allocation2], 24
      %v534 = vld [vmem:[%s533] sm:$0xf]
      %v535 = vld [vmem:[%s533 + $0x4] sm:$0x1]
      %v538 = vunpack.c.l.b16 %v531
      %v539 = vunpack.c.l.b16 %v532
      %v540 = vpack.c.b16 %v539, %v538
      %v542 = vshrl.u32 %v540, 16
      %v544 = vshll.u32 %v540, 16
      %v546 = vrot.slane %v544, 1
      %v547 = vor.u32 %v542, %v546
      %548 = vrot.lane.b32.xlu0 %v547, 32
      %v549 = vpop.permute.xlu0 %548
      %v552 = vunpack.c.l.b16 %v534
      %v553 = vunpack.c.l.b16 %v535
      %v554 = vpack.c.b16 %v553, %v552
      %555 = vrot.lane.b32.xlu0 %v554, 64
      %v556 = vpop.permute.xlu0 %555
      %v558 = vshrl.u32 %v554, 16
      %v560 = vshll.u32 %v554, 16
      %v562 = vrot.slane %v560, 1
      %v563 = vor.u32 %v558, %v562
      %564 = vrot.lane.b32.xlu0 %v563, 96
      %v565 = vpop.permute.xlu0 %564
      %v567 = vsel %vm441, %v540, %v549
      %v569 = vsel %vm444, %v567, %v556
      %v571 = vsel %vm447, %v569, %v565
      %v573 = vunpack.c.l.b16 %v571
      %v574 = vunpack.c.h.b16 %v571
      %v575 = vpack.c.b16 %v573, %v573
      %v576 = vpack.c.b16 %v574, %v574
      %vm577 = vcmask 1044484
      %vm578 = vmor %vm458, %vm577
      %v579 = vrot.slane %v575, 7
      %v580 = vrot.slane %v579, 4
      %v581 = vrot.slane %v576, 7
      %v582 = vsel %vm578, %v580, %v581
      %585 = vst [vmem:[#allocation3 + $0x8] sm:$0xe] %v579
      %vm586 = vcmask 1041408
      %vm587 = vsmask.f32 1280
      %vm588 = vmand %vm586, %vm587
      %v589 = vld [vmem:[#allocation3 + $0xc] sm:$0x3]
      %v590 = vsel %vm588, %v582, %v589
      %591 = vst [vmem:[#allocation3 + $0xc] sm:$0x3] %v590
      %v592 = vld [vmem:[%s533] sm:$0xf]
      %v593 = vld [vmem:[%s533 + $0x4] sm:$0x1]
      %s594 = scalar_lea.vmem [#allocation2], 32
      %v595 = vld [vmem:[%s594] sm:$0xf]
      %v596 = vld [vmem:[%s594 + $0x4] sm:$0x1]
      %v599 = vunpack.c.l.b16 %v592
      %v600 = vunpack.c.l.b16 %v593
      %v601 = vpack.c.b16 %v600, %v599
      %v603 = vshrl.u32 %v601, 16
      %v605 = vshll.u32 %v601, 16
      %v607 = vrot.slane %v605, 1
      %v608 = vor.u32 %v603, %v607
      %609 = vrot.lane.b32.xlu0 %v608, 32
      %v610 = vpop.permute.xlu0 %609
      %v613 = vunpack.c.l.b16 %v595
      %v614 = vunpack.c.l.b16 %v596
      %v615 = vpack.c.b16 %v614, %v613
      %616 = vrot.lane.b32.xlu0 %v615, 64
      %v617 = vpop.permute.xlu0 %616
      %v619 = vshrl.u32 %v615, 16
      %v621 = vshll.u32 %v615, 16
      %v623 = vrot.slane %v621, 1
      %v624 = vor.u32 %v619, %v623
      %625 = vrot.lane.b32.xlu0 %v624, 96
      %v626 = vpop.permute.xlu0 %625
      %v628 = vsel %vm441, %v601, %v610
      %v630 = vsel %vm444, %v628, %v617
      %v632 = vsel %vm447, %v630, %v626
      %v634 = vunpack.c.l.b16 %v632
      %v635 = vunpack.c.h.b16 %v632
      %v636 = vpack.c.b16 %v634, %v634
      %v637 = vpack.c.b16 %v635, %v635
      %vm638 = vsmask.f32 5392
      %vm639 = vmor %vm587, %vm638
      %v641 = vshrl.u32 %v636, 16
      %v643 = vrot.slane %v641, 6
      %v644 = vshll.u32 %v636, 16
      %v646 = vrot.slane %v644, 7
      %v647 = vor.u32 %v643, %v646
      %v648 = vrot.slane %v647, 4
      %v650 = vshll.u32 %v637, 16
      %v652 = vrot.slane %v650, 7
      %v653 = vsel %vm639, %v648, %v652
      %vm656 = vcmask 1043457
      %vm657 = vsmask.f32 7942
      %vm658 = vmand %vm656, %vm657
      %v659 = vld [vmem:[#allocation3 + $0xc] sm:$0xe]
      %v660 = vsel %vm658, %v647, %v659
      %661 = vst [vmem:[#allocation3 + $0xc] sm:$0xe] %v660
      %662 = vst [vmem:[#allocation3 + $0x10] sm:$0x3] %v653
      %v663 = vld [vmem:[%s594] sm:$0xf]
      %v664 = vld [vmem:[%s594 + $0x4] sm:$0x1]
      %s665 = scalar_lea.vmem [#allocation2], 40
      %v666 = vld [vmem:[%s665] sm:$0xf]
      %v667 = vld [vmem:[%s665 + $0x4] sm:$0x1]
      %v670 = vunpack.c.l.b16 %v663
      %v671 = vunpack.c.l.b16 %v664
      %v672 = vpack.c.b16 %v671, %v670
      %v674 = vshrl.u32 %v672, 16
      %v676 = vshll.u32 %v672, 16
      %v678 = vrot.slane %v676, 1
      %v679 = vor.u32 %v674, %v678
      %680 = vrot.lane.b32.xlu0 %v679, 32
      %v681 = vpop.permute.xlu0 %680
      %v684 = vunpack.c.l.b16 %v666
      %v685 = vunpack.c.l.b16 %v667
      %v686 = vpack.c.b16 %v685, %v684
      %687 = vrot.lane.b32.xlu0 %v686, 64
      %v688 = vpop.permute.xlu0 %687
      %v690 = vshrl.u32 %v686, 16
      %v692 = vshll.u32 %v686, 16
      %v694 = vrot.slane %v692, 1
      %v695 = vor.u32 %v690, %v694
      %696 = vrot.lane.b32.xlu0 %v695, 96
      %v697 = vpop.permute.xlu0 %696
      %v699 = vsel %vm441, %v672, %v681
      %v701 = vsel %vm444, %v699, %v688
      %v703 = vsel %vm447, %v701, %v697
      %v705 = vunpack.c.l.b16 %v703
      %v706 = vunpack.c.h.b16 %v703
      %v707 = vpack.c.b16 %v705, %v705
      %v708 = vpack.c.b16 %v706, %v706
      %vm709 = vcmask 1045508
      %vm710 = vmor %vm586, %vm709
      %v711 = vrot.slane %v707, 6
      %v712 = vrot.slane %v711, 4
      %v713 = vrot.slane %v708, 6
      %v714 = vsel %vm710, %v712, %v713
      %717 = vst [vmem:[#allocation3 + $0x10] sm:$0xc] %v711
      %vm718 = vcmask 1042432
      %vm719 = vsmask.f32 2304
      %vm720 = vmand %vm718, %vm719
      %v721 = vld [vmem:[#allocation3 + $0x14] sm:$0x7]
      %v722 = vsel %vm720, %v714, %v721
      %723 = vst [vmem:[#allocation3 + $0x14] sm:$0x7] %v722
      %v724 = vld [vmem:[%s665] sm:$0xf]
      %v725 = vld [vmem:[%s665 + $0x4] sm:$0x1]
      %s726 = scalar_lea.vmem [#allocation2], 48
      %v727 = vld [vmem:[%s726] sm:$0xf]
      %v728 = vld [vmem:[%s726 + $0x4] sm:$0x1]
      %v731 = vunpack.c.l.b16 %v724
      %v732 = vunpack.c.l.b16 %v725
      %v733 = vpack.c.b16 %v732, %v731
      %v735 = vshrl.u32 %v733, 16
      %v737 = vshll.u32 %v733, 16
      %v739 = vrot.slane %v737, 1
      %v740 = vor.u32 %v735, %v739
      %741 = vrot.lane.b32.xlu0 %v740, 32
      %v742 = vpop.permute.xlu0 %741
      %v745 = vunpack.c.l.b16 %v727
      %v746 = vunpack.c.l.b16 %v728
      %v747 = vpack.c.b16 %v746, %v745
      %748 = vrot.lane.b32.xlu0 %v747, 64
      %v749 = vpop.permute.xlu0 %748
      %v751 = vshrl.u32 %v747, 16
      %v753 = vshll.u32 %v747, 16
      %v755 = vrot.slane %v753, 1
      %v756 = vor.u32 %v751, %v755
      %757 = vrot.lane.b32.xlu0 %v756, 96
      %v758 = vpop.permute.xlu0 %757
      %v760 = vsel %vm441, %v733, %v742
      %v762 = vsel %vm444, %v760, %v749
      %v764 = vsel %vm447, %v762, %v758
      %v766 = vunpack.c.l.b16 %v764
      %v767 = vunpack.c.h.b16 %v764
      %v768 = vpack.c.b16 %v766, %v766
      %v769 = vpack.c.b16 %v767, %v767
      %vm770 = vsmask.f32 6416
      %vm771 = vmor %vm719, %vm770
      %v773 = vshrl.u32 %v768, 16
      %v775 = vrot.slane %v773, 5
      %v776 = vshll.u32 %v768, 16
      %v778 = vrot.slane %v776, 6
      %v779 = vor.u32 %v775, %v778
      %v780 = vrot.slane %v779, 4
      %v782 = vshll.u32 %v769, 16
      %v784 = vrot.slane %v782, 6
      %v785 = vsel %vm771, %v780, %v784
      %vm788 = vcmask 1043458
      %vm789 = vsmask.f32 7946
      %vm790 = vmand %vm788, %vm789
      %v791 = vld [vmem:[#allocation3 + $0x14] sm:$0xc]
      %v792 = vsel %vm790, %v779, %v791
      %793 = vst [vmem:[#allocation3 + $0x14] sm:$0xc] %v792
      %794 = vst [vmem:[#allocation3 + $0x18] sm:$0x7] %v785
      %v795 = vld [vmem:[%s726] sm:$0xf]
      %v796 = vld [vmem:[%s726 + $0x4] sm:$0x1]
      %s797 = scalar_lea.vmem [#allocation2], 56
      %v798 = vld [vmem:[%s797] sm:$0xf]
      %v799 = vld [vmem:[%s797 + $0x4] sm:$0x1]
      %v802 = vunpack.c.l.b16 %v795
      %v803 = vunpack.c.l.b16 %v796
      %v804 = vpack.c.b16 %v803, %v802
      %v806 = vshrl.u32 %v804, 16
      %v808 = vshll.u32 %v804, 16
      %v810 = vrot.slane %v808, 1
      %v811 = vor.u32 %v806, %v810
      %812 = vrot.lane.b32.xlu0 %v811, 32
      %v813 = vpop.permute.xlu0 %812
      %v816 = vunpack.c.l.b16 %v798
      %v817 = vunpack.c.l.b16 %v799
      %v818 = vpack.c.b16 %v817, %v816
      %819 = vrot.lane.b32.xlu0 %v818, 64
      %v820 = vpop.permute.xlu0 %819
      %v822 = vshrl.u32 %v818, 16
      %v824 = vshll.u32 %v818, 16
      %v826 = vrot.slane %v824, 1
      %v827 = vor.u32 %v822, %v826
      %828 = vrot.lane.b32.xlu0 %v827, 96
      %v829 = vpop.permute.xlu0 %828
      %v831 = vsel %vm441, %v804, %v813
      %v833 = vsel %vm444, %v831, %v820
      %v835 = vsel %vm447, %v833, %v829
      %v837 = vunpack.c.l.b16 %v835
      %v838 = vunpack.c.h.b16 %v835
      %v839 = vpack.c.b16 %v837, %v837
      %v840 = vpack.c.b16 %v838, %v838
      %vm841 = vcmask 1046532
      %vm842 = vmor %vm718, %vm841
      %v843 = vrot.slane %v839, 5
      %v844 = vrot.slane %v843, 4
      %v845 = vrot.slane %v840, 5
      %v846 = vsel %vm842, %v844, %v845
      %849 = vst [vmem:[#allocation3 + $0x18] sm:$0x8] %v843
      %vm850 = vsmask.f32 3328
      %vm851 = vmand %vm525, %vm850
      %v852 = vld [vmem:[#allocation3 + $0x1c] sm:$0xf]
      %v853 = vsel %vm851, %v846, %v852
      %854 = vst [vmem:[#allocation3 + $0x1c] sm:$0xf] %v853
      %v855 = vld [vmem:[%s797] sm:$0xf]
      %v856 = vld [vmem:[%s797 + $0x4] sm:$0x1]
      %s857 = scalar_lea.vmem [#allocation2], 64
      %v858 = vld [vmem:[%s857] sm:$0xf]
      %v859 = vld [vmem:[%s857 + $0x4] sm:$0x1]
      %v862 = vunpack.c.l.b16 %v855
      %v863 = vunpack.c.l.b16 %v856
      %v864 = vpack.c.b16 %v863, %v862
      %v866 = vshrl.u32 %v864, 16
      %v868 = vshll.u32 %v864, 16
      %v870 = vrot.slane %v868, 1
      %v871 = vor.u32 %v866, %v870
      %872 = vrot.lane.b32.xlu0 %v871, 32
      %v873 = vpop.permute.xlu0 %872
      %v876 = vunpack.c.l.b16 %v858
      %v877 = vunpack.c.l.b16 %v859
      %v878 = vpack.c.b16 %v877, %v876
      %879 = vrot.lane.b32.xlu0 %v878, 64
      %v880 = vpop.permute.xlu0 %879
      %v882 = vshrl.u32 %v878, 16
      %v884 = vshll.u32 %v878, 16
      %v886 = vrot.slane %v884, 1
      %v887 = vor.u32 %v882, %v886
      %888 = vrot.lane.b32.xlu0 %v887, 96
      %v889 = vpop.permute.xlu0 %888
      %v891 = vsel %vm441, %v864, %v873
      %v893 = vsel %vm444, %v891, %v880
      %v895 = vsel %vm447, %v893, %v889
      %v897 = vunpack.c.l.b16 %v895
      %v898 = vunpack.c.h.b16 %v895
      %v899 = vpack.c.b16 %v897, %v897
      %v900 = vpack.c.b16 %v898, %v898
      %vm901 = vsmask.f32 7440
      %vm902 = vmor %vm850, %vm901
      %v904 = vshll.u32 %v899, 16
      %v906 = vrot.slane %v904, 5
      %v907 = vshrl.u32 %v899, 16
      %v909 = vrot.slane %v907, 4
      %v910 = vor.u32 %v909, %v906
      %v911 = vrot.slane %v910, 4
      %v913 = vshll.u32 %v900, 16
      %v915 = vrot.slane %v913, 5
      %v916 = vsel %vm902, %v911, %v915
      %vm919 = vcmask 1043459
      %vm920 = vsmask.f32 7950
      %vm921 = vmand %vm919, %vm920
      %v922 = vld [vmem:[#allocation3 + $0x1c] sm:$0x8]
      %v923 = vsel %vm921, %v906, %v922
      %924 = vst [vmem:[#allocation3 + $0x1c] sm:$0x8] %v923
      %925 = vst [vmem:[#allocation3 + $0x20] sm:$0xf] %v916
      %v926 = vld [vmem:[%s857] sm:$0xf]
      %v927 = vld [vmem:[%s857 + $0x4] sm:$0x1]
      %s928 = scalar_lea.vmem [#allocation2], 72
      %v929 = vld [vmem:[%s928] sm:$0xf]
      %v930 = vld [vmem:[%s928 + $0x4] sm:$0x1]
      %v933 = vunpack.c.l.b16 %v926
      %v934 = vunpack.c.l.b16 %v927
      %v935 = vpack.c.b16 %v934, %v933
      %v937 = vshrl.u32 %v935, 16
      %v939 = vshll.u32 %v935, 16
      %v941 = vrot.slane %v939, 1
      %v942 = vor.u32 %v937, %v941
      %943 = vrot.lane.b32.xlu0 %v942, 32
      %v944 = vpop.permute.xlu0 %943
      %v947 = vunpack.c.l.b16 %v929
      %v948 = vunpack.c.l.b16 %v930
      %v949 = vpack.c.b16 %v948, %v947
      %950 = vrot.lane.b32.xlu0 %v949, 64
      %v951 = vpop.permute.xlu0 %950
      %v953 = vshrl.u32 %v949, 16
      %v955 = vshll.u32 %v949, 16
      %v957 = vrot.slane %v955, 1
      %v958 = vor.u32 %v953, %v957
      %959 = vrot.lane.b32.xlu0 %v958, 96
      %v960 = vpop.permute.xlu0 %959
      %v962 = vsel %vm441, %v935, %v944
      %v964 = vsel %vm444, %v962, %v951
      %v966 = vsel %vm447, %v964, %v960
      %v968 = vunpack.c.l.b16 %v966
      %v969 = vunpack.c.h.b16 %v966
      %v970 = vpack.c.b16 %v968, %v968
      %v971 = vpack.c.b16 %v969, %v969
      %974 = vst [vmem:[#allocation3 + $0x24] sm:$0xf] %v970
      %v975 = vld [vmem:[#allocation3 + $0x28] sm:$0x1]
      %v976 = vsel %vm459, %v971, %v975
      %977 = vst [vmem:[#allocation3 + $0x28] sm:$0x1] %v976
      %v978 = vld [vmem:[#allocation3] sm:$0xf]
      %v979 = vld [vmem:[#allocation3 + $0x4] sm:$0xf]
      %v980 = vld [vmem:[#allocation3 + $0x8] sm:$0xf]
      %v981 = vld [vmem:[#allocation3 + $0xc] sm:$0xf]
      %v982 = vld [vmem:[#allocation3 + $0x10] sm:$0xf]
      %v983 = vld [vmem:[#allocation3 + $0x14] sm:$0xf]
      %v984 = vld [vmem:[#allocation3 + $0x18] sm:$0xf]
      %v985 = vld [vmem:[#allocation3 + $0x1c] sm:$0xf]
      %v986 = vld [vmem:[#allocation3 + $0x20] sm:$0xf]
      %v987 = vld [vmem:[#allocation3 + $0x24] sm:$0xf]
      %v988 = vld [vmem:[#allocation3 + $0x28] sm:$0x1]
      %v989 = vld [vmem:[%s228] sm:$0xf]
      %v990 = vld [vmem:[%s228 + $0x4] sm:$0xf]
      %v991 = vld [vmem:[%s228 + $0x8] sm:$0xf]
      %v992 = vld [vmem:[%s228 + $0xc] sm:$0xf]
      %v993 = vld [vmem:[%s228 + $0x10] sm:$0xf]
      %v994 = vld [vmem:[%s228 + $0x14] sm:$0xf]
      %v995 = vld [vmem:[%s228 + $0x18] sm:$0xf]
      %v996 = vld [vmem:[%s228 + $0x1c] sm:$0xf]
      %v997 = vld [vmem:[%s228 + $0x20] sm:$0xf]
      %v998 = vld [vmem:[%s228 + $0x24] sm:$0xf]
      %v999 = vld [vmem:[%s228 + $0x28] sm:$0xf]
      %v1000 = vld [vmem:[%s228 + $0x2c] sm:$0xf]
      %v1001 = vld [vmem:[%s228 + $0x30] sm:$0xf]
      %v1002 = vld [vmem:[%s228 + $0x34] sm:$0xf]
      %v1003 = vld [vmem:[%s228 + $0x38] sm:$0xf]
      %v1004 = vld [vmem:[%s228 + $0x3c] sm:$0xf]
      %v1005 = vld [vmem:[%s231] sm:$0x1]
      %v1007 = vlaneseq
      %v1008 = vshrl.u32 %v1007, 7
      %v1009 = vsub.s32 0, %v1008
      %v1010 = vrot.slane %v1005, %v1009
      %v1023 = vunpack.c.l.b16 %v978
      %v1024 = vunpack.c.l.b16 %v979
      %v1025 = vunpack.c.l.b16 %v980
      %v1026 = vunpack.c.l.b16 %v981
      %v1027 = vunpack.c.l.b16 %v982
      %v1028 = vunpack.c.l.b16 %v983
      %v1029 = vunpack.c.l.b16 %v984
      %v1030 = vunpack.c.l.b16 %v985
      %v1031 = vunpack.c.l.b16 %v986
      %v1032 = vunpack.c.l.b16 %v987
      %v1033 = vunpack.c.l.b16 %v988
      %v1034 = vpack.c.b16 %v1024, %v1023
      %v1035 = vpack.c.b16 %v1026, %v1025
      %v1036 = vpack.c.b16 %v1028, %v1027
      %v1037 = vpack.c.b16 %v1030, %v1029
      %v1038 = vpack.c.b16 %v1032, %v1031
      %v1039 = vpack.c.b16 %v1033, %v1033
      %v1062 = vunpack.c.l.b16 %v989
      %v1063 = vunpack.c.l.b16 %v990
      %v1064 = vunpack.c.l.b16 %v991
      %v1065 = vunpack.c.l.b16 %v992
      %v1066 = vunpack.c.l.b16 %v993
      %v1067 = vunpack.c.l.b16 %v994
      %v1068 = vunpack.c.l.b16 %v995
      %v1069 = vunpack.c.l.b16 %v996
      %v1070 = vunpack.c.l.b16 %v997
      %v1071 = vunpack.c.l.b16 %v998
      %v1072 = vunpack.c.l.b16 %v999
      %v1073 = vunpack.c.l.b16 %v1000
      %v1074 = vunpack.c.l.b16 %v1001
      %v1075 = vunpack.c.l.b16 %v1002
      %v1076 = vunpack.c.l.b16 %v1003
      %v1077 = vunpack.c.l.b16 %v1004
      %v1078 = vpack.c.b16 %v1063, %v1062
      %v1079 = vpack.c.b16 %v1065, %v1064
      %v1080 = vpack.c.b16 %v1067, %v1066
      %v1081 = vpack.c.b16 %v1069, %v1068
      %v1082 = vpack.c.b16 %v1071, %v1070
      %v1083 = vpack.c.b16 %v1073, %v1072
      %v1084 = vpack.c.b16 %v1075, %v1074
      %v1085 = vpack.c.b16 %v1077, %v1076
      %1094 = vmatprep.subr.bf16.mxu0 0
      %1095 = vmatpush1.bf16.msra.mxu0 %v1085
      %1096 = vmatprep.subr.bf16.mxu0 0
      %1097 = vmatpush1.bf16.msra.mxu0 %v1084
      %1098 = vmatprep.subr.bf16.mxu0 0
      %1099 = vmatpush1.bf16.msra.mxu0 %v1083
      %1100 = vmatprep.subr.bf16.mxu0 0
      %1101 = vmatpush1.bf16.msra.mxu0 %v1082
      %1102 = vmatprep.subr.bf16.mxu0 0
      %1103 = vmatpush1.bf16.msra.mxu0 %v1081
      %1104 = vmatprep.subr.bf16.mxu0 0
      %1105 = vmatpush1.bf16.msra.mxu0 %v1080
      %1106 = vmatprep.subr.bf16.mxu0 0
      %1107 = vmatpush1.bf16.msra.mxu0 %v1079
      %1108 = vmatprep.subr.bf16.mxu0 0
      %1109 = vmatpush1.bf16.msra.mxu0 %v1078
      %1110 = vmatprep.subr.bf16.mxu0 0
      %1111 = vmatpush2.bf16.msra.mxu0 0
      %1112 = vmatprep.subr.bf16.mxu0 0
      %1113 = vmatpush2.bf16.msra.mxu0 0
      %1114 = vmatprep.subr.bf16.mxu0 0
      %1115 = vmatpush2.bf16.msra.mxu0 0
      %1116 = vmatprep.subr.bf16.mxu0 0
      %1117 = vmatpush2.bf16.msra.mxu0 0
      %1118 = vmatprep.subr.bf16.mxu0 0
      %1119 = vmatpush2.bf16.msra.mxu0 0
      %1120 = vmatprep.subr.bf16.mxu0 0
      %1121 = vmatpush2.bf16.msra.mxu0 0
      %1122 = vmatprep.subr.bf16.mxu0 0
      %1123 = vmatpush2.bf16.msra.mxu0 0
      %1124 = vmatprep.subr.bf16.mxu0 0
      %1125 = vmatpush2.bf16.msra.mxu0 0
      %1126 = vmatprep.mubr.bf16.mxu0 0
      %1127 = vmatmul.mubr.bf16.gmra.mxu0 %v1034
      %v1128 = vpop.f32.mrf.mxu0
      %v1129 = vadd.f32 %v1010, %v1128
      %v1130 = vpop.f32.mrf.mxu0
      %v1131 = vpop.f32.mrf.mxu0
      %v1132 = vadd.f32 %v1010, %v1131
      %v1133 = vpop.f32.mrf.mxu0
      %1134 = vmatprep.mubr.bf16.mxu0 0
      %1135 = vmatmul.mubr.bf16.gmra.mxu0 %v1035
      %v1136 = vpop.f32.mrf.mxu0
      %v1137 = vadd.f32 %v1010, %v1136
      %v1138 = vpop.f32.mrf.mxu0
      %v1139 = vpop.f32.mrf.mxu0
      %v1140 = vadd.f32 %v1010, %v1139
      %v1141 = vpop.f32.mrf.mxu0
      %1142 = vmatprep.mubr.bf16.mxu0 0
      %1143 = vmatmul.mubr.bf16.gmra.mxu0 %v1036
      %v1144 = vpop.f32.mrf.mxu0
      %v1145 = vadd.f32 %v1010, %v1144
      %v1146 = vpop.f32.mrf.mxu0
      %v1147 = vpop.f32.mrf.mxu0
      %v1148 = vadd.f32 %v1010, %v1147
      %v1149 = vpop.f32.mrf.mxu0
      %1150 = vmatprep.mubr.bf16.mxu0 0
      %1151 = vmatmul.mubr.bf16.gmra.mxu0 %v1037
      %v1152 = vpop.f32.mrf.mxu0
      %v1153 = vadd.f32 %v1010, %v1152
      %v1154 = vpop.f32.mrf.mxu0
      %v1155 = vpop.f32.mrf.mxu0
      %v1156 = vadd.f32 %v1010, %v1155
      %v1157 = vpop.f32.mrf.mxu0
      %1158 = vmatprep.mubr.bf16.mxu0 0
      %1159 = vmatmul.mubr.bf16.gmra.mxu0 %v1038
      %v1160 = vpop.f32.mrf.mxu0
      %v1161 = vadd.f32 %v1010, %v1160
      %v1162 = vpop.f32.mrf.mxu0
      %v1163 = vpop.f32.mrf.mxu0
      %v1164 = vadd.f32 %v1010, %v1163
      %v1165 = vpop.f32.mrf.mxu0
      %1166 = vmatprep.mubr.bf16.mxu0 0
      %1167 = vmatmul.mubr.bf16.gmra.mxu0 %v1039
      %v1168 = vpop.f32.mrf.mxu0
      %v1169 = vadd.f32 %v1010, %v1168
      %v1170 = vpop.f32.mrf.mxu0
      %v1171 = vpop.f32.mrf.mxu0
      %v1172 = vpop.f32.mrf.mxu0
      %1173 = vdwg.mxu0
      %v1174 = vmax.f32 %v1129, 0.0
      %v1175 = vmax.f32 %v1132, 0.0
      %v1176 = vmax.f32 %v1137, 0.0
      %v1177 = vmax.f32 %v1140, 0.0
      %v1178 = vmax.f32 %v1145, 0.0
      %v1179 = vmax.f32 %v1148, 0.0
      %v1180 = vmax.f32 %v1153, 0.0
      %v1181 = vmax.f32 %v1156, 0.0
      %v1182 = vmax.f32 %v1161, 0.0
      %v1183 = vmax.f32 %v1164, 0.0
      %v1184 = vmax.f32 %v1169, 0.0
      %v1185 = vpack.c.bf16 %v1175, %v1174
      %v1186 = vpack.c.bf16 %v1177, %v1176
      %v1187 = vpack.c.bf16 %v1179, %v1178
      %v1188 = vpack.c.bf16 %v1181, %v1180
      %v1189 = vpack.c.bf16 %v1183, %v1182
      %v1190 = vpack.c.bf16 %v1184, %v1184
      %v1197 = vunpack.c.l.b16 %v1185
      %v1198 = vunpack.c.h.b16 %v1185
      %v1199 = vunpack.c.l.b16 %v1186
      %v1200 = vunpack.c.h.b16 %v1186
      %v1201 = vunpack.c.l.b16 %v1187
      %v1202 = vunpack.c.h.b16 %v1187
      %v1203 = vunpack.c.l.b16 %v1188
      %v1204 = vunpack.c.h.b16 %v1188
      %v1205 = vunpack.c.l.b16 %v1189
      %v1206 = vunpack.c.h.b16 %v1189
      %v1207 = vunpack.c.l.b16 %v1190
      %v1208 = vpack.c.b16 %v1197, %v1197
      %v1209 = vpack.c.b16 %v1198, %v1198
      %v1210 = vpack.c.b16 %v1199, %v1199
      %v1211 = vpack.c.b16 %v1200, %v1200
      %v1212 = vpack.c.b16 %v1201, %v1201
      %v1213 = vpack.c.b16 %v1202, %v1202
      %v1214 = vpack.c.b16 %v1203, %v1203
      %v1215 = vpack.c.b16 %v1204, %v1204
      %v1216 = vpack.c.b16 %v1205, %v1205
      %v1217 = vpack.c.b16 %v1206, %v1206
      %v1218 = vpack.c.b16 %v1207, %v1207
      %1230 = vst [vmem:[%s240] sm:$0xf] %v1208
      %1231 = vst [vmem:[%s240 + $0x4] sm:$0xf] %v1209
      %1232 = vst [vmem:[%s240 + $0x8] sm:$0xf] %v1210
      %1233 = vst [vmem:[%s240 + $0xc] sm:$0xf] %v1211
      %1234 = vst [vmem:[%s240 + $0x10] sm:$0xf] %v1212
      %1235 = vst [vmem:[%s240 + $0x14] sm:$0xf] %v1213
      %1236 = vst [vmem:[%s240 + $0x18] sm:$0xf] %v1214
      %1237 = vst [vmem:[%s240 + $0x1c] sm:$0xf] %v1215
      %1238 = vst [vmem:[%s240 + $0x20] sm:$0xf] %v1216
      %1239 = vst [vmem:[%s240 + $0x24] sm:$0xf] %v1217
      %v1240 = vld [vmem:[%s240 + $0x28] sm:$0x1]
      %v1241 = vsel %vm459, %v1218, %v1240
      %1242 = vst [vmem:[%s240 + $0x28] sm:$0x1] %v1241
      %p1243 = scmp.lt.s32.totalorder %s18, 1
      %s1244 = scalar_select %p1243, %s18, 1
      %p1245 = scmp.lt.s32.totalorder %s19, 1
      %s1246 = scalar_select %p1245, %s19, 1
      %s1247 = smul.addr %s1246, 11
      %s1248 = smul.addr %s1244, 22
      %s1249 = sadd.s32 %s1247, %s1248
      %s1250 = smul.addr %s1249, 4
      %s1251 = scalar_lea.vmem %s3, %s1250
      // Predicated region
      $region33: #{posenet_forward.7} parent=31 // pred_check
        %p1252 = pneg %p126
      $region34: #{posenet_forward.7} parent=31 // pred_check_branch
        %1254 = sbr.rel (%p1252) target = $region36
      $region35: #{posenet_forward.7} parent=31 // pred_region
        _
      $region36: #{posenet_forward.7} parent=31 // pred_fallthru
        _
    $region32: #{posenet_forward.7} parent=5 // pred_fallthru
      _
    %p1255 = scmp.le.s32.totalorder 2, %s9
    // Predicated region
    $region37: #{posenet_forward.7} parent=5 // pred_check
      %p1256 = pneg %p1255
    $region38: #{posenet_forward.7} parent=5 // pred_check_branch
      %1258 = sbr.rel (%p1256) target = $region40
    $region39: #{posenet_forward.7} parent=5 // pred_region
      %s1259 = ssub.s32 %s9, 2
      // Predicated region
      $region41: #{posenet_forward.7} parent=39 // pred_check
        %p1260 = pneg %p132
      $region42: #{posenet_forward.7} parent=39 // pred_check_branch
        %1262 = sbr.rel (%p1260) target = $region44
      $region43: #{posenet_forward.7} parent=39 // pred_region
        %p1263 = scmp.lt.s32.totalorder %s20, 1
        %s1264 = scalar_select %p1263, %s20, 1
        %p1265 = scmp.lt.s32.totalorder %s21, 1
        %s1266 = scalar_select %p1265, %s21, 1
        %s1267 = smul.addr %s1266, 11
        %s1268 = smul.addr %s1264, 22
        %s1269 = sadd.s32 %s1267, %s1268
        %s1270 = smul.addr %s1269, 4
        %s1271 = scalar_lea.vmem %s3, %s1270
      $region44: #{posenet_forward.7} parent=39 // pred_fallthru
        _
    $region40: #{posenet_forward.7} parent=5 // pred_fallthru
      _
  $region6: #{posenet_forward.7} parent=0 // loop_footer
    %s13 = sadd.s32 1, %s9
  $region7: #{posenet_forward.7} parent=0 // loop_footer_branch
    %8 = sbr.rel target = $region3
  $region8: #{posenet_forward.7} parent=0 // loop_exit
    _

// kernel: posenet_forward.8
$region0: #{posenet_forward.8}
  #allocation0 [shape = 'u32[]', space=smem, size = 0x4, offset = 0x4, fixed_abs, tag = 'smem constant byte address 0x4 - core index']
  #allocation1 [shape = 'u32[144,128]{1,0:T(1,128)}', space=vmem, size = 0x12000, scoped, tag = 'internal scratch']
  %s0 = inlined_call_operand.vmem [shape: bf16[2,2,16,16,32], index: 0, kind: input, shape index: {}]
  %s1 = inlined_call_operand.vmem [shape: bf16[2,32,24], index: 1, kind: input, shape index: {}]
  %s2 = inlined_call_operand.vmem [shape: f32[2,1,24], index: 2, kind: input, shape index: {}]
  %s3 = inlined_call_operand.vmem [shape: f32[2,2,24,256], index: 3, kind: output, shape index: {}]
  %s4 = sld [smem:[#allocation0]]
  $region79: #{posenet_forward.8} parent=0
    _
  %s6 = ssub.s32 1, %s4
  %s7 = scalar_select 0, %s6, %s4
  $region1: #{posenet_forward.8} parent=0
    #allocation2 [shape = 'u8[24576]{0}', space=vmem, size = 0x6000, scoped, tag = 'output window, operand 0']
    loop: start=0, step=1, limit=10
    $region2: #{posenet_forward.8} parent=1 // loop_pre_header
      _
    $region3: #{posenet_forward.8} parent=1 // loop_header
      %s9 = sphi 0, %s13
      %p10 = scmp.ge.s32.totalorder %s9, 10
      %s16 = sphi 0, %s35
      %s17 = sphi 0, %s31
      %s18 = sphi 0, %s27
      %s19 = sphi 0, %s16
      %s20 = sphi 0, %s17
      %s21 = sphi 0, %s18
      %s22 = sphi 0, %s19
      %s23 = sphi 0, %s20
      %s24 = sphi 0, %s21
      %s42 = sphi 0, %s44
      %s45 = sphi 0, %s42
      %s46 = sphi 0, %s45
      %s62 = sphi 0, %s46
      %s68 = sphi 0, %s70
      %s71 = sphi 0, %s68
      %s72 = sphi 0, %s71
      %s88 = sphi 0, %s72
      %s94 = sphi 0, %s96
      %s97 = sphi 0, %s94
      %s98 = sphi 0, %s97
      %s114 = sphi 0, %s98
      %s124 = sphi 0, %s126
      %s127 = sphi 0, %s124
      %s128 = sphi 0, %s127
      %s144 = sphi 0, %s128
    $region4: #{posenet_forward.8} parent=1 // loop_header_branch
      %12 = sbr.rel (%p10) target = $region8
    $region5: #{posenet_forward.8} parent=1 // loop_body
      %s14 = ssub.s32 %s9, 1
      %s15 = ssub.s32 %s9, 2
      %s25 = sadd.s32 1, %s18
      %p26 = scmp.ge.s32.totalorder %s25, 2
      %s27 = scalar_select %p26, 0, %s25
      %s28 = sadd.s32 1, %s17
      %s29 = scalar_select %p26, %s28, %s17
      %p30 = scmp.ge.s32.totalorder %s29, 2
      %s31 = scalar_select %p30, 0, %s29
      %s32 = sadd.s32 1, %s16
      %s33 = scalar_select %p30, %s32, %s16
      %p34 = scmp.ge.s32.totalorder %s33, 2
      %s35 = scalar_select %p34, 0, %s33
      %s36 = ssub.s32 %s16, %s35
      %s37 = ssub.s32 %s17, %s31
      %s38 = sor.u32 %s36, %s37
      %s39 = ssub.s32 %s18, %s27
      %s40 = sor.u32 %s38, %s39
      %p41 = scmp.eq.s32.totalorder %s40, 0
      %s43 = sadd.s32 %s42, 1
      %s44 = scalar_select %p41, %s42, %s43
      %p47 = pneg %p41
      %p48 = scmp.eq.s32.totalorder %s9, 7
      %p49 = por %p47, %p48
      %p50 = scmp.ne.s32.totalorder %s42, %s45
      %p51 = scmp.eq.s32.totalorder %s9, 0
      %p52 = por %p50, %p51
      %p53 = scmp.ne.s32.totalorder %s42, %s45
      %p54 = scmp.eq.s32.totalorder %s14, 7
      %p55 = por %p53, %p54
      %p56 = scmp.ne.s32.totalorder %s45, %s46
      %p57 = scmp.eq.s32.totalorder %s14, 0
      %p58 = por %p56, %p57
      %p59 = scmp.ne.s32.totalorder %s45, %s46
      %p60 = scmp.eq.s32.totalorder %s15, 7
      %p61 = por %p59, %p60
      %p63 = scmp.ne.s32.totalorder %s46, %s62
      %p64 = scmp.eq.s32.totalorder %s15, 0
      %p65 = por %p63, %p64
      %s66 = ssub.s32 %s16, %s35
      %p67 = scmp.eq.s32.totalorder %s66, 0
      %s69 = sadd.s32 %s68, 1
      %s70 = scalar_select %p67, %s68, %s69
      %p73 = pneg %p67
      %p74 = scmp.eq.s32.totalorder %s9, 7
      %p75 = por %p73, %p74
      %p76 = scmp.ne.s32.totalorder %s68, %s71
      %p77 = scmp.eq.s32.totalorder %s9, 0
      %p78 = por %p76, %p77
      %p79 = scmp.ne.s32.totalorder %s68, %s71
      %p80 = scmp.eq.s32.totalorder %s14, 7
      %p81 = por %p79, %p80
      %p82 = scmp.ne.s32.totalorder %s71, %s72
      %p83 = scmp.eq.s32.totalorder %s14, 0
      %p84 = por %p82, %p83
      %p85 = scmp.ne.s32.totalorder %s71, %s72
      %p86 = scmp.eq.s32.totalorder %s15, 7
      %p87 = por %p85, %p86
      %p89 = scmp.ne.s32.totalorder %s72, %s88
      %p90 = scmp.eq.s32.totalorder %s15, 0
      %p91 = por %p89, %p90
      %s92 = ssub.s32 %s16, %s35
      %p93 = scmp.eq.s32.totalorder %s92, 0
      %s95 = sadd.s32 %s94, 1
      %s96 = scalar_select %p93, %s94, %s95
      %p99 = pneg %p93
      %p100 = scmp.eq.s32.totalorder %s9, 7
      %p101 = por %p99, %p100
      %p102 = scmp.ne.s32.totalorder %s94, %s97
      %p103 = scmp.eq.s32.totalorder %s9, 0
      %p104 = por %p102, %p103
      %p105 = scmp.ne.s32.totalorder %s94, %s97
      %p106 = scmp.eq.s32.totalorder %s14, 7
      %p107 = por %p105, %p106
      %p108 = scmp.ne.s32.totalorder %s97, %s98
      %p109 = scmp.eq.s32.totalorder %s14, 0
      %p110 = por %p108, %p109
      %p111 = scmp.ne.s32.totalorder %s97, %s98
      %p112 = scmp.eq.s32.totalorder %s15, 7
      %p113 = por %p111, %p112
      %p115 = scmp.ne.s32.totalorder %s98, %s114
      %p116 = scmp.eq.s32.totalorder %s15, 0
      %p117 = por %p115, %p116
      %s118 = ssub.s32 %s17, %s31
      %s119 = ssub.s32 %s16, %s35
      %s120 = sor.u32 %s118, %s119
      %s121 = ssub.s32 %s18, %s27
      %s122 = sor.u32 %s120, %s121
      %p123 = scmp.eq.s32.totalorder %s122, 0
      %s125 = sadd.s32 %s124, 1
      %s126 = scalar_select %p123, %s124, %s125
      %p129 = pneg %p123
      %p130 = scmp.eq.s32.totalorder %s9, 7
      %p131 = por %p129, %p130
      %p132 = scmp.ne.s32.totalorder %s124, %s127
      %p133 = scmp.eq.s32.totalorder %s9, 0
      %p134 = por %p132, %p133
      %p135 = scmp.ne.s32.totalorder %s124, %s127
      %p136 = scmp.eq.s32.totalorder %s14, 7
      %p137 = por %p135, %p136
      %p138 = scmp.ne.s32.totalorder %s127, %s128
      %p139 = scmp.eq.s32.totalorder %s14, 0
      %p140 = por %p138, %p139
      %p141 = scmp.ne.s32.totalorder %s127, %s128
      %p142 = scmp.eq.s32.totalorder %s15, 7
      %p143 = por %p141, %p142
      %p145 = scmp.ne.s32.totalorder %s128, %s144
      %p146 = scmp.eq.s32.totalorder %s15, 0
      %p147 = por %p145, %p146
      %p148 = scmp.le.s32.totalorder 1, %s9
      %p149 = scmp.lt.s32.totalorder %s9, 9
      %p150 = pnand %p148, %p149
      %p151 = pneg %p150
      // Predicated region
      $region9: #{posenet_forward.8} parent=5 // pred_check
        _
      $region10: #{posenet_forward.8} parent=5 // pred_check_branch
        %153 = sbr.rel (%p150) target = $region12
      $region11: #{posenet_forward.8} parent=5 // pred_region
        %s154 = ssub.s32 %s9, 1
      $region12: #{posenet_forward.8} parent=5 // pred_fallthru
        _
      %p155 = scmp.lt.s32.totalorder %s9, 8
      // Predicated region
      $region13: #{posenet_forward.8} parent=5 // pred_check
        %p156 = pneg %p155
      $region14: #{posenet_forward.8} parent=5 // pred_check_branch
        %158 = sbr.rel (%p156) target = $region16
      $region15: #{posenet_forward.8} parent=5 // pred_region
        // Predicated region
        $region17: #{posenet_forward.8} parent=15 // pred_check
          %p159 = pneg %p52
        $region18: #{posenet_forward.8} parent=15 // pred_check_branch
          %161 = sbr.rel (%p159) target = $region20
        $region19: #{posenet_forward.8} parent=15 // pred_region
          %s162 = smul.u32 8, %s18
          %p163 = scmp.lt.s32.totalorder %s16, 1
          %s164 = scalar_select %p163, %s16, 1
          %p165 = scmp.lt.s32.totalorder %s17, 1
          %s166 = scalar_select %p165, %s17, 1
          %p167 = scmp.lt.s32.totalorder %s162, 15
          %s168 = scalar_select %p167, %s162, 15
          %s169 = smul.addr %s168, 2
          %s170 = smul.addr %s166, 32
          %s171 = sadd.s32 %s169, %s170
          %s172 = smul.addr %s164, 64
          %s173 = sadd.s32 %s171, %s172
          %s174 = smul.addr %s173, 4
          %s175 = scalar_lea.vmem %s0, %s174
          %s176 = smul.u32 8, %s18
        $region20: #{posenet_forward.8} parent=15 // pred_fallthru
          _
        // Predicated region
        $region21: #{posenet_forward.8} parent=15 // pred_check
          %p177 = pneg %p78
        $region22: #{posenet_forward.8} parent=15 // pred_check_branch
          %179 = sbr.rel (%p177) target = $region24
        $region23: #{posenet_forward.8} parent=15 // pred_region
          %p180 = scmp.lt.s32.totalorder %s16, 1
          %s181 = scalar_select %p180, %s16, 1
          %s182 = smul.addr %s181, 4
          %s183 = smul.addr %s182, 4
          %s184 = scalar_lea.vmem %s1, %s183
        $region24: #{posenet_forward.8} parent=15 // pred_fallthru
          _
        // Predicated region
        $region25: #{posenet_forward.8} parent=15 // pred_check
          %p185 = pneg %p104
        $region26: #{posenet_forward.8} parent=15 // pred_check_branch
          %187 = sbr.rel (%p185) target = $region28
        $region27: #{posenet_forward.8} parent=15 // pred_region
          %p188 = scmp.lt.s32.totalorder %s16, 1
          %s189 = scalar_select %p188, %s16, 1
          %s190 = scalar_lea.vmem %s2, %s189
        $region28: #{posenet_forward.8} parent=15 // pred_fallthru
          _
      $region16: #{posenet_forward.8} parent=5 // pred_fallthru
        _
      %p191 = scmp.le.s32.totalorder 1, %s9
      %p192 = scmp.lt.s32.totalorder %s9, 9
      %p193 = pnand %p191, %p192
      %p194 = pneg %p193
      // Predicated region
      $region29: #{posenet_forward.8} parent=5 // pred_check
        _
      $region30: #{posenet_forward.8} parent=5 // pred_check_branch
        %196 = sbr.rel (%p193) target = $region32
      $region31: #{posenet_forward.8} parent=5 // pred_region
        %s197 = ssub.s32 %s9, 1
        %s198 = smul.u32 8, %s21
        %p199 = scmp.lt.s32.totalorder %s19, 1
        %s200 = scalar_select %p199, %s19, 1
        %p201 = scmp.lt.s32.totalorder %s20, 1
        %s202 = scalar_select %p201, %s20, 1
        %p203 = scmp.lt.s32.totalorder %s198, 15
        %s204 = scalar_select %p203, %s198, 15
        %s205 = smul.addr %s204, 2
        %s206 = smul.addr %s202, 32
        %s207 = sadd.s32 %s205, %s206
        %s208 = smul.addr %s200, 64
        %s209 = sadd.s32 %s207, %s208
        %s210 = smul.addr %s209, 4
        %s211 = scalar_lea.vmem %s0, %s210
        %p212 = pneg %p58
        %p213 = pneg %p55
        %p214 = scmp.lt.s32.totalorder %s19, 1
        %s215 = scalar_select %p214, %s19, 1
        %s216 = smul.addr %s215, 4
        %s217 = smul.addr %s216, 4
        %s218 = scalar_lea.vmem %s1, %s217
        %p219 = pneg %p84
        %p220 = pneg %p81
        %p221 = scmp.lt.s32.totalorder %s19, 1
        %s222 = scalar_select %p221, %s19, 1
        %s223 = scalar_lea.vmem %s2, %s222
        %p224 = pneg %p110
        %p225 = pneg %p107
        %p226 = pneg %p140
        %p227 = pneg %p137
        %s228 = sand.u32 %s127, 1
        %s229 = sand.u32 %s127, 1
        %s230 = smul.addr %s229, 24
        %s231 = scalar_lea.vmem [#allocation2], %s230
        %s232 = smul.u32 8, %s21
        %p233 = scmp.lt.s32.totalorder %s19, 1
        %s234 = scalar_select %p233, %s19, 1
        %p235 = scmp.lt.s32.totalorder %s20, 1
        %s236 = scalar_select %p235, %s20, 1
        %p237 = scmp.lt.s32.totalorder %s232, 15
        %s238 = scalar_select %p237, %s232, 15
        %s239 = smul.addr %s238, 2
        %s240 = smul.addr %s236, 32
        %s241 = sadd.s32 %s239, %s240
        %s242 = smul.addr %s234, 64
        %s243 = sadd.s32 %s241, %s242
        %s244 = smul.addr %s243, 4
        %s245 = scalar_lea.vmem %s0, %s244
        %s246 = smul.u32 8, %s21
        %p247 = scmp.lt.s32.totalorder %s19, 1
        %s248 = scalar_select %p247, %s19, 1
        %s249 = smul.addr %s248, 4
        %s250 = smul.addr %s249, 4
        %s251 = scalar_lea.vmem %s1, %s250
        %p252 = scmp.lt.s32.totalorder %s19, 1
        %s253 = scalar_select %p252, %s19, 1
        %s254 = scalar_lea.vmem %s2, %s253
        %v256 = vld [vmem:[%s245] sm:$0xf]
        %v257 = vld [vmem:[%s245 + $0x4] sm:$0xf]
        %v258 = vld [vmem:[%s245 + $0x8] sm:$0xf]
        %v259 = vld [vmem:[%s245 + $0xc] sm:$0xf]
        %v260 = vld [vmem:[%s245 + $0x10] sm:$0xf]
        %v261 = vld [vmem:[%s245 + $0x14] sm:$0xf]
        %v262 = vld [vmem:[%s245 + $0x18] sm:$0xf]
        %v263 = vld [vmem:[%s245 + $0x1c] sm:$0xf]
        %v264 = vld [vmem:[%s245 + $0x20] sm:$0xf]
        %v265 = vld [vmem:[%s245 + $0x24] sm:$0xf]
        %v266 = vld [vmem:[%s245 + $0x28] sm:$0xf]
        %v267 = vld [vmem:[%s245 + $0x2c] sm:$0xf]
        %v268 = vld [vmem:[%s245 + $0x30] sm:$0xf]
        %v269 = vld [vmem:[%s245 + $0x34] sm:$0xf]
        %v270 = vld [vmem:[%s245 + $0x38] sm:$0xf]
        %v271 = vld [vmem:[%s245 + $0x3c] sm:$0xf]
        %v272 = vld [vmem:[%s251] sm:$0xf]
        %v273 = vld [vmem:[%s251 + $0x4] sm:$0xf]
        %v274 = vld [vmem:[%s251 + $0x8] sm:$0xf]
        %v275 = vld [vmem:[%s251 + $0xc] sm:$0xf]
        %v276 = vld [vmem:[%s254] sm:$0x1]
        %v278 = vlaneseq
        %v279 = vshrl.u32 %v278, 7
        %v280 = vsub.s32 0, %v279
        %v281 = vrot.slane %v276, %v280
        %v299 = vunpack.c.l.b16 %v256
        %v300 = vunpack.c.l.b16 %v257
        %v301 = vunpack.c.l.b16 %v258
        %v302 = vunpack.c.l.b16 %v259
        %v303 = vunpack.c.l.b16 %v260
        %v304 = vunpack.c.l.b16 %v261
        %v305 = vunpack.c.l.b16 %v262
        %v306 = vunpack.c.l.b16 %v263
        %v307 = vunpack.c.l.b16 %v264
        %v308 = vunpack.c.l.b16 %v265
        %v309 = vunpack.c.l.b16 %v266
        %v310 = vunpack.c.l.b16 %v267
        %v311 = vunpack.c.l.b16 %v268
        %v312 = vunpack.c.l.b16 %v269
        %v313 = vunpack.c.l.b16 %v270
        %v314 = vunpack.c.l.b16 %v271
        %v315 = vpack.c.b16 %v300, %v299
        %v316 = vpack.c.b16 %v302, %v301
        %v317 = vpack.c.b16 %v304, %v303
        %v318 = vpack.c.b16 %v306, %v305
        %v319 = vpack.c.b16 %v308, %v307
        %v320 = vpack.c.b16 %v310, %v309
        %v321 = vpack.c.b16 %v312, %v311
        %v322 = vpack.c.b16 %v314, %v313
        %v327 = vunpack.c.l.b16 %v272
        %v328 = vunpack.c.l.b16 %v273
        %v329 = vunpack.c.l.b16 %v274
        %v330 = vunpack.c.l.b16 %v275
        %v331 = vpack.c.b16 %v328, %v327
        %v332 = vpack.c.b16 %v330, %v329
        %vm335 = vcmask 261120
        %v337 = vsel %vm335, %v315, 0
        %v340 = vsel %vm335, %v316, 0
        %v343 = vsel %vm335, %v317, 0
        %v346 = vsel %vm335, %v318, 0
        %v349 = vsel %vm335, %v319, 0
        %v352 = vsel %vm335, %v320, 0
        %v355 = vsel %vm335, %v321, 0
        %v358 = vsel %vm335, %v322, 0
        %360 = vmatprep.subr.bf16.mxu0 0
        %361 = vmatpush1.bf16.msra.mxu0 0
        %362 = vmatprep.subr.bf16.mxu0 0
        %363 = vmatpush1.bf16.msra.mxu0 0
        %364 = vmatprep.subr.bf16.mxu0 0
        %365 = vmatpush1.bf16.msra.mxu0 0
        %366 = vmatprep.subr.bf16.mxu0 0
        %367 = vmatpush1.bf16.msra.mxu0 0
        %368 = vmatprep.subr.bf16.mxu0 0
        %369 = vmatpush1.bf16.msra.mxu0 0
        %370 = vmatprep.subr.bf16.mxu0 0
        %371 = vmatpush1.bf16.msra.mxu0 0
        %372 = vmatprep.subr.bf16.mxu0 0
        %373 = vmatpush1.bf16.msra.mxu0 %v332
        %374 = vmatprep.subr.bf16.mxu0 0
        %375 = vmatpush1.bf16.msra.mxu0 %v331
        %376 = vmatprep.subr.bf16.mxu0 0
        %377 = vmatpush2.bf16.msra.mxu0 0
        %378 = vmatprep.subr.bf16.mxu0 0
        %379 = vmatpush2.bf16.msra.mxu0 0
        %380 = vmatprep.subr.bf16.mxu0 0
        %381 = vmatpush2.bf16.msra.mxu0 0
        %382 = vmatprep.subr.bf16.mxu0 0
        %383 = vmatpush2.bf16.msra.mxu0 0
        %384 = vmatprep.subr.bf16.mxu0 0
        %385 = vmatpush2.bf16.msra.mxu0 0
        %386 = vmatprep.subr.bf16.mxu0 0
        %387 = vmatpush2.bf16.msra.mxu0 0
        %388 = vmatprep.subr.bf16.mxu0 0
        %389 = vmatpush2.bf16.msra.mxu0 0
        %390 = vmatprep.subr.bf16.mxu0 0
        %391 = vmatpush2.bf16.msra.mxu0 0
        %392 = vmatprep.mubr.bf16.mxu0 0
        %393 = vmatmul.mubr.bf16.gmra.mxu0 %v337
        %v394 = vpop.f32.mrf.mxu0
        %v395 = vadd.f32 %v281, %v394
        %v396 = vpop.f32.mrf.mxu0
        %v397 = vpop.f32.mrf.mxu0
        %v398 = vadd.f32 %v281, %v397
        %v399 = vpop.f32.mrf.mxu0
        %400 = vmatprep.mubr.bf16.mxu0 0
        %401 = vmatmul.mubr.bf16.gmra.mxu0 %v340
        %v402 = vpop.f32.mrf.mxu0
        %v403 = vadd.f32 %v281, %v402
        %v404 = vpop.f32.mrf.mxu0
        %v405 = vpop.f32.mrf.mxu0
        %v406 = vadd.f32 %v281, %v405
        %v407 = vpop.f32.mrf.mxu0
        %408 = vmatprep.mubr.bf16.mxu0 0
        %409 = vmatmul.mubr.bf16.gmra.mxu0 %v343
        %v410 = vpop.f32.mrf.mxu0
        %v411 = vadd.f32 %v281, %v410
        %v412 = vpop.f32.mrf.mxu0
        %v413 = vpop.f32.mrf.mxu0
        %v414 = vadd.f32 %v281, %v413
        %v415 = vpop.f32.mrf.mxu0
        %416 = vmatprep.mubr.bf16.mxu0 0
        %417 = vmatmul.mubr.bf16.gmra.mxu0 %v346
        %v418 = vpop.f32.mrf.mxu0
        %v419 = vadd.f32 %v281, %v418
        %v420 = vpop.f32.mrf.mxu0
        %v421 = vpop.f32.mrf.mxu0
        %v422 = vadd.f32 %v281, %v421
        %v423 = vpop.f32.mrf.mxu0
        %424 = vmatprep.mubr.bf16.mxu0 0
        %425 = vmatmul.mubr.bf16.gmra.mxu0 %v349
        %v426 = vpop.f32.mrf.mxu0
        %v427 = vadd.f32 %v281, %v426
        %v428 = vpop.f32.mrf.mxu0
        %v429 = vpop.f32.mrf.mxu0
        %v430 = vadd.f32 %v281, %v429
        %v431 = vpop.f32.mrf.mxu0
        %432 = vmatprep.mubr.bf16.mxu0 0
        %433 = vmatmul.mubr.bf16.gmra.mxu0 %v352
        %v434 = vpop.f32.mrf.mxu0
        %v435 = vadd.f32 %v281, %v434
        %v436 = vpop.f32.mrf.mxu0
        %v437 = vpop.f32.mrf.mxu0
        %v438 = vadd.f32 %v281, %v437
        %v439 = vpop.f32.mrf.mxu0
        %440 = vmatprep.mubr.bf16.mxu0 0
        %441 = vmatmul.mubr.bf16.gmra.mxu0 %v355
        %v442 = vpop.f32.mrf.mxu0
        %v443 = vadd.f32 %v281, %v442
        %v444 = vpop.f32.mrf.mxu0
        %v445 = vpop.f32.mrf.mxu0
        %v446 = vadd.f32 %v281, %v445
        %v447 = vpop.f32.mrf.mxu0
        %448 = vmatprep.mubr.bf16.mxu0 0
        %449 = vmatmul.mubr.bf16.gmra.mxu0 %v358
        %v450 = vpop.f32.mrf.mxu0
        %v451 = vadd.f32 %v281, %v450
        %v452 = vpop.f32.mrf.mxu0
        %v453 = vpop.f32.mrf.mxu0
        %v454 = vadd.f32 %v281, %v453
        %v455 = vpop.f32.mrf.mxu0
        %456 = vdwg.mxu0
        %457 = vxpose.xlu0.b32.start [1/16] %v395, 128
        %458 = vxpose.xlu0.b32.cont [2/16] %v398, 128
        %459 = vxpose.xlu0.b32.cont [3/16] %v403, 128
        %460 = vxpose.xlu0.b32.cont [4/16] %v406, 128
        %461 = vxpose.xlu0.b32.cont [5/16] %v411, 128
        %462 = vxpose.xlu0.b32.cont [6/16] %v414, 128
        %463 = vxpose.xlu0.b32.cont [7/16] %v419, 128
        %464 = vxpose.xlu0.b32.cont [8/16] %v422, 128
        %465 = vxpose.xlu0.b32.cont [9/16] %v427, 128
        %466 = vxpose.xlu0.b32.cont [10/16] %v430, 128
        %467 = vxpose.xlu0.b32.cont [11/16] %v435, 128
        %468 = vxpose.xlu0.b32.cont [12/16] %v438, 128
        %469 = vxpose.xlu0.b32.cont [13/16] %v443, 128
        %470 = vxpose.xlu0.b32.cont [14/16] %v446, 128
        %471 = vxpose.xlu0.b32.cont [15/16] %v451, 128
        %472 = vxpose.xlu0.b32.end [16/16] %v454, 128
        %v473 = vpop.trf.xlu0
        %v474 = vpop.trf.xlu0
        %v475 = vpop.trf.xlu0
        %v476 = vpop.trf.xlu0
        %v477 = vpop.trf.xlu0
        %v478 = vpop.trf.xlu0
        %v479 = vpop.trf.xlu0
        %v480 = vpop.trf.xlu0
        %v481 = vpop.trf.xlu0
        %v482 = vpop.trf.xlu0
        %v483 = vpop.trf.xlu0
        %v484 = vpop.trf.xlu0
        %v485 = vpop.trf.xlu0
        %v486 = vpop.trf.xlu0
        %v487 = vpop.trf.xlu0
        %v488 = vpop.trf.xlu0
        %489 = vst [vmem:[%s231] sm:$0xff] %v473
        %490 = vst [vmem:[%s231 + $0x8] sm:$0xff] %v474
        %491 = vst [vmem:[%s231 + $0x10] sm:$0xff] %v475
        %s492 = sand.u32 %s127, 1
        %s493 = sand.u32 %s127, 1
        %s494 = smul.addr %s493, 24
        %s495 = scalar_lea.vmem [#allocation2], %s494
        // Predicated region
        $region33: #{posenet_forward.8} parent=31 // pred_check
          %p496 = pneg %p137
        $region34: #{posenet_forward.8} parent=31 // pred_check_branch
          %498 = sbr.rel (%p496) target = $region36
        $region35: #{posenet_forward.8} parent=31 // pred_region
          %s499 = smul.addr %s19, 6
          %s500 = sadd.s32 %s21, %s499
          %s501 = smul.addr %s20, 12
          %s502 = sadd.s32 %s500, %s501
          %s503 = smul.addr %s502, 8
          %s504 = scalar_lea.vmem %s3, %s503
          // Predicated region
          $region37: #{posenet_forward.8} parent=35 // pred_check
            _
          $region38: #{posenet_forward.8} parent=35 // pred_check_branch
            %506 = sbr.rel (0) target = $region40
          $region39: #{posenet_forward.8} parent=35 // pred_region
            // Predicated region
            $region41: #{posenet_forward.8} parent=39 // pred_check
              _
            $region42: #{posenet_forward.8} parent=39 // pred_check_branch
              %508 = sbr.rel (0) target = $region44
            $region43: #{posenet_forward.8} parent=39 // pred_region
              // Predicated region
              $region56: #{posenet_forward.8} parent=43 // pred_check
                _
              $region57: #{posenet_forward.8} parent=43 // pred_check_branch
                %528 = sbr.rel (0) target = $region59
              $region58: #{posenet_forward.8} parent=43 // pred_region
                loop: start=0, step=1, limit=1
                $region60: #{posenet_forward.8} parent=58 // loop_pre_header
                  _
                $region61: #{posenet_forward.8} parent=58 // loop_header
                  %s530 = sphi 0, %s534
                  %p531 = scmp.ge.s32.totalorder %s530, 1
                  %s535 = sphi %s495, %s495
                  %s536 = sphi %s504, %s504
                $region62: #{posenet_forward.8} parent=58 // loop_header_branch
                  %533 = sbr.rel (%p531) target = $region66
                $region63: #{posenet_forward.8} parent=58 // loop_body
                  %v537 = vld [vmem:[%s535] sm:$0xff]
                  %538 = vst [vmem:[%s536] sm:$0xff] %v537
                  %v539 = vld [vmem:[%s535 + $0x8] sm:$0xff]
                  %540 = vst [vmem:[%s536 + $0x10] sm:$0xff] %v539
                  %v541 = vld [vmem:[%s535 + $0x10] sm:$0xff]
                  %542 = vst [vmem:[%s536 + $0x20] sm:$0xff] %v541
                $region64: #{posenet_forward.8} parent=58 // loop_footer
                  %s534 = sadd.s32 1, %s530
                $region65: #{posenet_forward.8} parent=58 // loop_footer_branch
                  %529 = sbr.rel target = $region61
                $region66: #{posenet_forward.8} parent=58 // loop_exit
                  _
              $region59: #{posenet_forward.8} parent=43 // pred_fallthru
                _
              // Predicated region
              $region67: #{posenet_forward.8} parent=43 // pred_check
                _
              $region68: #{posenet_forward.8} parent=43 // pred_check_branch
                %544 = sbr.rel target = $region70
              $region69: #{posenet_forward.8} parent=43 // pred_region
                _
              $region70: #{posenet_forward.8} parent=43 // pred_fallthru
                _
            $region44: #{posenet_forward.8} parent=39 // pred_fallthru
              _
            // Predicated region
            $region45: #{posenet_forward.8} parent=39 // pred_check
              _
            $region46: #{posenet_forward.8} parent=39 // pred_check_branch
              %510 = sbr.rel target = $region48
            $region47: #{posenet_forward.8} parent=39 // pred_region
              %s512 = ssub.s32 256, 1
              loop: start=0, step=1, limit=1
              $region49: #{posenet_forward.8} parent=47 // loop_pre_header
                _
              $region50: #{posenet_forward.8} parent=47 // loop_header
                %s514 = sphi 0, %s518
                %p515 = scmp.ge.s32.totalorder %s514, 1
                %s519 = sphi %s495, %s495
                %s520 = sphi %s504, %s504
              $region51: #{posenet_forward.8} parent=47 // loop_header_branch
                %517 = sbr.rel (%p515) target = $region55
              $region52: #{posenet_forward.8} parent=47 // loop_body
                %v521 = vld [vmem:[%s519] sm:%s512]
                %522 = vst [vmem:[%s520] sm:%s512] %v521
                %v523 = vld [vmem:[%s519 + $0x8] sm:%s512]
                %524 = vst [vmem:[%s520 + $0x10] sm:%s512] %v523
                %v525 = vld [vmem:[%s519 + $0x10] sm:%s512]
                %526 = vst [vmem:[%s520 + $0x20] sm:%s512] %v525
              $region53: #{posenet_forward.8} parent=47 // loop_footer
                %s518 = sadd.s32 1, %s514
              $region54: #{posenet_forward.8} parent=47 // loop_footer_branch
                %513 = sbr.rel target = $region50
              $region55: #{posenet_forward.8} parent=47 // loop_exit
                _
            $region48: #{posenet_forward.8} parent=39 // pred_fallthru
              _
          $region40: #{posenet_forward.8} parent=35 // pred_fallthru
            _
          %545 = vnop
        $region36: #{posenet_forward.8} parent=31 // pred_fallthru
          _
      $region32: #{posenet_forward.8} parent=5 // pred_fallthru
        _
      %p546 = scmp.le.s32.totalorder 2, %s9
      // Predicated region
      $region71: #{posenet_forward.8} parent=5 // pred_check
        %p547 = pneg %p546
      $region72: #{posenet_forward.8} parent=5 // pred_check_branch
        %549 = sbr.rel (%p547) target = $region74
      $region73: #{posenet_forward.8} parent=5 // pred_region
        %s550 = ssub.s32 %s9, 2
        // Predicated region
        $region75: #{posenet_forward.8} parent=73 // pred_check
          %p551 = pneg %p143
        $region76: #{posenet_forward.8} parent=73 // pred_check_branch
          %553 = sbr.rel (%p551) target = $region78
        $region77: #{posenet_forward.8} parent=73 // pred_region
          %s554 = sand.u32 %s128, 1
          %s555 = sand.u32 %s128, 1
          %s556 = smul.addr %s555, 24
          %s557 = scalar_lea.vmem [#allocation2], %s556
        $region78: #{posenet_forward.8} parent=73 // pred_fallthru
          _
      $region74: #{posenet_forward.8} parent=5 // pred_fallthru
        _
    $region6: #{posenet_forward.8} parent=1 // loop_footer
      %s13 = sadd.s32 1, %s9
    $region7: #{posenet_forward.8} parent=1 // loop_footer_branch
      %8 = sbr.rel target = $region3
    $region8: #{posenet_forward.8} parent=1 // loop_exit
      _

</llo_original>
